<compile_context>
chip_gen: v7x
topology: tpu7x:2x2x1
jax: 0.10.0
libtpu: 0.0.40
codegen_flags: <defaults>
</compile_context>

<pallas_src>
import jax
import jax.numpy as jnp
from jax.experimental import pallas as pl
from jax.experimental.pallas import tpu as pltpu


# --------------------------------------------------------------------------
# Kernel
# --------------------------------------------------------------------------
def make_kernel(K1, K2):
    """Kernel factory; K1/K2 are static so the stacked-matmul slices are free views."""

    def kernel(x_ref,                       # (bb, D, t) f32 input tile
               m1_ref, b1_ref,              # (K1+D, D) = [C1^T ; BN-folded W1], (D, 1)
               m2_ref, b2_ref,              # (K2+D, D) = [C2^T ; BN-folded W2], (D, 1)
               c1g_ref, c2g_ref,            # (D, K1), (D, K2)  -- gamma folded in
               c3t_ref, c3g_ref,            # (K3, D), (D, K3)  -- gamma folded in
               o_ref):                      # (bb, D, t) f32 output tile
        cdt = m1_ref.dtype                  # MXU-operand compute dtype (f32 or bf16)
        bb = x_ref.shape[0]

        def attend(scores, cg_ref):
            # softmax over K (sublane axis), then (gamma*C) @ A
            mx = jnp.max(scores, axis=0, keepdims=True)
            p = jnp.exp(scores - mx)
            denom = jnp.sum(p, axis=0, keepdims=True)
            a = p * pl.reciprocal(denom, approx=False)       # exact recip (f32 path)
            return jnp.dot(cg_ref[...], a.astype(cdt),
                           preferred_element_type=jnp.float32)

        for i in range(bb):                 # static unroll over images in the block
            x = x_ref[i]                    # (D, t) f32
            x_c = x.astype(cdt)

            # stage 1: stacked [scores1 ; conv1] matmul
            r1 = jnp.dot(m1_ref[...], x_c, preferred_element_type=jnp.float32)
            o_ref[i] = x + attend(r1[:K1], c1g_ref)          # X + E1
            x2 = jnp.maximum(r1[K1:] + b1_ref[...], 0.0)     # ReLU(BN(conv1(X)))
            x2_c = x2.astype(cdt)

            # stage 2: stacked [scores2 ; conv2] matmul
            r2 = jnp.dot(m2_ref[...], x2_c, preferred_element_type=jnp.float32)
            o_ref[i] = o_ref[i] + attend(r2[:K2], c2g_ref)   # + E2
            x3 = jnp.maximum(r2[K2:] + b2_ref[...], 0.0)     # ReLU(BN(conv2(X2)))

            # stage 3
            s3 = jnp.dot(c3t_ref[...], x3.astype(cdt),
                         preferred_element_type=jnp.float32)
            o_ref[i] = o_ref[i] + attend(s3, c3g_ref)        # + E3

    return kernel


# --------------------------------------------------------------------------
# Tile / VMEM planning
# --------------------------------------------------------------------------
def _divisors(n):
    return [d for d in range(1, n + 1) if n % d == 0]


def _plan(B, D, hw_pad, const_bytes):
    """Pick (batch block bb, spatial tile t, vmem_limit_bytes)."""
    try:
        vmem_cap = int(pltpu.get_tpu_info().vmem_capacity_bytes)
    except Exception:
        vmem_cap = 64 << 20                          # assume smallest (v7x per-TC)
    budget = int(vmem_cap * 0.6)                     # headroom for Mosaic internals

    def need(bb, t):
        io = 2 * 2 * bb * D * t * 4                  # double-buffered x + out tiles
        tmp = 12 * D * t * 4                         # conservative in-kernel temps
        return io + tmp + 2 * const_bytes

    # Spatial tile: whole (padded) image if it fits, else the largest
    # multiple-of-128 divisor that fits the VMEM budget.
    t = hw_pad
    if need(1, t) > budget:
        best = None
        cand = 128
        while cand < hw_pad:
            if hw_pad % cand == 0 and need(1, cand) <= budget:
                best = cand
            cand += 128
        t = best if best is not None else min(hw_pad, 128)

    # Batch block: grow the per-step DMA towards ~1 MiB when whole images fit.
    bb = 1
    if t == hw_pad:
        target = 1 << 20
        for d in _divisors(B):
            if need(d, t) > budget:
                break
            bb = d
            if d * D * t * 4 >= target:
                break

    # Keep >=2 grid steps when the problem allows (v7x has 2 TCs per chip).
    if (B // bb) * (hw_pad // t) < 2:
        if bb > 1:
            smaller = [d for d in _divisors(B) if d < bb]
            bb = smaller[-1] if smaller else bb
        elif t % 256 == 0:
            t //= 2

    vmem_limit = int(min(vmem_cap * 0.9, max(32 << 20, 2 * need(bb, t))))
    return bb, t, vmem_limit


# --------------------------------------------------------------------------
# Wrapper
# --------------------------------------------------------------------------
def simple_pydict_encoding(X, params):
    """X: (B, D, h, w) float32 NCHW (like PyTorch). Returns (B, D, h, w) float32."""
    B, D, h, w = X.shape
    hw = h * w
    K1, K2 = params["K1"], params["K2"]
    # TODO(synk): ragged K (not a multiple of 8) would need padded codewords
    #             plus score masking before the softmax; not implemented.
    assert K1 % 8 == 0 and K2 % 8 == 0

    x3d = X.reshape(B, D, hw)                # metadata reshape of contiguous NCHW

    # Pad the spatial axis to a multiple of 128 so output stores are lane-dense.
    hw_pad = hw
    if hw >= 128 and hw % 128 != 0:
        hw_pad = ((hw + 127) // 128) * 128
        x3d = jnp.pad(x3d, ((0, 0), (0, 0), (0, hw_pad - hw)))

    consts = (params["M1"], params["b1"], params["M2"], params["b2"],
              params["C1g"], params["C2g"], params["C3T"], params["C3g"])
    const_bytes = sum(int(c.size) * c.dtype.itemsize for c in consts)

    bb, t, vmem_limit = _plan(B, D, hw_pad, const_bytes)
    kernel = make_kernel(K1, K2)

    def build(const_buffer_count):
        def const_spec(arr):
            nd = arr.ndim
            if const_buffer_count == 1:
                # loop-invariant operands: single buffer (halves their VMEM cost)
                return pl.BlockSpec(arr.shape, lambda *_: (0,) * nd,
                                    pipeline_mode=pl.Buffered(1))
            return pl.BlockSpec(arr.shape, lambda *_: (0,) * nd)

        return pl.pallas_call(
            kernel,
            out_shape=jax.ShapeDtypeStruct((B, D, hw_pad), jnp.float32),
            grid=(B // bb, hw_pad // t),
            in_specs=[pl.BlockSpec((bb, D, t), lambda b, j: (b, 0, j))]
                     + [const_spec(c) for c in consts],
            out_specs=pl.BlockSpec((bb, D, t), lambda b, j: (b, 0, j)),
            compiler_params=pltpu.CompilerParams(
                dimension_semantics=("parallel", "parallel"),
                vmem_limit_bytes=vmem_limit),
        )

    try:
        out = build(1)(x3d, *consts)
    except Exception:
        # TODO(synk): pl.Buffered(1) single-buffered constants not supported on
        #             this JAX version -> fall back to default double buffering.
        out = build(2)(x3d, *consts)

    if hw_pad != hw:
        out = out[:, :, :hw]
    return out.reshape(B, D, h, w)


# --------------------------------------------------------------------------
# Parameters (module-style init, eval-mode BN) + loop-invariant folding
# --------------------------------------------------------------------------
def make_raw_params(key, D, K1, K2, K3):
    """Module-style parameters (deterministic), mirroring __init__/reset_params."""
    ks = jax.random.split(key, 8)

    def cw(k, Kn):  # codewords: uniform(-1/sqrt(K*D), 1/sqrt(K*D))
        std = 1.0 / jnp.sqrt(jnp.float32(Kn * D))
        return jax.random.uniform(k, (D, Kn), jnp.float32, -std, std)

    C1, C2, C3 = cw(ks[0], K1), cw(ks[1], K2), cw(ks[2], K3)

    # gamma1/2/3 init to zeros in the module (-> E == X); use small nonzero
    # values so the attention path is actually exercised in the test.
    gammas = jnp.array([0.1, 0.2, 0.3], jnp.float32)

    # 1x1 conv weights (out, in) -- kaiming-uniform-like bound 1/sqrt(D)
    bound = 1.0 / jnp.sqrt(jnp.float32(D))
    W1 = jax.random.uniform(ks[3], (D, D), jnp.float32, -bound, bound)
    W2 = jax.random.uniform(ks[4], (D, D), jnp.float32, -bound, bound)

    # BatchNorm2d (eval mode) with non-trivial affine / running stats so the
    # folding is genuinely exercised.
    eps = 1e-5
    bn_w = 1.0 + 0.1 * jax.random.normal(ks[5], (D,), jnp.float32)
    bn_b = 0.1 * jax.random.normal(ks[6], (D,), jnp.float32)
    bn_mean = 0.05 * jax.random.normal(ks[7], (D,), jnp.float32)
    bn_var = jnp.ones((D,), jnp.float32)
    bn_scale = bn_w / jnp.sqrt(bn_var + eps)
    bn_shift = bn_b - bn_mean * bn_scale

    # scale1/2/3 are module Parameters but unused in forward -- omitted.
    return dict(gammas=gammas, W1=W1, W2=W2,
                bn_scale=bn_scale, bn_shift=bn_shift, C1=C1, C2=C2, C3=C3)


def fold_params(raw, compute_dtype=jnp.float32):
    """Pre-fold BN into the convs, gamma into the codewords, and stack the
    stage-1/2 score+conv LHS matrices.  All folds done in f32, then cast."""
    D = raw["W1"].shape[0]
    g1, g2, g3 = raw["gammas"][0], raw["gammas"][1], raw["gammas"][2]

    W1f = raw["bn_scale"][:, None] * raw["W1"]
    W2f = raw["bn_scale"][:, None] * raw["W2"]
    b1 = raw["bn_shift"].reshape(D, 1).astype(jnp.float32)
    b2 = raw["bn_shift"].reshape(D, 1).astype(jnp.float32)

    M1 = jnp.concatenate([raw["C1"].T, W1f], axis=0).astype(compute_dtype)  # (K1+D, D)
    M2 = jnp.concatenate([raw["C2"].T, W2f], axis=0).astype(compute_dtype)  # (K2+D, D)
    C3T = raw["C3"].T.astype(compute_dtype)                                 # (K3, D)

    C1g = (g1 * raw["C1"]).astype(compute_dtype)                            # (D, K1)
    C2g = (g2 * raw["C2"]).astype(compute_dtype)
    C3g = (g3 * raw["C3"]).astype(compute_dtype)

    return dict(M1=M1, b1=b1, M2=M2, b2=b2, C1g=C1g, C2g=C2g, C3T=C3T, C3g=C3g,
                K1=int(raw["C1"].shape[1]), K2=int(raw["C2"].shape[1]))


# --------------------------------------------------------------------------
# Pure-JAX reference (eval-mode BN) and test
# --------------------------------------------------------------------------
def reference(X, raw):
    B, D, h, w = X.shape
    xf = X.reshape(B, D, h * w)
    s = raw["bn_scale"][None, :, None]
    b = raw["bn_shift"][None, :, None]

    def conv_bn_relu(x, W):
        return jnp.maximum(jnp.einsum("oc,bcm->bom", W, x) * s + b, 0.0)

    x2 = conv_bn_relu(xf, raw["W1"])
    x3 = conv_bn_relu(x2, raw["W2"])

    def att(x, C, g):
        scores = jnp.einsum("dk,bdm->bkm", C, x)
        a = jax.nn.softmax(scores, axis=1)
        return g * jnp.einsum("dk,bkm->bdm", C, a)

    e = (xf + att(xf, raw["C1"], raw["gammas"][0])
            + att(x2, raw["C2"], raw["gammas"][1])
            + att(x3, raw["C3"], raw["gammas"][2]))
    return e.reshape(B, D, h, w)


if __name__ == "__main__":
    B, D, h, w = 2, 32, 16, 16
    K1, K2, K3 = 16, 24, 32

    key = jax.random.PRNGKey(0)
    kx, kp = jax.random.split(key)
    X = jax.random.normal(kx, (B, D, h, w), jnp.float32)
    raw = make_raw_params(kp, D, K1, K2, K3)
    ref = reference(X, raw)

    # f32 MXU-operand path -- tight numerical check (exact recip in softmax).
    out_f32 = jax.block_until_ready(simple_pydict_encoding(X, fold_params(raw, jnp.float32)))
    assert out_f32.shape == (B, D, h, w)
    assert jnp.allclose(out_f32, ref, atol=5e-4, rtol=5e-4), "f32 mismatch vs reference"

    # bf16 MXU-operand path (recommended on v5e/v6e/v7x; elementwise stays f32).
    out_bf16 = jax.block_until_ready(simple_pydict_encoding(X, fold_params(raw, jnp.bfloat16)))
    assert jnp.allclose(out_bf16, ref, atol=2e-2, rtol=2e-2), "bf16 mismatch vs reference"

    print("KERNEL_OK")
</pallas_src>

<mosaic_0001>
module attributes {stable_mosaic.version = 11 : i64} {
  func.func @kernel(%arg0: i32, %arg1: i32, %arg2: memref<1x32x256xf32, #tpu.memory_space<vmem>>, %arg3: memref<48x32xf32, #tpu.memory_space<vmem>>, %arg4: memref<32x1xf32, #tpu.memory_space<vmem>>, %arg5: memref<56x32xf32, #tpu.memory_space<vmem>>, %arg6: memref<32x1xf32, #tpu.memory_space<vmem>>, %arg7: memref<32x16xf32, #tpu.memory_space<vmem>>, %arg8: memref<32x24xf32, #tpu.memory_space<vmem>>, %arg9: memref<32x32xf32, #tpu.memory_space<vmem>>, %arg10: memref<32x32xf32, #tpu.memory_space<vmem>>, %arg11: memref<1x32x256xf32, #tpu.memory_space<vmem>>) attributes {dimension_semantics = [#tpu.dimension_semantics<parallel>, #tpu.dimension_semantics<parallel>], iteration_bounds = array<i64: 2, 1>, scalar_prefetch = 0 : i64, scratch_operands = 0 : i64, tpu.core_type = #tpu.core_type<tc>, window_params = [{transform_indices = @transform_0, window_bounds = array<i64: 1, 32, 256>}, {pipeline_mode = #tpu.pipeline_mode<synchronous>, transform_indices = @transform_1, window_bounds = array<i64: 48, 32>}, {pipeline_mode = #tpu.pipeline_mode<synchronous>, transform_indices = @transform_2, window_bounds = array<i64: 32, 1>}, {pipeline_mode = #tpu.pipeline_mode<synchronous>, transform_indices = @transform_3, window_bounds = array<i64: 56, 32>}, {pipeline_mode = #tpu.pipeline_mode<synchronous>, transform_indices = @transform_4, window_bounds = array<i64: 32, 1>}, {pipeline_mode = #tpu.pipeline_mode<synchronous>, transform_indices = @transform_5, window_bounds = array<i64: 32, 16>}, {pipeline_mode = #tpu.pipeline_mode<synchronous>, transform_indices = @transform_6, window_bounds = array<i64: 32, 24>}, {pipeline_mode = #tpu.pipeline_mode<synchronous>, transform_indices = @transform_7, window_bounds = array<i64: 32, 32>}, {pipeline_mode = #tpu.pipeline_mode<synchronous>, transform_indices = @transform_8, window_bounds = array<i64: 32, 32>}, {transform_indices = @transform_9, window_bounds = array<i64: 1, 32, 256>}]} {
    %c0 = arith.constant 0 : index
    %c0_0 = arith.constant 0 : index
    %c0_1 = arith.constant 0 : index
    %0 = vector.load %arg2[%c0, %c0_0, %c0_1] : memref<1x32x256xf32, #tpu.memory_space<vmem>>, vector<1x32x256xf32>
    %1 = vector.shape_cast %0 : vector<1x32x256xf32> to vector<32x256xf32>
    %c0_2 = arith.constant 0 : index
    %c0_3 = arith.constant 0 : index
    %2 = vector.load %arg3[%c0_2, %c0_3] : memref<48x32xf32, #tpu.memory_space<vmem>>, vector<48x32xf32>
    %cst = arith.constant dense<0.000000e+00> : vector<48x256xf32>
    %3 = tpu.matmul %2, %1, %cst {dimension_numbers = #tpu.dot_dimension_numbers<[1], [0], [0], [1], [0, 0, 1, 1], [], []>} : vector<48x32xf32>, vector<32x256xf32>, vector<48x256xf32> -> vector<48x256xf32>
    %4 = vector.extract_strided_slice %3 {offsets = [0, 0], sizes = [16, 256], strides = [1, 1]} : vector<48x256xf32> to vector<16x256xf32>
    %cst_4 = arith.constant dense<0xFF800000> : vector<256xf32>
    %5 = vector.multi_reduction <maximumf>, %4, %cst_4 [0] : vector<16x256xf32> to vector<256xf32>
    %6 = vector.shape_cast %5 : vector<256xf32> to vector<1x256xf32>
    %7 = vector.broadcast %6 : vector<1x256xf32> to vector<16x256xf32>
    %8 = arith.subf %4, %7 : vector<16x256xf32>
    %9 = math.exp %8 : vector<16x256xf32>
    %cst_5 = arith.constant dense<0.000000e+00> : vector<256xf32>
    %10 = vector.multi_reduction <add>, %9, %cst_5 [0] : vector<16x256xf32> to vector<256xf32>
    %11 = vector.shape_cast %10 : vector<256xf32> to vector<1x256xf32>
    %12 = tpu.reciprocal %11 : vector<1x256xf32> -> vector<1x256xf32>
    %13 = vector.broadcast %12 : vector<1x256xf32> to vector<16x256xf32>
    %14 = arith.mulf %9, %13 : vector<16x256xf32>
    %c0_6 = arith.constant 0 : index
    %c0_7 = arith.constant 0 : index
    %15 = vector.load %arg7[%c0_6, %c0_7] : memref<32x16xf32, #tpu.memory_space<vmem>>, vector<32x16xf32>
    %cst_8 = arith.constant dense<0.000000e+00> : vector<32x256xf32>
    %16 = tpu.matmul %15, %14, %cst_8 {dimension_numbers = #tpu.dot_dimension_numbers<[1], [0], [0], [1], [0, 0, 1, 1], [], []>} : vector<32x16xf32>, vector<16x256xf32>, vector<32x256xf32> -> vector<32x256xf32>
    %17 = arith.addf %1, %16 : vector<32x256xf32>
    %c0_9 = arith.constant 0 : index
    %c0_10 = arith.constant 0 : index
    %c0_11 = arith.constant 0 : index
    %18 = vector.load %arg11[%c0_9, %c0_10, %c0_11] : memref<1x32x256xf32, #tpu.memory_space<vmem>>, vector<1x32x256xf32>
    %19 = vector.shape_cast %18 : vector<1x32x256xf32> to vector<32x256xf32>
    %20 = vector.shape_cast %17 : vector<32x256xf32> to vector<1x32x256xf32>
    tpu.vector_store %arg11[%c0_9, %c0_10, %c0_11], %20 {strides = array<i32>} : memref<1x32x256xf32, #tpu.memory_space<vmem>>, vector<1x32x256xf32>,
    %21 = vector.extract_strided_slice %3 {offsets = [16, 0], sizes = [32, 256], strides = [1, 1]} : vector<48x256xf32> to vector<32x256xf32>
    %c0_12 = arith.constant 0 : index
    %c0_13 = arith.constant 0 : index
    %22 = vector.load %arg4[%c0_12, %c0_13] : memref<32x1xf32, #tpu.memory_space<vmem>>, vector<32x1xf32>
    %23 = vector.broadcast %22 : vector<32x1xf32> to vector<32x256xf32>
    %24 = arith.addf %21, %23 : vector<32x256xf32>
    %cst_14 = arith.constant 0.000000e+00 : f32
    %25 = vector.broadcast %cst_14 : f32 to vector<32x256xf32>
    %26 = arith.maximumf %24, %25 : vector<32x256xf32>
    %c0_15 = arith.constant 0 : index
    %c0_16 = arith.constant 0 : index
    %27 = vector.load %arg5[%c0_15, %c0_16] : memref<56x32xf32, #tpu.memory_space<vmem>>, vector<56x32xf32>
    %cst_17 = arith.constant dense<0.000000e+00> : vector<56x256xf32>
    %28 = tpu.matmul %27, %26, %cst_17 {dimension_numbers = #tpu.dot_dimension_numbers<[1], [0], [0], [1], [0, 0, 1, 1], [], []>} : vector<56x32xf32>, vector<32x256xf32>, vector<56x256xf32> -> vector<56x256xf32>
    %c0_18 = arith.constant 0 : index
    %c0_19 = arith.constant 0 : index
    %c0_20 = arith.constant 0 : index
    %29 = vector.load %arg11[%c0_18, %c0_19, %c0_20] : memref<1x32x256xf32, #tpu.memory_space<vmem>>, vector<1x32x256xf32>
    %30 = vector.shape_cast %29 : vector<1x32x256xf32> to vector<32x256xf32>
    %31 = vector.extract_strided_slice %28 {offsets = [0, 0], sizes = [24, 256], strides = [1, 1]} : vector<56x256xf32> to vector<24x256xf32>
    %cst_21 = arith.constant dense<0xFF800000> : vector<256xf32>
    %32 = vector.multi_reduction <maximumf>, %31, %cst_21 [0] : vector<24x256xf32> to vector<256xf32>
    %33 = vector.shape_cast %32 : vector<256xf32> to vector<1x256xf32>
    %34 = vector.broadcast %33 : vector<1x256xf32> to vector<24x256xf32>
    %35 = arith.subf %31, %34 : vector<24x256xf32>
    %36 = math.exp %35 : vector<24x256xf32>
    %cst_22 = arith.constant dense<0.000000e+00> : vector<256xf32>
    %37 = vector.multi_reduction <add>, %36, %cst_22 [0] : vector<24x256xf32> to vector<256xf32>
    %38 = vector.shape_cast %37 : vector<256xf32> to vector<1x256xf32>
    %39 = tpu.reciprocal %38 : vector<1x256xf32> -> vector<1x256xf32>
    %40 = vector.broadcast %39 : vector<1x256xf32> to vector<24x256xf32>
    %41 = arith.mulf %36, %40 : vector<24x256xf32>
    %c0_23 = arith.constant 0 : index
    %c0_24 = arith.constant 0 : index
    %42 = vector.load %arg8[%c0_23, %c0_24] : memref<32x24xf32, #tpu.memory_space<vmem>>, vector<32x24xf32>
    %cst_25 = arith.constant dense<0.000000e+00> : vector<32x256xf32>
    %43 = tpu.matmul %42, %41, %cst_25 {dimension_numbers = #tpu.dot_dimension_numbers<[1], [0], [0], [1], [0, 0, 1, 1], [], []>} : vector<32x24xf32>, vector<24x256xf32>, vector<32x256xf32> -> vector<32x256xf32>
    %44 = arith.addf %30, %43 : vector<32x256xf32>
    %c0_26 = arith.constant 0 : index
    %c0_27 = arith.constant 0 : index
    %c0_28 = arith.constant 0 : index
    %45 = vector.load %arg11[%c0_26, %c0_27, %c0_28] : memref<1x32x256xf32, #tpu.memory_space<vmem>>, vector<1x32x256xf32>
    %46 = vector.shape_cast %45 : vector<1x32x256xf32> to vector<32x256xf32>
    %47 = vector.shape_cast %44 : vector<32x256xf32> to vector<1x32x256xf32>
    tpu.vector_store %arg11[%c0_26, %c0_27, %c0_28], %47 {strides = array<i32>} : memref<1x32x256xf32, #tpu.memory_space<vmem>>, vector<1x32x256xf32>,
    %48 = vector.extract_strided_slice %28 {offsets = [24, 0], sizes = [32, 256], strides = [1, 1]} : vector<56x256xf32> to vector<32x256xf32>
    %c0_29 = arith.constant 0 : index
    %c0_30 = arith.constant 0 : index
    %49 = vector.load %arg6[%c0_29, %c0_30] : memref<32x1xf32, #tpu.memory_space<vmem>>, vector<32x1xf32>
    %50 = vector.broadcast %49 : vector<32x1xf32> to vector<32x256xf32>
    %51 = arith.addf %48, %50 : vector<32x256xf32>
    %cst_31 = arith.constant 0.000000e+00 : f32
    %52 = vector.broadcast %cst_31 : f32 to vector<32x256xf32>
    %53 = arith.maximumf %51, %52 : vector<32x256xf32>
    %c0_32 = arith.constant 0 : index
    %c0_33 = arith.constant 0 : index
    %54 = vector.load %arg9[%c0_32, %c0_33] : memref<32x32xf32, #tpu.memory_space<vmem>>, vector<32x32xf32>
    %cst_34 = arith.constant dense<0.000000e+00> : vector<32x256xf32>
    %55 = tpu.matmul %54, %53, %cst_34 {dimension_numbers = #tpu.dot_dimension_numbers<[1], [0], [0], [1], [0, 0, 1, 1], [], []>} : vector<32x32xf32>, vector<32x256xf32>, vector<32x256xf32> -> vector<32x256xf32>
    %c0_35 = arith.constant 0 : index
    %c0_36 = arith.constant 0 : index
    %c0_37 = arith.constant 0 : index
    %56 = vector.load %arg11[%c0_35, %c0_36, %c0_37] : memref<1x32x256xf32, #tpu.memory_space<vmem>>, vector<1x32x256xf32>
    %57 = vector.shape_cast %56 : vector<1x32x256xf32> to vector<32x256xf32>
    %cst_38 = arith.constant dense<0xFF800000> : vector<256xf32>
    %58 = vector.multi_reduction <maximumf>, %55, %cst_38 [0] : vector<32x256xf32> to vector<256xf32>
    %59 = vector.shape_cast %58 : vector<256xf32> to vector<1x256xf32>
    %60 = vector.broadcast %59 : vector<1x256xf32> to vector<32x256xf32>
    %61 = arith.subf %55, %60 : vector<32x256xf32>
    %62 = math.exp %61 : vector<32x256xf32>
    %cst_39 = arith.constant dense<0.000000e+00> : vector<256xf32>
    %63 = vector.multi_reduction <add>, %62, %cst_39 [0] : vector<32x256xf32> to vector<256xf32>
    %64 = vector.shape_cast %63 : vector<256xf32> to vector<1x256xf32>
    %65 = tpu.reciprocal %64 : vector<1x256xf32> -> vector<1x256xf32>
    %66 = vector.broadcast %65 : vector<1x256xf32> to vector<32x256xf32>
    %67 = arith.mulf %62, %66 : vector<32x256xf32>
    %c0_40 = arith.constant 0 : index
    %c0_41 = arith.constant 0 : index
    %68 = vector.load %arg10[%c0_40, %c0_41] : memref<32x32xf32, #tpu.memory_space<vmem>>, vector<32x32xf32>
    %cst_42 = arith.constant dense<0.000000e+00> : vector<32x256xf32>
    %69 = tpu.matmul %68, %67, %cst_42 {dimension_numbers = #tpu.dot_dimension_numbers<[1], [0], [0], [1], [0, 0, 1, 1], [], []>} : vector<32x32xf32>, vector<32x256xf32>, vector<32x256xf32> -> vector<32x256xf32>
    %70 = arith.addf %57, %69 : vector<32x256xf32>
    %c0_43 = arith.constant 0 : index
    %c0_44 = arith.constant 0 : index
    %c0_45 = arith.constant 0 : index
    %71 = vector.load %arg11[%c0_43, %c0_44, %c0_45] : memref<1x32x256xf32, #tpu.memory_space<vmem>>, vector<1x32x256xf32>
    %72 = vector.shape_cast %71 : vector<1x32x256xf32> to vector<32x256xf32>
    %73 = vector.shape_cast %70 : vector<32x256xf32> to vector<1x32x256xf32>
    tpu.vector_store %arg11[%c0_43, %c0_44, %c0_45], %73 {strides = array<i32>} : memref<1x32x256xf32, #tpu.memory_space<vmem>>, vector<1x32x256xf32>,
    return
  }
  func.func @transform_0(%arg0: i32, %arg1: i32) -> (i32, i32, i32) {
    %c0_i32 = arith.constant 0 : i32
    %c0_i32_0 = arith.constant 0 : i32
    return %arg0, %c0_i32, %arg1 : i32, i32, i32
  }
  func.func @transform_1(%arg0: i32, %arg1: i32) -> (i32, i32) {
    %c0_i32 = arith.constant 0 : i32
    %c0_i32_0 = arith.constant 0 : i32
    %c0_i32_1 = arith.constant 0 : i32
    return %c0_i32, %c0_i32_0 : i32, i32
  }
  func.func @transform_2(%arg0: i32, %arg1: i32) -> (i32, i32) {
    %c0_i32 = arith.constant 0 : i32
    %c0_i32_0 = arith.constant 0 : i32
    %c0_i32_1 = arith.constant 0 : i32
    return %c0_i32, %c0_i32_0 : i32, i32
  }
  func.func @transform_3(%arg0: i32, %arg1: i32) -> (i32, i32) {
    %c0_i32 = arith.constant 0 : i32
    %c0_i32_0 = arith.constant 0 : i32
    %c0_i32_1 = arith.constant 0 : i32
    return %c0_i32, %c0_i32_0 : i32, i32
  }
  func.func @transform_4(%arg0: i32, %arg1: i32) -> (i32, i32) {
    %c0_i32 = arith.constant 0 : i32
    %c0_i32_0 = arith.constant 0 : i32
    %c0_i32_1 = arith.constant 0 : i32
    return %c0_i32, %c0_i32_0 : i32, i32
  }
  func.func @transform_5(%arg0: i32, %arg1: i32) -> (i32, i32) {
    %c0_i32 = arith.constant 0 : i32
    %c0_i32_0 = arith.constant 0 : i32
    %c0_i32_1 = arith.constant 0 : i32
    return %c0_i32, %c0_i32_0 : i32, i32
  }
  func.func @transform_6(%arg0: i32, %arg1: i32) -> (i32, i32) {
    %c0_i32 = arith.constant 0 : i32
    %c0_i32_0 = arith.constant 0 : i32
    %c0_i32_1 = arith.constant 0 : i32
    return %c0_i32, %c0_i32_0 : i32, i32
  }
  func.func @transform_7(%arg0: i32, %arg1: i32) -> (i32, i32) {
    %c0_i32 = arith.constant 0 : i32
    %c0_i32_0 = arith.constant 0 : i32
    %c0_i32_1 = arith.constant 0 : i32
    return %c0_i32, %c0_i32_0 : i32, i32
  }
  func.func @transform_8(%arg0: i32, %arg1: i32) -> (i32, i32) {
    %c0_i32 = arith.constant 0 : i32
    %c0_i32_0 = arith.constant 0 : i32
    %c0_i32_1 = arith.constant 0 : i32
    return %c0_i32, %c0_i32_0 : i32, i32
  }
  func.func @transform_9(%arg0: i32, %arg1: i32) -> (i32, i32, i32) {
    %c0_i32 = arith.constant 0 : i32
    %c0_i32_0 = arith.constant 0 : i32
    return %arg0, %c0_i32, %arg1 : i32, i32, i32
  }
}

module attributes {stable_mosaic.version = 11 : i64} {
  func.func @kernel(%arg0: i32, %arg1: i32, %arg2: memref<1x32x256xf32, #tpu.memory_space<vmem>>, %arg3: memref<48x32xf32, #tpu.memory_space<vmem>>, %arg4: memref<32x1xf32, #tpu.memory_space<vmem>>, %arg5: memref<56x32xf32, #tpu.memory_space<vmem>>, %arg6: memref<32x1xf32, #tpu.memory_space<vmem>>, %arg7: memref<32x16xf32, #tpu.memory_space<vmem>>, %arg8: memref<32x24xf32, #tpu.memory_space<vmem>>, %arg9: memref<32x32xf32, #tpu.memory_space<vmem>>, %arg10: memref<32x32xf32, #tpu.memory_space<vmem>>, %arg11: memref<1x32x256xf32, #tpu.memory_space<vmem>>) attributes {dimension_semantics = [#tpu.dimension_semantics<parallel>, #tpu.dimension_semantics<parallel>], iteration_bounds = array<i64: 2, 1>, scalar_prefetch = 0 : i64, scratch_operands = 0 : i64, tpu.core_type = #tpu.core_type<tc>, window_params = [{transform_indices = @transform_0, window_bounds = array<i64: 1, 32, 256>}, {pipeline_mode = #tpu.pipeline_mode<synchronous>, transform_indices = @transform_1, window_bounds = array<i64: 48, 32>}, {pipeline_mode = #tpu.pipeline_mode<synchronous>, transform_indices = @transform_2, window_bounds = array<i64: 32, 1>}, {pipeline_mode = #tpu.pipeline_mode<synchronous>, transform_indices = @transform_3, window_bounds = array<i64: 56, 32>}, {pipeline_mode = #tpu.pipeline_mode<synchronous>, transform_indices = @transform_4, window_bounds = array<i64: 32, 1>}, {pipeline_mode = #tpu.pipeline_mode<synchronous>, transform_indices = @transform_5, window_bounds = array<i64: 32, 16>}, {pipeline_mode = #tpu.pipeline_mode<synchronous>, transform_indices = @transform_6, window_bounds = array<i64: 32, 24>}, {pipeline_mode = #tpu.pipeline_mode<synchronous>, transform_indices = @transform_7, window_bounds = array<i64: 32, 32>}, {pipeline_mode = #tpu.pipeline_mode<synchronous>, transform_indices = @transform_8, window_bounds = array<i64: 32, 32>}, {transform_indices = @transform_9, window_bounds = array<i64: 1, 32, 256>}]} {
    %c0 = arith.constant 0 : index
    %c0_0 = arith.constant 0 : index
    %c0_1 = arith.constant 0 : index
    %0 = vector.load %arg2[%c0, %c0_0, %c0_1] : memref<1x32x256xf32, #tpu.memory_space<vmem>>, vector<1x32x256xf32>
    %1 = vector.shape_cast %0 : vector<1x32x256xf32> to vector<32x256xf32>
    %c0_2 = arith.constant 0 : index
    %c0_3 = arith.constant 0 : index
    %2 = vector.load %arg3[%c0_2, %c0_3] : memref<48x32xf32, #tpu.memory_space<vmem>>, vector<48x32xf32>
    %cst = arith.constant dense<0.000000e+00> : vector<48x256xf32>
    %3 = tpu.matmul %2, %1, %cst {dimension_numbers = #tpu.dot_dimension_numbers<[1], [0], [0], [1], [0, 0, 1, 1], [], []>} : vector<48x32xf32>, vector<32x256xf32>, vector<48x256xf32> -> vector<48x256xf32>
    %4 = vector.extract_strided_slice %3 {offsets = [0, 0], sizes = [16, 256], strides = [1, 1]} : vector<48x256xf32> to vector<16x256xf32>
    %cst_4 = arith.constant dense<0xFF800000> : vector<256xf32>
    %5 = vector.multi_reduction <maximumf>, %4, %cst_4 [0] : vector<16x256xf32> to vector<256xf32>
    %6 = vector.shape_cast %5 : vector<256xf32> to vector<1x256xf32>
    %7 = vector.broadcast %6 : vector<1x256xf32> to vector<16x256xf32>
    %8 = arith.subf %4, %7 : vector<16x256xf32>
    %9 = math.exp %8 : vector<16x256xf32>
    %cst_5 = arith.constant dense<0.000000e+00> : vector<256xf32>
    %10 = vector.multi_reduction <add>, %9, %cst_5 [0] : vector<16x256xf32> to vector<256xf32>
    %11 = vector.shape_cast %10 : vector<256xf32> to vector<1x256xf32>
    %12 = tpu.reciprocal %11 : vector<1x256xf32> -> vector<1x256xf32>
    %13 = vector.broadcast %12 : vector<1x256xf32> to vector<16x256xf32>
    %14 = arith.mulf %9, %13 : vector<16x256xf32>
    %c0_6 = arith.constant 0 : index
    %c0_7 = arith.constant 0 : index
    %15 = vector.load %arg7[%c0_6, %c0_7] : memref<32x16xf32, #tpu.memory_space<vmem>>, vector<32x16xf32>
    %cst_8 = arith.constant dense<0.000000e+00> : vector<32x256xf32>
    %16 = tpu.matmul %15, %14, %cst_8 {dimension_numbers = #tpu.dot_dimension_numbers<[1], [0], [0], [1], [0, 0, 1, 1], [], []>} : vector<32x16xf32>, vector<16x256xf32>, vector<32x256xf32> -> vector<32x256xf32>
    %17 = arith.addf %1, %16 : vector<32x256xf32>
    %c0_9 = arith.constant 0 : index
    %c0_10 = arith.constant 0 : index
    %c0_11 = arith.constant 0 : index
    %18 = vector.load %arg11[%c0_9, %c0_10, %c0_11] : memref<1x32x256xf32, #tpu.memory_space<vmem>>, vector<1x32x256xf32>
    %19 = vector.shape_cast %18 : vector<1x32x256xf32> to vector<32x256xf32>
    %20 = vector.shape_cast %17 : vector<32x256xf32> to vector<1x32x256xf32>
    tpu.vector_store %arg11[%c0_9, %c0_10, %c0_11], %20 {strides = array<i32>} : memref<1x32x256xf32, #tpu.memory_space<vmem>>, vector<1x32x256xf32>,
    %21 = vector.extract_strided_slice %3 {offsets = [16, 0], sizes = [32, 256], strides = [1, 1]} : vector<48x256xf32> to vector<32x256xf32>
    %c0_12 = arith.constant 0 : index
    %c0_13 = arith.constant 0 : index
    %22 = vector.load %arg4[%c0_12, %c0_13] : memref<32x1xf32, #tpu.memory_space<vmem>>, vector<32x1xf32>
    %23 = vector.broadcast %22 : vector<32x1xf32> to vector<32x256xf32>
    %24 = arith.addf %21, %23 : vector<32x256xf32>
    %cst_14 = arith.constant 0.000000e+00 : f32
    %25 = vector.broadcast %cst_14 : f32 to vector<32x256xf32>
    %26 = arith.maximumf %24, %25 : vector<32x256xf32>
    %c0_15 = arith.constant 0 : index
    %c0_16 = arith.constant 0 : index
    %27 = vector.load %arg5[%c0_15, %c0_16] : memref<56x32xf32, #tpu.memory_space<vmem>>, vector<56x32xf32>
    %cst_17 = arith.constant dense<0.000000e+00> : vector<56x256xf32>
    %28 = tpu.matmul %27, %26, %cst_17 {dimension_numbers = #tpu.dot_dimension_numbers<[1], [0], [0], [1], [0, 0, 1, 1], [], []>} : vector<56x32xf32>, vector<32x256xf32>, vector<56x256xf32> -> vector<56x256xf32>
    %c0_18 = arith.constant 0 : index
    %c0_19 = arith.constant 0 : index
    %c0_20 = arith.constant 0 : index
    %29 = vector.load %arg11[%c0_18, %c0_19, %c0_20] : memref<1x32x256xf32, #tpu.memory_space<vmem>>, vector<1x32x256xf32>
    %30 = vector.shape_cast %29 : vector<1x32x256xf32> to vector<32x256xf32>
    %31 = vector.extract_strided_slice %28 {offsets = [0, 0], sizes = [24, 256], strides = [1, 1]} : vector<56x256xf32> to vector<24x256xf32>
    %cst_21 = arith.constant dense<0xFF800000> : vector<256xf32>
    %32 = vector.multi_reduction <maximumf>, %31, %cst_21 [0] : vector<24x256xf32> to vector<256xf32>
    %33 = vector.shape_cast %32 : vector<256xf32> to vector<1x256xf32>
    %34 = vector.broadcast %33 : vector<1x256xf32> to vector<24x256xf32>
    %35 = arith.subf %31, %34 : vector<24x256xf32>
    %36 = math.exp %35 : vector<24x256xf32>
    %cst_22 = arith.constant dense<0.000000e+00> : vector<256xf32>
    %37 = vector.multi_reduction <add>, %36, %cst_22 [0] : vector<24x256xf32> to vector<256xf32>
    %38 = vector.shape_cast %37 : vector<256xf32> to vector<1x256xf32>
    %39 = tpu.reciprocal %38 : vector<1x256xf32> -> vector<1x256xf32>
    %40 = vector.broadcast %39 : vector<1x256xf32> to vector<24x256xf32>
    %41 = arith.mulf %36, %40 : vector<24x256xf32>
    %c0_23 = arith.constant 0 : index
    %c0_24 = arith.constant 0 : index
    %42 = vector.load %arg8[%c0_23, %c0_24] : memref<32x24xf32, #tpu.memory_space<vmem>>, vector<32x24xf32>
    %cst_25 = arith.constant dense<0.000000e+00> : vector<32x256xf32>
    %43 = tpu.matmul %42, %41, %cst_25 {dimension_numbers = #tpu.dot_dimension_numbers<[1], [0], [0], [1], [0, 0, 1, 1], [], []>} : vector<32x24xf32>, vector<24x256xf32>, vector<32x256xf32> -> vector<32x256xf32>
    %44 = arith.addf %30, %43 : vector<32x256xf32>
    %c0_26 = arith.constant 0 : index
    %c0_27 = arith.constant 0 : index
    %c0_28 = arith.constant 0 : index
    %45 = vector.load %arg11[%c0_26, %c0_27, %c0_28] : memref<1x32x256xf32, #tpu.memory_space<vmem>>, vector<1x32x256xf32>
    %46 = vector.shape_cast %45 : vector<1x32x256xf32> to vector<32x256xf32>
    %47 = vector.shape_cast %44 : vector<32x256xf32> to vector<1x32x256xf32>
    tpu.vector_store %arg11[%c0_26, %c0_27, %c0_28], %47 {strides = array<i32>} : memref<1x32x256xf32, #tpu.memory_space<vmem>>, vector<1x32x256xf32>,
    %48 = vector.extract_strided_slice %28 {offsets = [24, 0], sizes = [32, 256], strides = [1, 1]} : vector<56x256xf32> to vector<32x256xf32>
    %c0_29 = arith.constant 0 : index
    %c0_30 = arith.constant 0 : index
    %49 = vector.load %arg6[%c0_29, %c0_30] : memref<32x1xf32, #tpu.memory_space<vmem>>, vector<32x1xf32>
    %50 = vector.broadcast %49 : vector<32x1xf32> to vector<32x256xf32>
    %51 = arith.addf %48, %50 : vector<32x256xf32>
    %cst_31 = arith.constant 0.000000e+00 : f32
    %52 = vector.broadcast %cst_31 : f32 to vector<32x256xf32>
    %53 = arith.maximumf %51, %52 : vector<32x256xf32>
    %c0_32 = arith.constant 0 : index
    %c0_33 = arith.constant 0 : index
    %54 = vector.load %arg9[%c0_32, %c0_33] : memref<32x32xf32, #tpu.memory_space<vmem>>, vector<32x32xf32>
    %cst_34 = arith.constant dense<0.000000e+00> : vector<32x256xf32>
    %55 = tpu.matmul %54, %53, %cst_34 {dimension_numbers = #tpu.dot_dimension_numbers<[1], [0], [0], [1], [0, 0, 1, 1], [], []>} : vector<32x32xf32>, vector<32x256xf32>, vector<32x256xf32> -> vector<32x256xf32>
    %c0_35 = arith.constant 0 : index
    %c0_36 = arith.constant 0 : index
    %c0_37 = arith.constant 0 : index
    %56 = vector.load %arg11[%c0_35, %c0_36, %c0_37] : memref<1x32x256xf32, #tpu.memory_space<vmem>>, vector<1x32x256xf32>
    %57 = vector.shape_cast %56 : vector<1x32x256xf32> to vector<32x256xf32>
    %cst_38 = arith.constant dense<0xFF800000> : vector<256xf32>
    %58 = vector.multi_reduction <maximumf>, %55, %cst_38 [0] : vector<32x256xf32> to vector<256xf32>
    %59 = vector.shape_cast %58 : vector<256xf32> to vector<1x256xf32>
    %60 = vector.broadcast %59 : vector<1x256xf32> to vector<32x256xf32>
    %61 = arith.subf %55, %60 : vector<32x256xf32>
    %62 = math.exp %61 : vector<32x256xf32>
    %cst_39 = arith.constant dense<0.000000e+00> : vector<256xf32>
    %63 = vector.multi_reduction <add>, %62, %cst_39 [0] : vector<32x256xf32> to vector<256xf32>
    %64 = vector.shape_cast %63 : vector<256xf32> to vector<1x256xf32>
    %65 = tpu.reciprocal %64 : vector<1x256xf32> -> vector<1x256xf32>
    %66 = vector.broadcast %65 : vector<1x256xf32> to vector<32x256xf32>
    %67 = arith.mulf %62, %66 : vector<32x256xf32>
    %c0_40 = arith.constant 0 : index
    %c0_41 = arith.constant 0 : index
    %68 = vector.load %arg10[%c0_40, %c0_41] : memref<32x32xf32, #tpu.memory_space<vmem>>, vector<32x32xf32>
    %cst_42 = arith.constant dense<0.000000e+00> : vector<32x256xf32>
    %69 = tpu.matmul %68, %67, %cst_42 {dimension_numbers = #tpu.dot_dimension_numbers<[1], [0], [0], [1], [0, 0, 1, 1], [], []>} : vector<32x32xf32>, vector<32x256xf32>, vector<32x256xf32> -> vector<32x256xf32>
    %70 = arith.addf %57, %69 : vector<32x256xf32>
    %c0_43 = arith.constant 0 : index
    %c0_44 = arith.constant 0 : index
    %c0_45 = arith.constant 0 : index
    %71 = vector.load %arg11[%c0_43, %c0_44, %c0_45] : memref<1x32x256xf32, #tpu.memory_space<vmem>>, vector<1x32x256xf32>
    %72 = vector.shape_cast %71 : vector<1x32x256xf32> to vector<32x256xf32>
    %73 = vector.shape_cast %70 : vector<32x256xf32> to vector<1x32x256xf32>
    tpu.vector_store %arg11[%c0_43, %c0_44, %c0_45], %73 {strides = array<i32>} : memref<1x32x256xf32, #tpu.memory_space<vmem>>, vector<1x32x256xf32>,
    return
  }
  func.func @transform_0(%arg0: i32, %arg1: i32) -> (i32, i32, i32) {
    %c0_i32 = arith.constant 0 : i32
    %c0_i32_0 = arith.constant 0 : i32
    return %arg0, %c0_i32, %arg1 : i32, i32, i32
  }
  func.func @transform_1(%arg0: i32, %arg1: i32) -> (i32, i32) {
    %c0_i32 = arith.constant 0 : i32
    %c0_i32_0 = arith.constant 0 : i32
    %c0_i32_1 = arith.constant 0 : i32
    return %c0_i32, %c0_i32_0 : i32, i32
  }
  func.func @transform_2(%arg0: i32, %arg1: i32) -> (i32, i32) {
    %c0_i32 = arith.constant 0 : i32
    %c0_i32_0 = arith.constant 0 : i32
    %c0_i32_1 = arith.constant 0 : i32
    return %c0_i32, %c0_i32_0 : i32, i32
  }
  func.func @transform_3(%arg0: i32, %arg1: i32) -> (i32, i32) {
    %c0_i32 = arith.constant 0 : i32
    %c0_i32_0 = arith.constant 0 : i32
    %c0_i32_1 = arith.constant 0 : i32
    return %c0_i32, %c0_i32_0 : i32, i32
  }
  func.func @transform_4(%arg0: i32, %arg1: i32) -> (i32, i32) {
    %c0_i32 = arith.constant 0 : i32
    %c0_i32_0 = arith.constant 0 : i32
    %c0_i32_1 = arith.constant 0 : i32
    return %c0_i32, %c0_i32_0 : i32, i32
  }
  func.func @transform_5(%arg0: i32, %arg1: i32) -> (i32, i32) {
    %c0_i32 = arith.constant 0 : i32
    %c0_i32_0 = arith.constant 0 : i32
    %c0_i32_1 = arith.constant 0 : i32
    return %c0_i32, %c0_i32_0 : i32, i32
  }
  func.func @transform_6(%arg0: i32, %arg1: i32) -> (i32, i32) {
    %c0_i32 = arith.constant 0 : i32
    %c0_i32_0 = arith.constant 0 : i32
    %c0_i32_1 = arith.constant 0 : i32
    return %c0_i32, %c0_i32_0 : i32, i32
  }
  func.func @transform_7(%arg0: i32, %arg1: i32) -> (i32, i32) {
    %c0_i32 = arith.constant 0 : i32
    %c0_i32_0 = arith.constant 0 : i32
    %c0_i32_1 = arith.constant 0 : i32
    return %c0_i32, %c0_i32_0 : i32, i32
  }
  func.func @transform_8(%arg0: i32, %arg1: i32) -> (i32, i32) {
    %c0_i32 = arith.constant 0 : i32
    %c0_i32_0 = arith.constant 0 : i32
    %c0_i32_1 = arith.constant 0 : i32
    return %c0_i32, %c0_i32_0 : i32, i32
  }
  func.func @transform_9(%arg0: i32, %arg1: i32) -> (i32, i32, i32) {
    %c0_i32 = arith.constant 0 : i32
    %c0_i32_0 = arith.constant 0 : i32
    return %arg0, %c0_i32, %arg1 : i32, i32, i32
  }
}

</mosaic_0001>

<llo_original>
// kernel: tpu_custom_call.1
$region0: #{tpu_custom_call.1}
  #allocation0 [shape = 'u32[]', space=smem, size = 0x4, offset = 0x4, fixed_abs, tag = 'smem constant byte address 0x4 - core index']
  #allocation1 [shape = 'u32[144,128]{1,0:T(1,128)}', space=vmem, size = 0x12000, scoped, tag = 'internal scratch']
  %s0 = inlined_call_operand.vmem [shape: f32[2,32,256], index: 0, kind: input, shape index: {}]
  %s1 = inlined_call_operand.vmem [shape: f32[48,32], index: 1, kind: input, shape index: {}]
  %s2 = inlined_call_operand.vmem [shape: f32[32,1], index: 2, kind: input, shape index: {}]
  %s3 = inlined_call_operand.vmem [shape: f32[56,32], index: 3, kind: input, shape index: {}]
  %s4 = inlined_call_operand.vmem [shape: f32[32,1], index: 4, kind: input, shape index: {}]
  %s5 = inlined_call_operand.vmem [shape: f32[32,16], index: 5, kind: input, shape index: {}]
  %s6 = inlined_call_operand.vmem [shape: f32[32,24], index: 6, kind: input, shape index: {}]
  %s7 = inlined_call_operand.vmem [shape: f32[32,32], index: 7, kind: input, shape index: {}]
  %s8 = inlined_call_operand.vmem [shape: f32[32,32], index: 8, kind: input, shape index: {}]
  %s9 = inlined_call_operand.hbm [shape: f32[2,32,256], index: 9, kind: output, shape index: {}]
  %s10 = sld [smem:[#allocation0]]
  $region69: #{tpu_custom_call.1} parent=0
    _
  %s12 = ssub.s32 1, %s10
  %s13 = scalar_select 0, %s12, %s10
  $region1: #{tpu_custom_call.1} parent=0
    #allocation2 [shape = 'u8[65536]{0}', space=vmem, size = 0x10000, scoped, tag = 'output window, operand 0']
    #allocation3 [shape = 's32[2]{0}', space=sflag, size = 0x8, scoped, tag = 'scoped memory for tpu_custom_call.1']
    %14 = vsyncpa [#allocation3], 0
    %s15 = scalar_lea.sflag [#allocation3], 1
    %16 = vsyncpa %s15, 0
    loop: start=0, step=1, limit=4
    $region2: #{tpu_custom_call.1} parent=1 // loop_pre_header
      _
    $region3: #{tpu_custom_call.1} parent=1 // loop_header
      %s18 = sphi 0, %s22
      %p19 = scmp.ge.s32.totalorder %s18, 4
      %s25 = sphi 0, %s37
      %s26 = sphi 0, %s33
      %s27 = sphi 0, %s25
      %s28 = sphi 0, %s26
      %s29 = sphi 0, %s27
      %s30 = sphi 0, %s28
      %s42 = sphi 0, %s44
      %s45 = sphi 0, %s42
      %s46 = sphi 0, %s45
      %s62 = sphi 0, %s46
      %s66 = sphi 0, %s66
      %s68 = sphi 0, %s66
      %s69 = sphi 0, %s68
      %s83 = sphi 0, %s69
      %s87 = sphi 0, %s87
      %s89 = sphi 0, %s87
      %s90 = sphi 0, %s89
      %s104 = sphi 0, %s90
      %s108 = sphi 0, %s108
      %s110 = sphi 0, %s108
      %s111 = sphi 0, %s110
      %s125 = sphi 0, %s111
      %s129 = sphi 0, %s129
      %s131 = sphi 0, %s129
      %s132 = sphi 0, %s131
      %s146 = sphi 0, %s132
      %s150 = sphi 0, %s150
      %s152 = sphi 0, %s150
      %s153 = sphi 0, %s152
      %s167 = sphi 0, %s153
      %s171 = sphi 0, %s171
      %s173 = sphi 0, %s171
      %s174 = sphi 0, %s173
      %s188 = sphi 0, %s174
      %s192 = sphi 0, %s192
      %s194 = sphi 0, %s192
      %s195 = sphi 0, %s194
      %s209 = sphi 0, %s195
      %s213 = sphi 0, %s213
      %s215 = sphi 0, %s213
      %s216 = sphi 0, %s215
      %s230 = sphi 0, %s216
      %s238 = sphi 0, %s240
      %s241 = sphi 0, %s238
      %s242 = sphi 0, %s241
      %s258 = sphi 0, %s242
    $region4: #{tpu_custom_call.1} parent=1 // loop_header_branch
      %21 = sbr.rel (%p19) target = $region8
    $region5: #{tpu_custom_call.1} parent=1 // loop_body
      %s23 = ssub.s32 %s18, 1
      %s24 = ssub.s32 %s18, 2
      %s31 = sadd.s32 1, %s26
      %p32 = scmp.ge.s32.totalorder %s31, 1
      %s33 = scalar_select %p32, 0, %s31
      %s34 = sadd.s32 1, %s25
      %s35 = scalar_select %p32, %s34, %s25
      %p36 = scmp.ge.s32.totalorder %s35, 2
      %s37 = scalar_select %p36, 0, %s35
      %s38 = ssub.s32 %s25, %s37
      %s39 = ssub.s32 %s26, %s33
      %s40 = sor.u32 %s38, %s39
      %p41 = scmp.eq.s32.totalorder %s40, 0
      %s43 = sadd.s32 %s42, 1
      %s44 = scalar_select %p41, %s42, %s43
      %p47 = pneg %p41
      %p48 = scmp.eq.s32.totalorder %s18, 1
      %p49 = por %p47, %p48
      %p50 = scmp.ne.s32.totalorder %s42, %s45
      %p51 = scmp.eq.s32.totalorder %s18, 0
      %p52 = por %p50, %p51
      %p53 = scmp.ne.s32.totalorder %s42, %s45
      %p54 = scmp.eq.s32.totalorder %s23, 1
      %p55 = por %p53, %p54
      %p56 = scmp.ne.s32.totalorder %s45, %s46
      %p57 = scmp.eq.s32.totalorder %s23, 0
      %p58 = por %p56, %p57
      %p59 = scmp.ne.s32.totalorder %s45, %s46
      %p60 = scmp.eq.s32.totalorder %s24, 1
      %p61 = por %p59, %p60
      %p63 = scmp.ne.s32.totalorder %s46, %s62
      %p64 = scmp.eq.s32.totalorder %s24, 0
      %p65 = por %p63, %p64
      %s67 = sadd.s32 %s66, 1
      %p70 = scmp.eq.s32.totalorder %s18, 1
      %p71 = scmp.ne.s32.totalorder %s66, %s68
      %p72 = scmp.eq.s32.totalorder %s18, 0
      %p73 = por %p71, %p72
      %p74 = scmp.ne.s32.totalorder %s66, %s68
      %p75 = scmp.eq.s32.totalorder %s23, 1
      %p76 = por %p74, %p75
      %p77 = scmp.ne.s32.totalorder %s68, %s69
      %p78 = scmp.eq.s32.totalorder %s23, 0
      %p79 = por %p77, %p78
      %p80 = scmp.ne.s32.totalorder %s68, %s69
      %p81 = scmp.eq.s32.totalorder %s24, 1
      %p82 = por %p80, %p81
      %p84 = scmp.ne.s32.totalorder %s69, %s83
      %p85 = scmp.eq.s32.totalorder %s24, 0
      %p86 = por %p84, %p85
      %s88 = sadd.s32 %s87, 1
      %p91 = scmp.eq.s32.totalorder %s18, 1
      %p92 = scmp.ne.s32.totalorder %s87, %s89
      %p93 = scmp.eq.s32.totalorder %s18, 0
      %p94 = por %p92, %p93
      %p95 = scmp.ne.s32.totalorder %s87, %s89
      %p96 = scmp.eq.s32.totalorder %s23, 1
      %p97 = por %p95, %p96
      %p98 = scmp.ne.s32.totalorder %s89, %s90
      %p99 = scmp.eq.s32.totalorder %s23, 0
      %p100 = por %p98, %p99
      %p101 = scmp.ne.s32.totalorder %s89, %s90
      %p102 = scmp.eq.s32.totalorder %s24, 1
      %p103 = por %p101, %p102
      %p105 = scmp.ne.s32.totalorder %s90, %s104
      %p106 = scmp.eq.s32.totalorder %s24, 0
      %p107 = por %p105, %p106
      %s109 = sadd.s32 %s108, 1
      %p112 = scmp.eq.s32.totalorder %s18, 1
      %p113 = scmp.ne.s32.totalorder %s108, %s110
      %p114 = scmp.eq.s32.totalorder %s18, 0
      %p115 = por %p113, %p114
      %p116 = scmp.ne.s32.totalorder %s108, %s110
      %p117 = scmp.eq.s32.totalorder %s23, 1
      %p118 = por %p116, %p117
      %p119 = scmp.ne.s32.totalorder %s110, %s111
      %p120 = scmp.eq.s32.totalorder %s23, 0
      %p121 = por %p119, %p120
      %p122 = scmp.ne.s32.totalorder %s110, %s111
      %p123 = scmp.eq.s32.totalorder %s24, 1
      %p124 = por %p122, %p123
      %p126 = scmp.ne.s32.totalorder %s111, %s125
      %p127 = scmp.eq.s32.totalorder %s24, 0
      %p128 = por %p126, %p127
      %s130 = sadd.s32 %s129, 1
      %p133 = scmp.eq.s32.totalorder %s18, 1
      %p134 = scmp.ne.s32.totalorder %s129, %s131
      %p135 = scmp.eq.s32.totalorder %s18, 0
      %p136 = por %p134, %p135
      %p137 = scmp.ne.s32.totalorder %s129, %s131
      %p138 = scmp.eq.s32.totalorder %s23, 1
      %p139 = por %p137, %p138
      %p140 = scmp.ne.s32.totalorder %s131, %s132
      %p141 = scmp.eq.s32.totalorder %s23, 0
      %p142 = por %p140, %p141
      %p143 = scmp.ne.s32.totalorder %s131, %s132
      %p144 = scmp.eq.s32.totalorder %s24, 1
      %p145 = por %p143, %p144
      %p147 = scmp.ne.s32.totalorder %s132, %s146
      %p148 = scmp.eq.s32.totalorder %s24, 0
      %p149 = por %p147, %p148
      %s151 = sadd.s32 %s150, 1
      %p154 = scmp.eq.s32.totalorder %s18, 1
      %p155 = scmp.ne.s32.totalorder %s150, %s152
      %p156 = scmp.eq.s32.totalorder %s18, 0
      %p157 = por %p155, %p156
      %p158 = scmp.ne.s32.totalorder %s150, %s152
      %p159 = scmp.eq.s32.totalorder %s23, 1
      %p160 = por %p158, %p159
      %p161 = scmp.ne.s32.totalorder %s152, %s153
      %p162 = scmp.eq.s32.totalorder %s23, 0
      %p163 = por %p161, %p162
      %p164 = scmp.ne.s32.totalorder %s152, %s153
      %p165 = scmp.eq.s32.totalorder %s24, 1
      %p166 = por %p164, %p165
      %p168 = scmp.ne.s32.totalorder %s153, %s167
      %p169 = scmp.eq.s32.totalorder %s24, 0
      %p170 = por %p168, %p169
      %s172 = sadd.s32 %s171, 1
      %p175 = scmp.eq.s32.totalorder %s18, 1
      %p176 = scmp.ne.s32.totalorder %s171, %s173
      %p177 = scmp.eq.s32.totalorder %s18, 0
      %p178 = por %p176, %p177
      %p179 = scmp.ne.s32.totalorder %s171, %s173
      %p180 = scmp.eq.s32.totalorder %s23, 1
      %p181 = por %p179, %p180
      %p182 = scmp.ne.s32.totalorder %s173, %s174
      %p183 = scmp.eq.s32.totalorder %s23, 0
      %p184 = por %p182, %p183
      %p185 = scmp.ne.s32.totalorder %s173, %s174
      %p186 = scmp.eq.s32.totalorder %s24, 1
      %p187 = por %p185, %p186
      %p189 = scmp.ne.s32.totalorder %s174, %s188
      %p190 = scmp.eq.s32.totalorder %s24, 0
      %p191 = por %p189, %p190
      %s193 = sadd.s32 %s192, 1
      %p196 = scmp.eq.s32.totalorder %s18, 1
      %p197 = scmp.ne.s32.totalorder %s192, %s194
      %p198 = scmp.eq.s32.totalorder %s18, 0
      %p199 = por %p197, %p198
      %p200 = scmp.ne.s32.totalorder %s192, %s194
      %p201 = scmp.eq.s32.totalorder %s23, 1
      %p202 = por %p200, %p201
      %p203 = scmp.ne.s32.totalorder %s194, %s195
      %p204 = scmp.eq.s32.totalorder %s23, 0
      %p205 = por %p203, %p204
      %p206 = scmp.ne.s32.totalorder %s194, %s195
      %p207 = scmp.eq.s32.totalorder %s24, 1
      %p208 = por %p206, %p207
      %p210 = scmp.ne.s32.totalorder %s195, %s209
      %p211 = scmp.eq.s32.totalorder %s24, 0
      %p212 = por %p210, %p211
      %s214 = sadd.s32 %s213, 1
      %p217 = scmp.eq.s32.totalorder %s18, 1
      %p218 = scmp.ne.s32.totalorder %s213, %s215
      %p219 = scmp.eq.s32.totalorder %s18, 0
      %p220 = por %p218, %p219
      %p221 = scmp.ne.s32.totalorder %s213, %s215
      %p222 = scmp.eq.s32.totalorder %s23, 1
      %p223 = por %p221, %p222
      %p224 = scmp.ne.s32.totalorder %s215, %s216
      %p225 = scmp.eq.s32.totalorder %s23, 0
      %p226 = por %p224, %p225
      %p227 = scmp.ne.s32.totalorder %s215, %s216
      %p228 = scmp.eq.s32.totalorder %s24, 1
      %p229 = por %p227, %p228
      %p231 = scmp.ne.s32.totalorder %s216, %s230
      %p232 = scmp.eq.s32.totalorder %s24, 0
      %p233 = por %p231, %p232
      %s234 = ssub.s32 %s25, %s37
      %s235 = ssub.s32 %s26, %s33
      %s236 = sor.u32 %s234, %s235
      %p237 = scmp.eq.s32.totalorder %s236, 0
      %s239 = sadd.s32 %s238, 1
      %s240 = scalar_select %p237, %s238, %s239
      %p243 = pneg %p237
      %p244 = scmp.eq.s32.totalorder %s18, 1
      %p245 = por %p243, %p244
      %p246 = scmp.ne.s32.totalorder %s238, %s241
      %p247 = scmp.eq.s32.totalorder %s18, 0
      %p248 = por %p246, %p247
      %p249 = scmp.ne.s32.totalorder %s238, %s241
      %p250 = scmp.eq.s32.totalorder %s23, 1
      %p251 = por %p249, %p250
      %p252 = scmp.ne.s32.totalorder %s241, %s242
      %p253 = scmp.eq.s32.totalorder %s23, 0
      %p254 = por %p252, %p253
      %p255 = scmp.ne.s32.totalorder %s241, %s242
      %p256 = scmp.eq.s32.totalorder %s24, 1
      %p257 = por %p255, %p256
      %p259 = scmp.ne.s32.totalorder %s242, %s258
      %p260 = scmp.eq.s32.totalorder %s24, 0
      %p261 = por %p259, %p260
      %p262 = scmp.le.s32.totalorder 1, %s18
      %p263 = scmp.lt.s32.totalorder %s18, 3
      %p264 = pnand %p262, %p263
      %p265 = pneg %p264
      // Predicated region
      $region9: #{tpu_custom_call.1} parent=5 // pred_check
        _
      $region10: #{tpu_custom_call.1} parent=5 // pred_check_branch
        %267 = sbr.rel (%p264) target = $region12
      $region11: #{tpu_custom_call.1} parent=5 // pred_region
        %s268 = ssub.s32 %s18, 1
        // Predicated region
        $region13: #{tpu_custom_call.1} parent=11 // pred_check
          %p269 = pneg %p79
        $region14: #{tpu_custom_call.1} parent=11 // pred_check_branch
          %271 = sbr.rel (%p269) target = $region16
        $region15: #{tpu_custom_call.1} parent=11 // pred_region
          _
        $region16: #{tpu_custom_call.1} parent=11 // pred_fallthru
          _
        // Predicated region
        $region17: #{tpu_custom_call.1} parent=11 // pred_check
          %p272 = pneg %p100
        $region18: #{tpu_custom_call.1} parent=11 // pred_check_branch
          %274 = sbr.rel (%p272) target = $region20
        $region19: #{tpu_custom_call.1} parent=11 // pred_region
          _
        $region20: #{tpu_custom_call.1} parent=11 // pred_fallthru
          _
        // Predicated region
        $region21: #{tpu_custom_call.1} parent=11 // pred_check
          %p275 = pneg %p121
        $region22: #{tpu_custom_call.1} parent=11 // pred_check_branch
          %277 = sbr.rel (%p275) target = $region24
        $region23: #{tpu_custom_call.1} parent=11 // pred_region
          _
        $region24: #{tpu_custom_call.1} parent=11 // pred_fallthru
          _
        // Predicated region
        $region25: #{tpu_custom_call.1} parent=11 // pred_check
          %p278 = pneg %p142
        $region26: #{tpu_custom_call.1} parent=11 // pred_check_branch
          %280 = sbr.rel (%p278) target = $region28
        $region27: #{tpu_custom_call.1} parent=11 // pred_region
          _
        $region28: #{tpu_custom_call.1} parent=11 // pred_fallthru
          _
        // Predicated region
        $region29: #{tpu_custom_call.1} parent=11 // pred_check
          %p281 = pneg %p163
        $region30: #{tpu_custom_call.1} parent=11 // pred_check_branch
          %283 = sbr.rel (%p281) target = $region32
        $region31: #{tpu_custom_call.1} parent=11 // pred_region
          _
        $region32: #{tpu_custom_call.1} parent=11 // pred_fallthru
          _
        // Predicated region
        $region33: #{tpu_custom_call.1} parent=11 // pred_check
          %p284 = pneg %p184
        $region34: #{tpu_custom_call.1} parent=11 // pred_check_branch
          %286 = sbr.rel (%p284) target = $region36
        $region35: #{tpu_custom_call.1} parent=11 // pred_region
          _
        $region36: #{tpu_custom_call.1} parent=11 // pred_fallthru
          _
        // Predicated region
        $region37: #{tpu_custom_call.1} parent=11 // pred_check
          %p287 = pneg %p205
        $region38: #{tpu_custom_call.1} parent=11 // pred_check_branch
          %289 = sbr.rel (%p287) target = $region40
        $region39: #{tpu_custom_call.1} parent=11 // pred_region
          _
        $region40: #{tpu_custom_call.1} parent=11 // pred_fallthru
          _
        // Predicated region
        $region41: #{tpu_custom_call.1} parent=11 // pred_check
          %p290 = pneg %p226
        $region42: #{tpu_custom_call.1} parent=11 // pred_check_branch
          %292 = sbr.rel (%p290) target = $region44
        $region43: #{tpu_custom_call.1} parent=11 // pred_region
          _
        $region44: #{tpu_custom_call.1} parent=11 // pred_fallthru
          _
      $region12: #{tpu_custom_call.1} parent=5 // pred_fallthru
        _
      %p293 = scmp.lt.s32.totalorder %s18, 2
      // Predicated region
      $region45: #{tpu_custom_call.1} parent=5 // pred_check
        %p294 = pneg %p293
      $region46: #{tpu_custom_call.1} parent=5 // pred_check_branch
        %296 = sbr.rel (%p294) target = $region48
      $region47: #{tpu_custom_call.1} parent=5 // pred_region
        // Predicated region
        $region49: #{tpu_custom_call.1} parent=47 // pred_check
          %p297 = pneg %p52
        $region50: #{tpu_custom_call.1} parent=47 // pred_check_branch
          %299 = sbr.rel (%p297) target = $region52
        $region51: #{tpu_custom_call.1} parent=47 // pred_region
          %s300 = smul.u32 2, %s26
          %p301 = scmp.lt.s32.totalorder %s25, 1
          %s302 = scalar_select %p301, %s25, 1
          %p303 = scmp.lt.s32.totalorder %s300, 1
          %s304 = scalar_select %p303, %s300, 1
          %s305 = smul.addr %s302, 8
          %s306 = sadd.s32 %s304, %s305
          %s307 = smul.addr %s306, 8
          %s308 = scalar_lea.vmem %s0, %s307
          %s309 = smul.u32 2, %s26
        $region52: #{tpu_custom_call.1} parent=47 // pred_fallthru
          _
      $region48: #{tpu_custom_call.1} parent=5 // pred_fallthru
        _
      %p310 = scmp.le.s32.totalorder 1, %s18
      %p311 = scmp.lt.s32.totalorder %s18, 3
      %p312 = pnand %p310, %p311
      %p313 = pneg %p312
      // Predicated region
      $region53: #{tpu_custom_call.1} parent=5 // pred_check
        _
      $region54: #{tpu_custom_call.1} parent=5 // pred_check_branch
        %315 = sbr.rel (%p312) target = $region56
      $region55: #{tpu_custom_call.1} parent=5 // pred_region
        %s316 = ssub.s32 %s18, 1
        %s317 = smul.u32 2, %s28
        %p318 = scmp.lt.s32.totalorder %s27, 1
        %s319 = scalar_select %p318, %s27, 1
        %p320 = scmp.lt.s32.totalorder %s317, 1
        %s321 = scalar_select %p320, %s317, 1
        %s322 = smul.addr %s319, 8
        %s323 = sadd.s32 %s321, %s322
        %s324 = smul.addr %s323, 8
        %s325 = scalar_lea.vmem %s0, %s324
        %p326 = pneg %p58
        %p327 = pneg %p55
        %p328 = pneg %p79
        %p329 = pneg %p76
        %p330 = pneg %p100
        %p331 = pneg %p97
        %p332 = pneg %p121
        %p333 = pneg %p118
        %p334 = pneg %p142
        %p335 = pneg %p139
        %p336 = pneg %p163
        %p337 = pneg %p160
        %p338 = pneg %p184
        %p339 = pneg %p181
        %p340 = pneg %p205
        %p341 = pneg %p202
        %p342 = pneg %p226
        %p343 = pneg %p223
        %p344 = pneg %p254
        %p345 = pneg %p251
        %s346 = sand.u32 %s241, 1
        %s347 = scalar_lea.sflag [#allocation3], %s346
        %s348 = sand.u32 %s241, 1
        %s349 = smul.addr %s348, 64
        %s350 = scalar_lea.vmem [#allocation2], %s349
        %s351 = smul.u32 2, %s28
        %p352 = scmp.lt.s32.totalorder %s27, 1
        %s353 = scalar_select %p352, %s27, 1
        %p354 = scmp.lt.s32.totalorder %s351, 1
        %s355 = scalar_select %p354, %s351, 1
        %s356 = smul.addr %s353, 8
        %s357 = sadd.s32 %s355, %s356
        %s358 = smul.addr %s357, 8
        %s359 = scalar_lea.vmem %s0, %s358
        %s360 = smul.u32 2, %s28
        %s361 = smul.u32 2, %s28
        %v362 = vld [vmem:[%s359] sm:$0xff]
        %v363 = vld [vmem:[%s359 + $0x8] sm:$0xff]
        %v364 = vld [vmem:[%s359 + $0x10] sm:$0xff]
        %v365 = vld [vmem:[%s359 + $0x18] sm:$0xff]
        %v366 = vld [vmem:[%s359 + $0x20] sm:$0xff]
        %v367 = vld [vmem:[%s359 + $0x28] sm:$0xff]
        %v368 = vld [vmem:[%s359 + $0x30] sm:$0xff]
        %v369 = vld [vmem:[%s359 + $0x38] sm:$0xff]
        %v370 = vld [vmem:[%s1] sm:$0xff]
        %v371 = vld [vmem:[%s1 + $0x8] sm:$0xff]
        %v372 = vld [vmem:[%s1 + $0x10] sm:$0xff]
        %v373 = vld [vmem:[%s1 + $0x18] sm:$0xff]
        %v374 = vld [vmem:[%s1 + $0x20] sm:$0xff]
        %v375 = vld [vmem:[%s1 + $0x28] sm:$0xff]
        %vm376 = vcmask 261120
        %v378 = vsel %vm376, %v370, 0
        %v381 = vsel %vm376, %v371, 0
        %v384 = vsel %vm376, %v372, 0
        %v387 = vsel %vm376, %v373, 0
        %v390 = vsel %vm376, %v374, 0
        %v393 = vsel %vm376, %v375, 0
        %395 = vmatprep.subr.mxu0 %v363
        %396 = vmatpush1.msra.mxu0 %v362
        %397 = vmatprep.subr.mxu0 %v365
        %398 = vmatpush1.msra.mxu0 %v364
        %399 = vmatprep.subr.mxu0 %v367
        %400 = vmatpush1.msra.mxu0 %v366
        %401 = vmatprep.subr.mxu0 %v369
        %402 = vmatpush1.msra.mxu0 %v368
        %403 = vmatprep.subr.mxu0 0.0
        %404 = vmatpush1.msra.mxu0 0.0
        %405 = vmatprep.subr.mxu0 0.0
        %406 = vmatpush1.msra.mxu0 0.0
        %407 = vmatprep.subr.mxu0 0.0
        %408 = vmatpush1.msra.mxu0 0.0
        %409 = vmatprep.subr.mxu0 0.0
        %410 = vmatpush1.msra.mxu0 0.0
        %411 = vmatprep.subr.mxu0 0.0
        %412 = vmatpush1.msra.mxu0 0.0
        %413 = vmatprep.subr.mxu0 0.0
        %414 = vmatpush1.msra.mxu0 0.0
        %415 = vmatprep.subr.mxu0 0.0
        %416 = vmatpush1.msra.mxu0 0.0
        %417 = vmatprep.subr.mxu0 0.0
        %418 = vmatpush1.msra.mxu0 0.0
        %419 = vmatprep.subr.mxu0 0.0
        %420 = vmatpush1.msra.mxu0 0.0
        %421 = vmatprep.subr.mxu0 0.0
        %422 = vmatpush1.msra.mxu0 0.0
        %423 = vmatprep.subr.mxu0 0.0
        %424 = vmatpush1.msra.mxu0 0.0
        %425 = vmatprep.subr.mxu0 0.0
        %426 = vmatpush1.msra.mxu0 0.0
        %427 = vmatprep.subr.mxu0 0.0
        %428 = vmatpush1.msra.mxu0 0.0
        %429 = vmatprep.subr.mxu0 0.0
        %430 = vmatpush1.msra.mxu0 0.0
        %431 = vmatprep.subr.mxu0 0.0
        %432 = vmatpush1.msra.mxu0 0.0
        %433 = vmatprep.subr.mxu0 0.0
        %434 = vmatpush1.msra.mxu0 0.0
        %435 = vmatprep.subr.mxu0 0.0
        %436 = vmatpush1.msra.mxu0 0.0
        %437 = vmatprep.subr.mxu0 0.0
        %438 = vmatpush1.msra.mxu0 0.0
        %439 = vmatprep.subr.mxu0 0.0
        %440 = vmatpush1.msra.mxu0 0.0
        %441 = vmatprep.subr.mxu0 0.0
        %442 = vmatpush1.msra.mxu0 0.0
        %443 = vmatprep.subr.mxu0 0.0
        %444 = vmatpush1.msra.mxu0 0.0
        %445 = vmatprep.subr.mxu0 0.0
        %446 = vmatpush1.msra.mxu0 0.0
        %447 = vmatprep.subr.mxu0 0.0
        %448 = vmatpush1.msra.mxu0 0.0
        %449 = vmatprep.subr.mxu0 0.0
        %450 = vmatpush1.msra.mxu0 0.0
        %451 = vmatprep.subr.mxu0 0.0
        %452 = vmatpush1.msra.mxu0 0.0
        %453 = vmatprep.subr.mxu0 0.0
        %454 = vmatpush1.msra.mxu0 0.0
        %455 = vmatprep.subr.mxu0 0.0
        %456 = vmatpush1.msra.mxu0 0.0
        %457 = vmatprep.subr.mxu0 0.0
        %458 = vmatpush1.msra.mxu0 0.0
        %459 = vmatprep.mubr.f32.mxu0 0.0
        %460 = vmatmul.mubr.f32.gmra.mrb[0].mxu0 %v378
        %v461 = vpop.f32.mrb[0].mxu0
        %v462 = vadd.f32 0.0, %v461
        %v463 = vpop.f32.mrb[0].mxu0
        %v464 = vadd.f32 0.0, %v463
        %465 = vmatprep.mubr.f32.mxu0 0.0
        %466 = vmatmul.mubr.f32.gmra.mrb[0].mxu0 %v381
        %v467 = vpop.f32.mrb[0].mxu0
        %v468 = vadd.f32 0.0, %v467
        %v469 = vpop.f32.mrb[0].mxu0
        %v470 = vadd.f32 0.0, %v469
        %471 = vmatprep.mubr.f32.mxu0 0.0
        %472 = vmatmul.mubr.f32.gmra.mrb[0].mxu0 %v384
        %v473 = vpop.f32.mrb[0].mxu0
        %v474 = vadd.f32 0.0, %v473
        %v475 = vpop.f32.mrb[0].mxu0
        %v476 = vadd.f32 0.0, %v475
        %477 = vmatprep.mubr.f32.mxu0 0.0
        %478 = vmatmul.mubr.f32.gmra.mrb[0].mxu0 %v387
        %v479 = vpop.f32.mrb[0].mxu0
        %v480 = vadd.f32 0.0, %v479
        %v481 = vpop.f32.mrb[0].mxu0
        %v482 = vadd.f32 0.0, %v481
        %483 = vmatprep.mubr.f32.mxu0 0.0
        %484 = vmatmul.mubr.f32.gmra.mrb[0].mxu0 %v390
        %v485 = vpop.f32.mrb[0].mxu0
        %v486 = vadd.f32 0.0, %v485
        %v487 = vpop.f32.mrb[0].mxu0
        %v488 = vadd.f32 0.0, %v487
        %489 = vmatprep.mubr.f32.mxu0 0.0
        %490 = vmatmul.mubr.f32.gmra.mrb[0].mxu0 %v393
        %v491 = vpop.f32.mrb[0].mxu0
        %v492 = vadd.f32 0.0, %v491
        %v493 = vpop.f32.mrb[0].mxu0
        %v494 = vadd.f32 0.0, %v493
        %495 = vdwg.mxu0
        %v496 = vmax.f32 %v462, %v468
        %v497 = vrot.slane %v496, 4
        %v498 = vmax.f32 %v496, %v497
        %v499 = vrot.slane %v498, 2
        %v500 = vmax.f32 %v498, %v499
        %v501 = vrot.slane %v500, 1
        %v502 = vmax.f32 %v500, %v501
        %v503 = vmax.f32 %v464, %v470
        %v504 = vrot.slane %v503, 4
        %v505 = vmax.f32 %v503, %v504
        %v506 = vrot.slane %v505, 2
        %v507 = vmax.f32 %v505, %v506
        %v508 = vrot.slane %v507, 1
        %v509 = vmax.f32 %v507, %v508
        %v510 = vsub.f32 %v462, %v502
        %v511 = vsub.f32 %v464, %v509
        %v512 = vsub.f32 %v468, %v502
        %v513 = vsub.f32 %v470, %v509
        %v514 = vmul.f32 %v510, 1.442695
        %v515 = vpow.pop %v514
        %v516 = vmul.f32 %v511, 1.442695
        %v517 = vpow.pop %v516
        %v518 = vmul.f32 %v512, 1.442695
        %v519 = vpow.pop %v518
        %v520 = vmul.f32 %v513, 1.442695
        %v521 = vpow.pop %v520
        %v522 = vadd.f32 %v515, %v519
        %v523 = vrot.slane %v522, 4
        %v524 = vadd.f32 %v522, %v523
        %v525 = vrot.slane %v524, 2
        %v526 = vadd.f32 %v524, %v525
        %v527 = vrot.slane %v526, 1
        %v528 = vadd.f32 %v526, %v527
        %v529 = vadd.f32 %v517, %v521
        %v530 = vrot.slane %v529, 4
        %v531 = vadd.f32 %v529, %v530
        %v532 = vrot.slane %v531, 2
        %v533 = vadd.f32 %v531, %v532
        %v534 = vrot.slane %v533, 1
        %v535 = vadd.f32 %v533, %v534
        %v536 = vrcp.pop %v528
        %v537 = vrcp.pop %v535
        %v538 = vmul.f32 %v515, %v536
        %v539 = vmul.f32 %v517, %v537
        %v540 = vmul.f32 %v519, %v536
        %v541 = vmul.f32 %v521, %v537
        %v542 = vld [vmem:[%s5] sm:$0xff]
        %v543 = vld [vmem:[%s5 + $0x8] sm:$0xff]
        %v544 = vld [vmem:[%s5 + $0x10] sm:$0xff]
        %v545 = vld [vmem:[%s5 + $0x18] sm:$0xff]
        %vm546 = vcmask 130048
        %v548 = vsel %vm546, %v542, 0
        %v551 = vsel %vm546, %v543, 0
        %v554 = vsel %vm546, %v544, 0
        %v557 = vsel %vm546, %v545, 0
        %559 = vmatprep.subr.mxu0 %v539
        %560 = vmatpush1.msra.mxu0 %v538
        %561 = vmatprep.subr.mxu0 %v541
        %562 = vmatpush1.msra.mxu0 %v540
        %563 = vmatprep.subr.mxu0 0.0
        %564 = vmatpush1.msra.mxu0 0.0
        %565 = vmatprep.subr.mxu0 0.0
        %566 = vmatpush1.msra.mxu0 0.0
        %567 = vmatprep.subr.mxu0 0.0
        %568 = vmatpush1.msra.mxu0 0.0
        %569 = vmatprep.subr.mxu0 0.0
        %570 = vmatpush1.msra.mxu0 0.0
        %571 = vmatprep.subr.mxu0 0.0
        %572 = vmatpush1.msra.mxu0 0.0
        %573 = vmatprep.subr.mxu0 0.0
        %574 = vmatpush1.msra.mxu0 0.0
        %575 = vmatprep.subr.mxu0 0.0
        %576 = vmatpush1.msra.mxu0 0.0
        %577 = vmatprep.subr.mxu0 0.0
        %578 = vmatpush1.msra.mxu0 0.0
        %579 = vmatprep.subr.mxu0 0.0
        %580 = vmatpush1.msra.mxu0 0.0
        %581 = vmatprep.subr.mxu0 0.0
        %582 = vmatpush1.msra.mxu0 0.0
        %583 = vmatprep.subr.mxu0 0.0
        %584 = vmatpush1.msra.mxu0 0.0
        %585 = vmatprep.subr.mxu0 0.0
        %586 = vmatpush1.msra.mxu0 0.0
        %587 = vmatprep.subr.mxu0 0.0
        %588 = vmatpush1.msra.mxu0 0.0
        %589 = vmatprep.subr.mxu0 0.0
        %590 = vmatpush1.msra.mxu0 0.0
        %591 = vmatprep.subr.mxu0 0.0
        %592 = vmatpush1.msra.mxu0 0.0
        %593 = vmatprep.subr.mxu0 0.0
        %594 = vmatpush1.msra.mxu0 0.0
        %595 = vmatprep.subr.mxu0 0.0
        %596 = vmatpush1.msra.mxu0 0.0
        %597 = vmatprep.subr.mxu0 0.0
        %598 = vmatpush1.msra.mxu0 0.0
        %599 = vmatprep.subr.mxu0 0.0
        %600 = vmatpush1.msra.mxu0 0.0
        %601 = vmatprep.subr.mxu0 0.0
        %602 = vmatpush1.msra.mxu0 0.0
        %603 = vmatprep.subr.mxu0 0.0
        %604 = vmatpush1.msra.mxu0 0.0
        %605 = vmatprep.subr.mxu0 0.0
        %606 = vmatpush1.msra.mxu0 0.0
        %607 = vmatprep.subr.mxu0 0.0
        %608 = vmatpush1.msra.mxu0 0.0
        %609 = vmatprep.subr.mxu0 0.0
        %610 = vmatpush1.msra.mxu0 0.0
        %611 = vmatprep.subr.mxu0 0.0
        %612 = vmatpush1.msra.mxu0 0.0
        %613 = vmatprep.subr.mxu0 0.0
        %614 = vmatpush1.msra.mxu0 0.0
        %615 = vmatprep.subr.mxu0 0.0
        %616 = vmatpush1.msra.mxu0 0.0
        %617 = vmatprep.subr.mxu0 0.0
        %618 = vmatpush1.msra.mxu0 0.0
        %619 = vmatprep.subr.mxu0 0.0
        %620 = vmatpush1.msra.mxu0 0.0
        %621 = vmatprep.subr.mxu0 0.0
        %622 = vmatpush1.msra.mxu0 0.0
        %623 = vmatprep.mubr.f32.mxu0 0.0
        %624 = vmatmul.mubr.f32.gmra.mrb[0].mxu0 %v548
        %v625 = vpop.f32.mrb[0].mxu0
        %v626 = vadd.f32 0.0, %v625
        %v627 = vpop.f32.mrb[0].mxu0
        %v628 = vadd.f32 0.0, %v627
        %629 = vmatprep.mubr.f32.mxu0 0.0
        %630 = vmatmul.mubr.f32.gmra.mrb[0].mxu0 %v551
        %v631 = vpop.f32.mrb[0].mxu0
        %v632 = vadd.f32 0.0, %v631
        %v633 = vpop.f32.mrb[0].mxu0
        %v634 = vadd.f32 0.0, %v633
        %635 = vmatprep.mubr.f32.mxu0 0.0
        %636 = vmatmul.mubr.f32.gmra.mrb[0].mxu0 %v554
        %v637 = vpop.f32.mrb[0].mxu0
        %v638 = vadd.f32 0.0, %v637
        %v639 = vpop.f32.mrb[0].mxu0
        %v640 = vadd.f32 0.0, %v639
        %641 = vmatprep.mubr.f32.mxu0 0.0
        %642 = vmatmul.mubr.f32.gmra.mrb[0].mxu0 %v557
        %v643 = vpop.f32.mrb[0].mxu0
        %v644 = vadd.f32 0.0, %v643
        %v645 = vpop.f32.mrb[0].mxu0
        %v646 = vadd.f32 0.0, %v645
        %647 = vdwg.mxu0
        %v648 = vadd.f32 %v362, %v626
        %v649 = vadd.f32 %v363, %v628
        %v650 = vadd.f32 %v364, %v632
        %v651 = vadd.f32 %v365, %v634
        %v652 = vadd.f32 %v366, %v638
        %v653 = vadd.f32 %v367, %v640
        %v654 = vadd.f32 %v368, %v644
        %v655 = vadd.f32 %v369, %v646
        %656 = vst [vmem:[%s350] sm:$0xff] %v648
        %657 = vst [vmem:[%s350 + $0x8] sm:$0xff] %v649
        %658 = vst [vmem:[%s350 + $0x10] sm:$0xff] %v650
        %659 = vst [vmem:[%s350 + $0x18] sm:$0xff] %v651
        %660 = vst [vmem:[%s350 + $0x20] sm:$0xff] %v652
        %661 = vst [vmem:[%s350 + $0x28] sm:$0xff] %v653
        %662 = vst [vmem:[%s350 + $0x30] sm:$0xff] %v654
        %663 = vst [vmem:[%s350 + $0x38] sm:$0xff] %v655
        %v664 = vld [vmem:[%s2] sm:$0xff]
        %v665 = vld [vmem:[%s2 + $0x8] sm:$0xff]
        %v666 = vld [vmem:[%s2 + $0x10] sm:$0xff]
        %v667 = vld [vmem:[%s2 + $0x18] sm:$0xff]
        %669 = vset.pattern.permute.xlu0 0
        %670 = vperm.xlu0 %669, %v664
        %v671 = vpop.permute.xlu0 %670
        %674 = vset.pattern.permute.xlu0 0
        %675 = vperm.xlu0 %674, %v665
        %v676 = vpop.permute.xlu0 %675
        %679 = vset.pattern.permute.xlu0 0
        %680 = vperm.xlu0 %679, %v666
        %v681 = vpop.permute.xlu0 %680
        %684 = vset.pattern.permute.xlu0 0
        %685 = vperm.xlu0 %684, %v667
        %v686 = vpop.permute.xlu0 %685
        %v688 = vadd.f32 %v474, %v671
        %v689 = vadd.f32 %v476, %v671
        %v690 = vadd.f32 %v480, %v676
        %v691 = vadd.f32 %v482, %v676
        %v692 = vadd.f32 %v486, %v681
        %v693 = vadd.f32 %v488, %v681
        %v694 = vadd.f32 %v492, %v686
        %v695 = vadd.f32 %v494, %v686
        %v696 = vmax.f32 %v688, 0.0
        %v697 = vmax.f32 %v689, 0.0
        %v698 = vmax.f32 %v690, 0.0
        %v699 = vmax.f32 %v691, 0.0
        %v700 = vmax.f32 %v692, 0.0
        %v701 = vmax.f32 %v693, 0.0
        %v702 = vmax.f32 %v694, 0.0
        %v703 = vmax.f32 %v695, 0.0
        %v704 = vld [vmem:[%s3] sm:$0xff]
        %v705 = vld [vmem:[%s3 + $0x8] sm:$0xff]
        %v706 = vld [vmem:[%s3 + $0x10] sm:$0xff]
        %v707 = vld [vmem:[%s3 + $0x18] sm:$0xff]
        %v708 = vld [vmem:[%s3 + $0x20] sm:$0xff]
        %v709 = vld [vmem:[%s3 + $0x28] sm:$0xff]
        %v710 = vld [vmem:[%s3 + $0x30] sm:$0xff]
        %v712 = vsel %vm376, %v704, 0
        %v715 = vsel %vm376, %v705, 0
        %v718 = vsel %vm376, %v706, 0
        %v721 = vsel %vm376, %v707, 0
        %v724 = vsel %vm376, %v708, 0
        %v727 = vsel %vm376, %v709, 0
        %v730 = vsel %vm376, %v710, 0
        %732 = vmatprep.subr.mxu0 %v697
        %733 = vmatpush1.msra.mxu0 %v696
        %734 = vmatprep.subr.mxu0 %v699
        %735 = vmatpush1.msra.mxu0 %v698
        %736 = vmatprep.subr.mxu0 %v701
        %737 = vmatpush1.msra.mxu0 %v700
        %738 = vmatprep.subr.mxu0 %v703
        %739 = vmatpush1.msra.mxu0 %v702
        %740 = vmatprep.subr.mxu0 0.0
        %741 = vmatpush1.msra.mxu0 0.0
        %742 = vmatprep.subr.mxu0 0.0
        %743 = vmatpush1.msra.mxu0 0.0
        %744 = vmatprep.subr.mxu0 0.0
        %745 = vmatpush1.msra.mxu0 0.0
        %746 = vmatprep.subr.mxu0 0.0
        %747 = vmatpush1.msra.mxu0 0.0
        %748 = vmatprep.subr.mxu0 0.0
        %749 = vmatpush1.msra.mxu0 0.0
        %750 = vmatprep.subr.mxu0 0.0
        %751 = vmatpush1.msra.mxu0 0.0
        %752 = vmatprep.subr.mxu0 0.0
        %753 = vmatpush1.msra.mxu0 0.0
        %754 = vmatprep.subr.mxu0 0.0
        %755 = vmatpush1.msra.mxu0 0.0
        %756 = vmatprep.subr.mxu0 0.0
        %757 = vmatpush1.msra.mxu0 0.0
        %758 = vmatprep.subr.mxu0 0.0
        %759 = vmatpush1.msra.mxu0 0.0
        %760 = vmatprep.subr.mxu0 0.0
        %761 = vmatpush1.msra.mxu0 0.0
        %762 = vmatprep.subr.mxu0 0.0
        %763 = vmatpush1.msra.mxu0 0.0
        %764 = vmatprep.subr.mxu0 0.0
        %765 = vmatpush1.msra.mxu0 0.0
        %766 = vmatprep.subr.mxu0 0.0
        %767 = vmatpush1.msra.mxu0 0.0
        %768 = vmatprep.subr.mxu0 0.0
        %769 = vmatpush1.msra.mxu0 0.0
        %770 = vmatprep.subr.mxu0 0.0
        %771 = vmatpush1.msra.mxu0 0.0
        %772 = vmatprep.subr.mxu0 0.0
        %773 = vmatpush1.msra.mxu0 0.0
        %774 = vmatprep.subr.mxu0 0.0
        %775 = vmatpush1.msra.mxu0 0.0
        %776 = vmatprep.subr.mxu0 0.0
        %777 = vmatpush1.msra.mxu0 0.0
        %778 = vmatprep.subr.mxu0 0.0
        %779 = vmatpush1.msra.mxu0 0.0
        %780 = vmatprep.subr.mxu0 0.0
        %781 = vmatpush1.msra.mxu0 0.0
        %782 = vmatprep.subr.mxu0 0.0
        %783 = vmatpush1.msra.mxu0 0.0
        %784 = vmatprep.subr.mxu0 0.0
        %785 = vmatpush1.msra.mxu0 0.0
        %786 = vmatprep.subr.mxu0 0.0
        %787 = vmatpush1.msra.mxu0 0.0
        %788 = vmatprep.subr.mxu0 0.0
        %789 = vmatpush1.msra.mxu0 0.0
        %790 = vmatprep.subr.mxu0 0.0
        %791 = vmatpush1.msra.mxu0 0.0
        %792 = vmatprep.subr.mxu0 0.0
        %793 = vmatpush1.msra.mxu0 0.0
        %794 = vmatprep.subr.mxu0 0.0
        %795 = vmatpush1.msra.mxu0 0.0
        %796 = vmatprep.mubr.f32.mxu0 0.0
        %797 = vmatmul.mubr.f32.gmra.mrb[0].mxu0 %v712
        %v798 = vpop.f32.mrb[0].mxu0
        %v799 = vadd.f32 0.0, %v798
        %v800 = vpop.f32.mrb[0].mxu0
        %v801 = vadd.f32 0.0, %v800
        %802 = vmatprep.mubr.f32.mxu0 0.0
        %803 = vmatmul.mubr.f32.gmra.mrb[0].mxu0 %v715
        %v804 = vpop.f32.mrb[0].mxu0
        %v805 = vadd.f32 0.0, %v804
        %v806 = vpop.f32.mrb[0].mxu0
        %v807 = vadd.f32 0.0, %v806
        %808 = vmatprep.mubr.f32.mxu0 0.0
        %809 = vmatmul.mubr.f32.gmra.mrb[0].mxu0 %v718
        %v810 = vpop.f32.mrb[0].mxu0
        %v811 = vadd.f32 0.0, %v810
        %v812 = vpop.f32.mrb[0].mxu0
        %v813 = vadd.f32 0.0, %v812
        %814 = vmatprep.mubr.f32.mxu0 0.0
        %815 = vmatmul.mubr.f32.gmra.mrb[0].mxu0 %v721
        %v816 = vpop.f32.mrb[0].mxu0
        %v817 = vadd.f32 0.0, %v816
        %v818 = vpop.f32.mrb[0].mxu0
        %v819 = vadd.f32 0.0, %v818
        %820 = vmatprep.mubr.f32.mxu0 0.0
        %821 = vmatmul.mubr.f32.gmra.mrb[0].mxu0 %v724
        %v822 = vpop.f32.mrb[0].mxu0
        %v823 = vadd.f32 0.0, %v822
        %v824 = vpop.f32.mrb[0].mxu0
        %v825 = vadd.f32 0.0, %v824
        %826 = vmatprep.mubr.f32.mxu0 0.0
        %827 = vmatmul.mubr.f32.gmra.mrb[0].mxu0 %v727
        %v828 = vpop.f32.mrb[0].mxu0
        %v829 = vadd.f32 0.0, %v828
        %v830 = vpop.f32.mrb[0].mxu0
        %v831 = vadd.f32 0.0, %v830
        %832 = vmatprep.mubr.f32.mxu0 0.0
        %833 = vmatmul.mubr.f32.gmra.mrb[0].mxu0 %v730
        %v834 = vpop.f32.mrb[0].mxu0
        %v835 = vadd.f32 0.0, %v834
        %v836 = vpop.f32.mrb[0].mxu0
        %v837 = vadd.f32 0.0, %v836
        %838 = vdwg.mxu0
        %v839 = vld [vmem:[%s350] sm:$0xff]
        %v840 = vld [vmem:[%s350 + $0x8] sm:$0xff]
        %v841 = vld [vmem:[%s350 + $0x10] sm:$0xff]
        %v842 = vld [vmem:[%s350 + $0x18] sm:$0xff]
        %v843 = vld [vmem:[%s350 + $0x20] sm:$0xff]
        %v844 = vld [vmem:[%s350 + $0x28] sm:$0xff]
        %v845 = vld [vmem:[%s350 + $0x30] sm:$0xff]
        %v846 = vld [vmem:[%s350 + $0x38] sm:$0xff]
        %v847 = vmax.f32 %v799, %v811
        %v848 = vmax.f32 %v847, %v805
        %v849 = vrot.slane %v848, 4
        %v850 = vmax.f32 %v848, %v849
        %v851 = vrot.slane %v850, 2
        %v852 = vmax.f32 %v850, %v851
        %v853 = vrot.slane %v852, 1
        %v854 = vmax.f32 %v852, %v853
        %v855 = vmax.f32 %v801, %v813
        %v856 = vmax.f32 %v855, %v807
        %v857 = vrot.slane %v856, 4
        %v858 = vmax.f32 %v856, %v857
        %v859 = vrot.slane %v858, 2
        %v860 = vmax.f32 %v858, %v859
        %v861 = vrot.slane %v860, 1
        %v862 = vmax.f32 %v860, %v861
        %v863 = vsub.f32 %v799, %v854
        %v864 = vsub.f32 %v801, %v862
        %v865 = vsub.f32 %v805, %v854
        %v866 = vsub.f32 %v807, %v862
        %v867 = vsub.f32 %v811, %v854
        %v868 = vsub.f32 %v813, %v862
        %v869 = vmul.f32 %v863, 1.442695
        %v870 = vpow.pop %v869
        %v871 = vmul.f32 %v864, 1.442695
        %v872 = vpow.pop %v871
        %v873 = vmul.f32 %v865, 1.442695
        %v874 = vpow.pop %v873
        %v875 = vmul.f32 %v866, 1.442695
        %v876 = vpow.pop %v875
        %v877 = vmul.f32 %v867, 1.442695
        %v878 = vpow.pop %v877
        %v879 = vmul.f32 %v868, 1.442695
        %v880 = vpow.pop %v879
        %v881 = vadd.f32 %v870, %v874
        %v882 = vadd.f32 %v881, %v878
        %v883 = vrot.slane %v882, 4
        %v884 = vadd.f32 %v882, %v883
        %v885 = vrot.slane %v884, 2
        %v886 = vadd.f32 %v884, %v885
        %v887 = vrot.slane %v886, 1
        %v888 = vadd.f32 %v886, %v887
        %v889 = vadd.f32 %v872, %v876
        %v890 = vadd.f32 %v889, %v880
        %v891 = vrot.slane %v890, 4
        %v892 = vadd.f32 %v890, %v891
        %v893 = vrot.slane %v892, 2
        %v894 = vadd.f32 %v892, %v893
        %v895 = vrot.slane %v894, 1
        %v896 = vadd.f32 %v894, %v895
        %v897 = vrcp.pop %v888
        %v898 = vrcp.pop %v896
        %v899 = vmul.f32 %v870, %v897
        %v900 = vmul.f32 %v872, %v898
        %v901 = vmul.f32 %v874, %v897
        %v902 = vmul.f32 %v876, %v898
        %v903 = vmul.f32 %v878, %v897
        %v904 = vmul.f32 %v880, %v898
        %v905 = vld [vmem:[%s6] sm:$0xff]
        %v906 = vld [vmem:[%s6 + $0x8] sm:$0xff]
        %v907 = vld [vmem:[%s6 + $0x10] sm:$0xff]
        %v908 = vld [vmem:[%s6 + $0x18] sm:$0xff]
        %vm909 = vcmask 195584
        %v911 = vsel %vm909, %v905, 0
        %v914 = vsel %vm909, %v906, 0
        %v917 = vsel %vm909, %v907, 0
        %v920 = vsel %vm909, %v908, 0
        %922 = vmatprep.subr.mxu0 %v900
        %923 = vmatpush1.msra.mxu0 %v899
        %924 = vmatprep.subr.mxu0 %v902
        %925 = vmatpush1.msra.mxu0 %v901
        %926 = vmatprep.subr.mxu0 %v904
        %927 = vmatpush1.msra.mxu0 %v903
        %928 = vmatprep.subr.mxu0 0.0
        %929 = vmatpush1.msra.mxu0 0.0
        %930 = vmatprep.subr.mxu0 0.0
        %931 = vmatpush1.msra.mxu0 0.0
        %932 = vmatprep.subr.mxu0 0.0
        %933 = vmatpush1.msra.mxu0 0.0
        %934 = vmatprep.subr.mxu0 0.0
        %935 = vmatpush1.msra.mxu0 0.0
        %936 = vmatprep.subr.mxu0 0.0
        %937 = vmatpush1.msra.mxu0 0.0
        %938 = vmatprep.subr.mxu0 0.0
        %939 = vmatpush1.msra.mxu0 0.0
        %940 = vmatprep.subr.mxu0 0.0
        %941 = vmatpush1.msra.mxu0 0.0
        %942 = vmatprep.subr.mxu0 0.0
        %943 = vmatpush1.msra.mxu0 0.0
        %944 = vmatprep.subr.mxu0 0.0
        %945 = vmatpush1.msra.mxu0 0.0
        %946 = vmatprep.subr.mxu0 0.0
        %947 = vmatpush1.msra.mxu0 0.0
        %948 = vmatprep.subr.mxu0 0.0
        %949 = vmatpush1.msra.mxu0 0.0
        %950 = vmatprep.subr.mxu0 0.0
        %951 = vmatpush1.msra.mxu0 0.0
        %952 = vmatprep.subr.mxu0 0.0
        %953 = vmatpush1.msra.mxu0 0.0
        %954 = vmatprep.subr.mxu0 0.0
        %955 = vmatpush1.msra.mxu0 0.0
        %956 = vmatprep.subr.mxu0 0.0
        %957 = vmatpush1.msra.mxu0 0.0
        %958 = vmatprep.subr.mxu0 0.0
        %959 = vmatpush1.msra.mxu0 0.0
        %960 = vmatprep.subr.mxu0 0.0
        %961 = vmatpush1.msra.mxu0 0.0
        %962 = vmatprep.subr.mxu0 0.0
        %963 = vmatpush1.msra.mxu0 0.0
        %964 = vmatprep.subr.mxu0 0.0
        %965 = vmatpush1.msra.mxu0 0.0
        %966 = vmatprep.subr.mxu0 0.0
        %967 = vmatpush1.msra.mxu0 0.0
        %968 = vmatprep.subr.mxu0 0.0
        %969 = vmatpush1.msra.mxu0 0.0
        %970 = vmatprep.subr.mxu0 0.0
        %971 = vmatpush1.msra.mxu0 0.0
        %972 = vmatprep.subr.mxu0 0.0
        %973 = vmatpush1.msra.mxu0 0.0
        %974 = vmatprep.subr.mxu0 0.0
        %975 = vmatpush1.msra.mxu0 0.0
        %976 = vmatprep.subr.mxu0 0.0
        %977 = vmatpush1.msra.mxu0 0.0
        %978 = vmatprep.subr.mxu0 0.0
        %979 = vmatpush1.msra.mxu0 0.0
        %980 = vmatprep.subr.mxu0 0.0
        %981 = vmatpush1.msra.mxu0 0.0
        %982 = vmatprep.subr.mxu0 0.0
        %983 = vmatpush1.msra.mxu0 0.0
        %984 = vmatprep.subr.mxu0 0.0
        %985 = vmatpush1.msra.mxu0 0.0
        %986 = vmatprep.mubr.f32.mxu0 0.0
        %987 = vmatmul.mubr.f32.gmra.mrb[0].mxu0 %v911
        %v988 = vpop.f32.mrb[0].mxu0
        %v989 = vadd.f32 0.0, %v988
        %v990 = vpop.f32.mrb[0].mxu0
        %v991 = vadd.f32 0.0, %v990
        %992 = vmatprep.mubr.f32.mxu0 0.0
        %993 = vmatmul.mubr.f32.gmra.mrb[0].mxu0 %v914
        %v994 = vpop.f32.mrb[0].mxu0
        %v995 = vadd.f32 0.0, %v994
        %v996 = vpop.f32.mrb[0].mxu0
        %v997 = vadd.f32 0.0, %v996
        %998 = vmatprep.mubr.f32.mxu0 0.0
        %999 = vmatmul.mubr.f32.gmra.mrb[0].mxu0 %v917
        %v1000 = vpop.f32.mrb[0].mxu0
        %v1001 = vadd.f32 0.0, %v1000
        %v1002 = vpop.f32.mrb[0].mxu0
        %v1003 = vadd.f32 0.0, %v1002
        %1004 = vmatprep.mubr.f32.mxu0 0.0
        %1005 = vmatmul.mubr.f32.gmra.mrb[0].mxu0 %v920
        %v1006 = vpop.f32.mrb[0].mxu0
        %v1007 = vadd.f32 0.0, %v1006
        %v1008 = vpop.f32.mrb[0].mxu0
        %v1009 = vadd.f32 0.0, %v1008
        %1010 = vdwg.mxu0
        %v1011 = vadd.f32 %v839, %v989
        %v1012 = vadd.f32 %v840, %v991
        %v1013 = vadd.f32 %v841, %v995
        %v1014 = vadd.f32 %v842, %v997
        %v1015 = vadd.f32 %v843, %v1001
        %v1016 = vadd.f32 %v844, %v1003
        %v1017 = vadd.f32 %v845, %v1007
        %v1018 = vadd.f32 %v846, %v1009
        %1019 = vst [vmem:[%s350] sm:$0xff] %v1011
        %1020 = vst [vmem:[%s350 + $0x8] sm:$0xff] %v1012
        %1021 = vst [vmem:[%s350 + $0x10] sm:$0xff] %v1013
        %1022 = vst [vmem:[%s350 + $0x18] sm:$0xff] %v1014
        %1023 = vst [vmem:[%s350 + $0x20] sm:$0xff] %v1015
        %1024 = vst [vmem:[%s350 + $0x28] sm:$0xff] %v1016
        %1025 = vst [vmem:[%s350 + $0x30] sm:$0xff] %v1017
        %1026 = vst [vmem:[%s350 + $0x38] sm:$0xff] %v1018
        %v1027 = vld [vmem:[%s4] sm:$0xff]
        %v1028 = vld [vmem:[%s4 + $0x8] sm:$0xff]
        %v1029 = vld [vmem:[%s4 + $0x10] sm:$0xff]
        %v1030 = vld [vmem:[%s4 + $0x18] sm:$0xff]
        %1032 = vset.pattern.permute.xlu0 0
        %1033 = vperm.xlu0 %1032, %v1027
        %v1034 = vpop.permute.xlu0 %1033
        %1037 = vset.pattern.permute.xlu0 0
        %1038 = vperm.xlu0 %1037, %v1028
        %v1039 = vpop.permute.xlu0 %1038
        %1042 = vset.pattern.permute.xlu0 0
        %1043 = vperm.xlu0 %1042, %v1029
        %v1044 = vpop.permute.xlu0 %1043
        %1047 = vset.pattern.permute.xlu0 0
        %1048 = vperm.xlu0 %1047, %v1030
        %v1049 = vpop.permute.xlu0 %1048
        %v1051 = vadd.f32 %v817, %v1034
        %v1052 = vadd.f32 %v819, %v1034
        %v1053 = vadd.f32 %v823, %v1039
        %v1054 = vadd.f32 %v825, %v1039
        %v1055 = vadd.f32 %v829, %v1044
        %v1056 = vadd.f32 %v831, %v1044
        %v1057 = vadd.f32 %v835, %v1049
        %v1058 = vadd.f32 %v837, %v1049
        %v1059 = vmax.f32 %v1051, 0.0
        %v1060 = vmax.f32 %v1052, 0.0
        %v1061 = vmax.f32 %v1053, 0.0
        %v1062 = vmax.f32 %v1054, 0.0
        %v1063 = vmax.f32 %v1055, 0.0
        %v1064 = vmax.f32 %v1056, 0.0
        %v1065 = vmax.f32 %v1057, 0.0
        %v1066 = vmax.f32 %v1058, 0.0
        %v1067 = vld [vmem:[%s7] sm:$0xff]
        %v1068 = vld [vmem:[%s7 + $0x8] sm:$0xff]
        %v1069 = vld [vmem:[%s7 + $0x10] sm:$0xff]
        %v1070 = vld [vmem:[%s7 + $0x18] sm:$0xff]
        %v1072 = vsel %vm376, %v1067, 0
        %v1075 = vsel %vm376, %v1068, 0
        %v1078 = vsel %vm376, %v1069, 0
        %v1081 = vsel %vm376, %v1070, 0
        %1083 = vmatprep.subr.mxu0 %v1060
        %1084 = vmatpush1.msra.mxu0 %v1059
        %1085 = vmatprep.subr.mxu0 %v1062
        %1086 = vmatpush1.msra.mxu0 %v1061
        %1087 = vmatprep.subr.mxu0 %v1064
        %1088 = vmatpush1.msra.mxu0 %v1063
        %1089 = vmatprep.subr.mxu0 %v1066
        %1090 = vmatpush1.msra.mxu0 %v1065
        %1091 = vmatprep.subr.mxu0 0.0
        %1092 = vmatpush1.msra.mxu0 0.0
        %1093 = vmatprep.subr.mxu0 0.0
        %1094 = vmatpush1.msra.mxu0 0.0
        %1095 = vmatprep.subr.mxu0 0.0
        %1096 = vmatpush1.msra.mxu0 0.0
        %1097 = vmatprep.subr.mxu0 0.0
        %1098 = vmatpush1.msra.mxu0 0.0
        %1099 = vmatprep.subr.mxu0 0.0
        %1100 = vmatpush1.msra.mxu0 0.0
        %1101 = vmatprep.subr.mxu0 0.0
        %1102 = vmatpush1.msra.mxu0 0.0
        %1103 = vmatprep.subr.mxu0 0.0
        %1104 = vmatpush1.msra.mxu0 0.0
        %1105 = vmatprep.subr.mxu0 0.0
        %1106 = vmatpush1.msra.mxu0 0.0
        %1107 = vmatprep.subr.mxu0 0.0
        %1108 = vmatpush1.msra.mxu0 0.0
        %1109 = vmatprep.subr.mxu0 0.0
        %1110 = vmatpush1.msra.mxu0 0.0
        %1111 = vmatprep.subr.mxu0 0.0
        %1112 = vmatpush1.msra.mxu0 0.0
        %1113 = vmatprep.subr.mxu0 0.0
        %1114 = vmatpush1.msra.mxu0 0.0
        %1115 = vmatprep.subr.mxu0 0.0
        %1116 = vmatpush1.msra.mxu0 0.0
        %1117 = vmatprep.subr.mxu0 0.0
        %1118 = vmatpush1.msra.mxu0 0.0
        %1119 = vmatprep.subr.mxu0 0.0
        %1120 = vmatpush1.msra.mxu0 0.0
        %1121 = vmatprep.subr.mxu0 0.0
        %1122 = vmatpush1.msra.mxu0 0.0
        %1123 = vmatprep.subr.mxu0 0.0
        %1124 = vmatpush1.msra.mxu0 0.0
        %1125 = vmatprep.subr.mxu0 0.0
        %1126 = vmatpush1.msra.mxu0 0.0
        %1127 = vmatprep.subr.mxu0 0.0
        %1128 = vmatpush1.msra.mxu0 0.0
        %1129 = vmatprep.subr.mxu0 0.0
        %1130 = vmatpush1.msra.mxu0 0.0
        %1131 = vmatprep.subr.mxu0 0.0
        %1132 = vmatpush1.msra.mxu0 0.0
        %1133 = vmatprep.subr.mxu0 0.0
        %1134 = vmatpush1.msra.mxu0 0.0
        %1135 = vmatprep.subr.mxu0 0.0
        %1136 = vmatpush1.msra.mxu0 0.0
        %1137 = vmatprep.subr.mxu0 0.0
        %1138 = vmatpush1.msra.mxu0 0.0
        %1139 = vmatprep.subr.mxu0 0.0
        %1140 = vmatpush1.msra.mxu0 0.0
        %1141 = vmatprep.subr.mxu0 0.0
        %1142 = vmatpush1.msra.mxu0 0.0
        %1143 = vmatprep.subr.mxu0 0.0
        %1144 = vmatpush1.msra.mxu0 0.0
        %1145 = vmatprep.subr.mxu0 0.0
        %1146 = vmatpush1.msra.mxu0 0.0
        %1147 = vmatprep.mubr.f32.mxu0 0.0
        %1148 = vmatmul.mubr.f32.gmra.mrb[0].mxu0 %v1072
        %v1149 = vpop.f32.mrb[0].mxu0
        %v1150 = vadd.f32 0.0, %v1149
        %v1151 = vpop.f32.mrb[0].mxu0
        %v1152 = vadd.f32 0.0, %v1151
        %1153 = vmatprep.mubr.f32.mxu0 0.0
        %1154 = vmatmul.mubr.f32.gmra.mrb[0].mxu0 %v1075
        %v1155 = vpop.f32.mrb[0].mxu0
        %v1156 = vadd.f32 0.0, %v1155
        %v1157 = vpop.f32.mrb[0].mxu0
        %v1158 = vadd.f32 0.0, %v1157
        %1159 = vmatprep.mubr.f32.mxu0 0.0
        %1160 = vmatmul.mubr.f32.gmra.mrb[0].mxu0 %v1078
        %v1161 = vpop.f32.mrb[0].mxu0
        %v1162 = vadd.f32 0.0, %v1161
        %v1163 = vpop.f32.mrb[0].mxu0
        %v1164 = vadd.f32 0.0, %v1163
        %1165 = vmatprep.mubr.f32.mxu0 0.0
        %1166 = vmatmul.mubr.f32.gmra.mrb[0].mxu0 %v1081
        %v1167 = vpop.f32.mrb[0].mxu0
        %v1168 = vadd.f32 0.0, %v1167
        %v1169 = vpop.f32.mrb[0].mxu0
        %v1170 = vadd.f32 0.0, %v1169
        %1171 = vdwg.mxu0
        %v1172 = vld [vmem:[%s350] sm:$0xff]
        %v1173 = vld [vmem:[%s350 + $0x8] sm:$0xff]
        %v1174 = vld [vmem:[%s350 + $0x10] sm:$0xff]
        %v1175 = vld [vmem:[%s350 + $0x18] sm:$0xff]
        %v1176 = vld [vmem:[%s350 + $0x20] sm:$0xff]
        %v1177 = vld [vmem:[%s350 + $0x28] sm:$0xff]
        %v1178 = vld [vmem:[%s350 + $0x30] sm:$0xff]
        %v1179 = vld [vmem:[%s350 + $0x38] sm:$0xff]
        %v1180 = vmax.f32 %v1150, %v1162
        %v1181 = vmax.f32 %v1156, %v1168
        %v1182 = vmax.f32 %v1180, %v1181
        %v1183 = vrot.slane %v1182, 4
        %v1184 = vmax.f32 %v1182, %v1183
        %v1185 = vrot.slane %v1184, 2
        %v1186 = vmax.f32 %v1184, %v1185
        %v1187 = vrot.slane %v1186, 1
        %v1188 = vmax.f32 %v1186, %v1187
        %v1189 = vmax.f32 %v1152, %v1164
        %v1190 = vmax.f32 %v1158, %v1170
        %v1191 = vmax.f32 %v1189, %v1190
        %v1192 = vrot.slane %v1191, 4
        %v1193 = vmax.f32 %v1191, %v1192
        %v1194 = vrot.slane %v1193, 2
        %v1195 = vmax.f32 %v1193, %v1194
        %v1196 = vrot.slane %v1195, 1
        %v1197 = vmax.f32 %v1195, %v1196
        %v1198 = vsub.f32 %v1150, %v1188
        %v1199 = vsub.f32 %v1152, %v1197
        %v1200 = vsub.f32 %v1156, %v1188
        %v1201 = vsub.f32 %v1158, %v1197
        %v1202 = vsub.f32 %v1162, %v1188
        %v1203 = vsub.f32 %v1164, %v1197
        %v1204 = vsub.f32 %v1168, %v1188
        %v1205 = vsub.f32 %v1170, %v1197
        %v1206 = vmul.f32 %v1198, 1.442695
        %v1207 = vpow.pop %v1206
        %v1208 = vmul.f32 %v1199, 1.442695
        %v1209 = vpow.pop %v1208
        %v1210 = vmul.f32 %v1200, 1.442695
        %v1211 = vpow.pop %v1210
        %v1212 = vmul.f32 %v1201, 1.442695
        %v1213 = vpow.pop %v1212
        %v1214 = vmul.f32 %v1202, 1.442695
        %v1215 = vpow.pop %v1214
        %v1216 = vmul.f32 %v1203, 1.442695
        %v1217 = vpow.pop %v1216
        %v1218 = vmul.f32 %v1204, 1.442695
        %v1219 = vpow.pop %v1218
        %v1220 = vmul.f32 %v1205, 1.442695
        %v1221 = vpow.pop %v1220
        %v1222 = vadd.f32 %v1207, %v1211
        %v1223 = vadd.f32 %v1222, %v1215
        %v1224 = vadd.f32 %v1223, %v1219
        %v1225 = vrot.slane %v1224, 4
        %v1226 = vadd.f32 %v1224, %v1225
        %v1227 = vrot.slane %v1226, 2
        %v1228 = vadd.f32 %v1226, %v1227
        %v1229 = vrot.slane %v1228, 1
        %v1230 = vadd.f32 %v1228, %v1229
        %v1231 = vadd.f32 %v1209, %v1213
        %v1232 = vadd.f32 %v1231, %v1217
        %v1233 = vadd.f32 %v1232, %v1221
        %v1234 = vrot.slane %v1233, 4
        %v1235 = vadd.f32 %v1233, %v1234
        %v1236 = vrot.slane %v1235, 2
        %v1237 = vadd.f32 %v1235, %v1236
        %v1238 = vrot.slane %v1237, 1
        %v1239 = vadd.f32 %v1237, %v1238
        %v1240 = vrcp.pop %v1230
        %v1241 = vrcp.pop %v1239
        %v1242 = vmul.f32 %v1207, %v1240
        %v1243 = vmul.f32 %v1209, %v1241
        %v1244 = vmul.f32 %v1211, %v1240
        %v1245 = vmul.f32 %v1213, %v1241
        %v1246 = vmul.f32 %v1215, %v1240
        %v1247 = vmul.f32 %v1217, %v1241
        %v1248 = vmul.f32 %v1219, %v1240
        %v1249 = vmul.f32 %v1221, %v1241
        %v1250 = vld [vmem:[%s8] sm:$0xff]
        %v1251 = vld [vmem:[%s8 + $0x8] sm:$0xff]
        %v1252 = vld [vmem:[%s8 + $0x10] sm:$0xff]
        %v1253 = vld [vmem:[%s8 + $0x18] sm:$0xff]
        %v1255 = vsel %vm376, %v1250, 0
        %v1258 = vsel %vm376, %v1251, 0
        %v1261 = vsel %vm376, %v1252, 0
        %v1264 = vsel %vm376, %v1253, 0
        %1266 = vmatprep.subr.mxu0 %v1243
        %1267 = vmatpush1.msra.mxu0 %v1242
        %1268 = vmatprep.subr.mxu0 %v1245
        %1269 = vmatpush1.msra.mxu0 %v1244
        %1270 = vmatprep.subr.mxu0 %v1247
        %1271 = vmatpush1.msra.mxu0 %v1246
        %1272 = vmatprep.subr.mxu0 %v1249
        %1273 = vmatpush1.msra.mxu0 %v1248
        %1274 = vmatprep.subr.mxu0 0.0
        %1275 = vmatpush1.msra.mxu0 0.0
        %1276 = vmatprep.subr.mxu0 0.0
        %1277 = vmatpush1.msra.mxu0 0.0
        %1278 = vmatprep.subr.mxu0 0.0
        %1279 = vmatpush1.msra.mxu0 0.0
        %1280 = vmatprep.subr.mxu0 0.0
        %1281 = vmatpush1.msra.mxu0 0.0
        %1282 = vmatprep.subr.mxu0 0.0
        %1283 = vmatpush1.msra.mxu0 0.0
        %1284 = vmatprep.subr.mxu0 0.0
        %1285 = vmatpush1.msra.mxu0 0.0
        %1286 = vmatprep.subr.mxu0 0.0
        %1287 = vmatpush1.msra.mxu0 0.0
        %1288 = vmatprep.subr.mxu0 0.0
        %1289 = vmatpush1.msra.mxu0 0.0
        %1290 = vmatprep.subr.mxu0 0.0
        %1291 = vmatpush1.msra.mxu0 0.0
        %1292 = vmatprep.subr.mxu0 0.0
        %1293 = vmatpush1.msra.mxu0 0.0
        %1294 = vmatprep.subr.mxu0 0.0
        %1295 = vmatpush1.msra.mxu0 0.0
        %1296 = vmatprep.subr.mxu0 0.0
        %1297 = vmatpush1.msra.mxu0 0.0
        %1298 = vmatprep.subr.mxu0 0.0
        %1299 = vmatpush1.msra.mxu0 0.0
        %1300 = vmatprep.subr.mxu0 0.0
        %1301 = vmatpush1.msra.mxu0 0.0
        %1302 = vmatprep.subr.mxu0 0.0
        %1303 = vmatpush1.msra.mxu0 0.0
        %1304 = vmatprep.subr.mxu0 0.0
        %1305 = vmatpush1.msra.mxu0 0.0
        %1306 = vmatprep.subr.mxu0 0.0
        %1307 = vmatpush1.msra.mxu0 0.0
        %1308 = vmatprep.subr.mxu0 0.0
        %1309 = vmatpush1.msra.mxu0 0.0
        %1310 = vmatprep.subr.mxu0 0.0
        %1311 = vmatpush1.msra.mxu0 0.0
        %1312 = vmatprep.subr.mxu0 0.0
        %1313 = vmatpush1.msra.mxu0 0.0
        %1314 = vmatprep.subr.mxu0 0.0
        %1315 = vmatpush1.msra.mxu0 0.0
        %1316 = vmatprep.subr.mxu0 0.0
        %1317 = vmatpush1.msra.mxu0 0.0
        %1318 = vmatprep.subr.mxu0 0.0
        %1319 = vmatpush1.msra.mxu0 0.0
        %1320 = vmatprep.subr.mxu0 0.0
        %1321 = vmatpush1.msra.mxu0 0.0
        %1322 = vmatprep.subr.mxu0 0.0
        %1323 = vmatpush1.msra.mxu0 0.0
        %1324 = vmatprep.subr.mxu0 0.0
        %1325 = vmatpush1.msra.mxu0 0.0
        %1326 = vmatprep.subr.mxu0 0.0
        %1327 = vmatpush1.msra.mxu0 0.0
        %1328 = vmatprep.subr.mxu0 0.0
        %1329 = vmatpush1.msra.mxu0 0.0
        %1330 = vmatprep.mubr.f32.mxu0 0.0
        %1331 = vmatmul.mubr.f32.gmra.mrb[0].mxu0 %v1255
        %v1332 = vpop.f32.mrb[0].mxu0
        %v1333 = vadd.f32 0.0, %v1332
        %v1334 = vpop.f32.mrb[0].mxu0
        %v1335 = vadd.f32 0.0, %v1334
        %1336 = vmatprep.mubr.f32.mxu0 0.0
        %1337 = vmatmul.mubr.f32.gmra.mrb[0].mxu0 %v1258
        %v1338 = vpop.f32.mrb[0].mxu0
        %v1339 = vadd.f32 0.0, %v1338
        %v1340 = vpop.f32.mrb[0].mxu0
        %v1341 = vadd.f32 0.0, %v1340
        %1342 = vmatprep.mubr.f32.mxu0 0.0
        %1343 = vmatmul.mubr.f32.gmra.mrb[0].mxu0 %v1261
        %v1344 = vpop.f32.mrb[0].mxu0
        %v1345 = vadd.f32 0.0, %v1344
        %v1346 = vpop.f32.mrb[0].mxu0
        %v1347 = vadd.f32 0.0, %v1346
        %1348 = vmatprep.mubr.f32.mxu0 0.0
        %1349 = vmatmul.mubr.f32.gmra.mrb[0].mxu0 %v1264
        %v1350 = vpop.f32.mrb[0].mxu0
        %v1351 = vadd.f32 0.0, %v1350
        %v1352 = vpop.f32.mrb[0].mxu0
        %v1353 = vadd.f32 0.0, %v1352
        %1354 = vdwg.mxu0
        %v1355 = vadd.f32 %v1172, %v1333
        %v1356 = vadd.f32 %v1173, %v1335
        %v1357 = vadd.f32 %v1174, %v1339
        %v1358 = vadd.f32 %v1175, %v1341
        %v1359 = vadd.f32 %v1176, %v1345
        %v1360 = vadd.f32 %v1177, %v1347
        %v1361 = vadd.f32 %v1178, %v1351
        %v1362 = vadd.f32 %v1179, %v1353
        %1363 = vst [vmem:[%s350] sm:$0xff] %v1355
        %1364 = vst [vmem:[%s350 + $0x8] sm:$0xff] %v1356
        %1365 = vst [vmem:[%s350 + $0x10] sm:$0xff] %v1357
        %1366 = vst [vmem:[%s350 + $0x18] sm:$0xff] %v1358
        %1367 = vst [vmem:[%s350 + $0x20] sm:$0xff] %v1359
        %1368 = vst [vmem:[%s350 + $0x28] sm:$0xff] %v1360
        %1369 = vst [vmem:[%s350 + $0x30] sm:$0xff] %v1361
        %1370 = vst [vmem:[%s350 + $0x38] sm:$0xff] %v1362
        %s1371 = sand.u32 %s241, 1
        %s1372 = scalar_lea.sflag [#allocation3], %s1371
        %s1373 = sand.u32 %s241, 1
        %s1374 = smul.addr %s1373, 64
        %s1375 = scalar_lea.vmem [#allocation2], %s1374
        // Predicated region
        $region57: #{tpu_custom_call.1} parent=55 // pred_check
          %p1376 = pneg %p251
        $region58: #{tpu_custom_call.1} parent=55 // pred_check_branch
          %1378 = sbr.rel (%p1376) target = $region60
        $region59: #{tpu_custom_call.1} parent=55 // pred_region
          %s1379 = smul.u32 2, %s28
          %s1381 = ssub.s32 1024, 1024
          %1382 = vsyncadd %s1372, %s1381
          %s1383 = smul.addr %s27, 8
          %s1384 = sadd.s32 %s1379, %s1383
          %s1385 = smul.addr %s1384, 128
          %s1386 = scalar_lea.hbm %s9, %s1385
          %s1387 = sshll.u32 %s1375, 4
          %s1388 = int_to_ptr.vmem [resolvable:$true] %s1387
          %1393 = dma.vmem_to_hbm [thread:$0]  %s1388, 1024, %s1386, %s1372, 256, 256, 16
        $region60: #{tpu_custom_call.1} parent=55 // pred_fallthru
          _
      $region56: #{tpu_custom_call.1} parent=5 // pred_fallthru
        _
      %p1394 = scmp.le.s32.totalorder 2, %s18
      // Predicated region
      $region61: #{tpu_custom_call.1} parent=5 // pred_check
        %p1395 = pneg %p1394
      $region62: #{tpu_custom_call.1} parent=5 // pred_check_branch
        %1397 = sbr.rel (%p1395) target = $region64
      $region63: #{tpu_custom_call.1} parent=5 // pred_region
        %s1398 = ssub.s32 %s18, 2
        // Predicated region
        $region65: #{tpu_custom_call.1} parent=63 // pred_check
          %p1399 = pneg %p257
        $region66: #{tpu_custom_call.1} parent=63 // pred_check_branch
          %1401 = sbr.rel (%p1399) target = $region68
        $region67: #{tpu_custom_call.1} parent=63 // pred_region
          %s1402 = sand.u32 %s242, 1
          %s1403 = scalar_lea.sflag [#allocation3], %s1402
          %s1404 = sand.u32 %s242, 1
          %s1405 = smul.addr %s1404, 64
          %s1406 = scalar_lea.vmem [#allocation2], %s1405
          %1407 = dma.done %s1403, 1024
        $region68: #{tpu_custom_call.1} parent=63 // pred_fallthru
          _
      $region64: #{tpu_custom_call.1} parent=5 // pred_fallthru
        _
    $region6: #{tpu_custom_call.1} parent=1 // loop_footer
      %s22 = sadd.s32 1, %s18
    $region7: #{tpu_custom_call.1} parent=1 // loop_footer_branch
      %17 = sbr.rel target = $region3
    $region8: #{tpu_custom_call.1} parent=1 // loop_exit
      _
    %1408 = vsyncpa [#allocation3], 1
    %s1409 = scalar_lea.sflag [#allocation3], 1
    %1410 = vsyncpa %s1409, 1

// kernel: tpu_custom_call.1
$region0: #{tpu_custom_call.1}
  #allocation0 [shape = 'u32[]', space=smem, size = 0x4, offset = 0x4, fixed_abs, tag = 'smem constant byte address 0x4 - core index']
  #allocation1 [shape = 'u32[144,128]{1,0:T(1,128)}', space=vmem, size = 0x12000, scoped, tag = 'internal scratch']
  %s0 = inlined_call_operand.vmem [shape: f32[2,32,256], index: 0, kind: input, shape index: {}]
  %s1 = inlined_call_operand.vmem [shape: f32[48,32], index: 1, kind: input, shape index: {}]
  %s2 = inlined_call_operand.vmem [shape: f32[32,1], index: 2, kind: input, shape index: {}]
  %s3 = inlined_call_operand.vmem [shape: f32[56,32], index: 3, kind: input, shape index: {}]
  %s4 = inlined_call_operand.vmem [shape: f32[32,1], index: 4, kind: input, shape index: {}]
  %s5 = inlined_call_operand.vmem [shape: f32[32,16], index: 5, kind: input, shape index: {}]
  %s6 = inlined_call_operand.vmem [shape: f32[32,24], index: 6, kind: input, shape index: {}]
  %s7 = inlined_call_operand.vmem [shape: f32[32,32], index: 7, kind: input, shape index: {}]
  %s8 = inlined_call_operand.vmem [shape: f32[32,32], index: 8, kind: input, shape index: {}]
  %s9 = inlined_call_operand.hbm [shape: f32[2,32,256], index: 9, kind: output, shape index: {}]
  %s10 = sld [smem:[#allocation0]]
  $region69: #{tpu_custom_call.1} parent=0
    _
  %s12 = ssub.s32 1, %s10
  %s13 = scalar_select 0, %s12, %s10
  $region1: #{tpu_custom_call.1} parent=0
    #allocation2 [shape = 'u8[65536]{0}', space=vmem, size = 0x10000, scoped, tag = 'output window, operand 0']
    #allocation3 [shape = 's32[2]{0}', space=sflag, size = 0x8, scoped, tag = 'scoped memory for tpu_custom_call.1']
    %14 = vsyncpa [#allocation3], 0
    %s15 = scalar_lea.sflag [#allocation3], 1
    %16 = vsyncpa %s15, 0
    loop: start=0, step=1, limit=4
    $region2: #{tpu_custom_call.1} parent=1 // loop_pre_header
      _
    $region3: #{tpu_custom_call.1} parent=1 // loop_header
      %s18 = sphi 0, %s22
      %p19 = scmp.ge.s32.totalorder %s18, 4
      %s25 = sphi 0, %s37
      %s26 = sphi 0, %s33
      %s27 = sphi 0, %s25
      %s28 = sphi 0, %s26
      %s29 = sphi 0, %s27
      %s30 = sphi 0, %s28
      %s42 = sphi 0, %s44
      %s45 = sphi 0, %s42
      %s46 = sphi 0, %s45
      %s62 = sphi 0, %s46
      %s66 = sphi 0, %s66
      %s68 = sphi 0, %s66
      %s69 = sphi 0, %s68
      %s83 = sphi 0, %s69
      %s87 = sphi 0, %s87
      %s89 = sphi 0, %s87
      %s90 = sphi 0, %s89
      %s104 = sphi 0, %s90
      %s108 = sphi 0, %s108
      %s110 = sphi 0, %s108
      %s111 = sphi 0, %s110
      %s125 = sphi 0, %s111
      %s129 = sphi 0, %s129
      %s131 = sphi 0, %s129
      %s132 = sphi 0, %s131
      %s146 = sphi 0, %s132
      %s150 = sphi 0, %s150
      %s152 = sphi 0, %s150
      %s153 = sphi 0, %s152
      %s167 = sphi 0, %s153
      %s171 = sphi 0, %s171
      %s173 = sphi 0, %s171
      %s174 = sphi 0, %s173
      %s188 = sphi 0, %s174
      %s192 = sphi 0, %s192
      %s194 = sphi 0, %s192
      %s195 = sphi 0, %s194
      %s209 = sphi 0, %s195
      %s213 = sphi 0, %s213
      %s215 = sphi 0, %s213
      %s216 = sphi 0, %s215
      %s230 = sphi 0, %s216
      %s238 = sphi 0, %s240
      %s241 = sphi 0, %s238
      %s242 = sphi 0, %s241
      %s258 = sphi 0, %s242
    $region4: #{tpu_custom_call.1} parent=1 // loop_header_branch
      %21 = sbr.rel (%p19) target = $region8
    $region5: #{tpu_custom_call.1} parent=1 // loop_body
      %s23 = ssub.s32 %s18, 1
      %s24 = ssub.s32 %s18, 2
      %s31 = sadd.s32 1, %s26
      %p32 = scmp.ge.s32.totalorder %s31, 1
      %s33 = scalar_select %p32, 0, %s31
      %s34 = sadd.s32 1, %s25
      %s35 = scalar_select %p32, %s34, %s25
      %p36 = scmp.ge.s32.totalorder %s35, 2
      %s37 = scalar_select %p36, 0, %s35
      %s38 = ssub.s32 %s25, %s37
      %s39 = ssub.s32 %s26, %s33
      %s40 = sor.u32 %s38, %s39
      %p41 = scmp.eq.s32.totalorder %s40, 0
      %s43 = sadd.s32 %s42, 1
      %s44 = scalar_select %p41, %s42, %s43
      %p47 = pneg %p41
      %p48 = scmp.eq.s32.totalorder %s18, 1
      %p49 = por %p47, %p48
      %p50 = scmp.ne.s32.totalorder %s42, %s45
      %p51 = scmp.eq.s32.totalorder %s18, 0
      %p52 = por %p50, %p51
      %p53 = scmp.ne.s32.totalorder %s42, %s45
      %p54 = scmp.eq.s32.totalorder %s23, 1
      %p55 = por %p53, %p54
      %p56 = scmp.ne.s32.totalorder %s45, %s46
      %p57 = scmp.eq.s32.totalorder %s23, 0
      %p58 = por %p56, %p57
      %p59 = scmp.ne.s32.totalorder %s45, %s46
      %p60 = scmp.eq.s32.totalorder %s24, 1
      %p61 = por %p59, %p60
      %p63 = scmp.ne.s32.totalorder %s46, %s62
      %p64 = scmp.eq.s32.totalorder %s24, 0
      %p65 = por %p63, %p64
      %s67 = sadd.s32 %s66, 1
      %p70 = scmp.eq.s32.totalorder %s18, 1
      %p71 = scmp.ne.s32.totalorder %s66, %s68
      %p72 = scmp.eq.s32.totalorder %s18, 0
      %p73 = por %p71, %p72
      %p74 = scmp.ne.s32.totalorder %s66, %s68
      %p75 = scmp.eq.s32.totalorder %s23, 1
      %p76 = por %p74, %p75
      %p77 = scmp.ne.s32.totalorder %s68, %s69
      %p78 = scmp.eq.s32.totalorder %s23, 0
      %p79 = por %p77, %p78
      %p80 = scmp.ne.s32.totalorder %s68, %s69
      %p81 = scmp.eq.s32.totalorder %s24, 1
      %p82 = por %p80, %p81
      %p84 = scmp.ne.s32.totalorder %s69, %s83
      %p85 = scmp.eq.s32.totalorder %s24, 0
      %p86 = por %p84, %p85
      %s88 = sadd.s32 %s87, 1
      %p91 = scmp.eq.s32.totalorder %s18, 1
      %p92 = scmp.ne.s32.totalorder %s87, %s89
      %p93 = scmp.eq.s32.totalorder %s18, 0
      %p94 = por %p92, %p93
      %p95 = scmp.ne.s32.totalorder %s87, %s89
      %p96 = scmp.eq.s32.totalorder %s23, 1
      %p97 = por %p95, %p96
      %p98 = scmp.ne.s32.totalorder %s89, %s90
      %p99 = scmp.eq.s32.totalorder %s23, 0
      %p100 = por %p98, %p99
      %p101 = scmp.ne.s32.totalorder %s89, %s90
      %p102 = scmp.eq.s32.totalorder %s24, 1
      %p103 = por %p101, %p102
      %p105 = scmp.ne.s32.totalorder %s90, %s104
      %p106 = scmp.eq.s32.totalorder %s24, 0
      %p107 = por %p105, %p106
      %s109 = sadd.s32 %s108, 1
      %p112 = scmp.eq.s32.totalorder %s18, 1
      %p113 = scmp.ne.s32.totalorder %s108, %s110
      %p114 = scmp.eq.s32.totalorder %s18, 0
      %p115 = por %p113, %p114
      %p116 = scmp.ne.s32.totalorder %s108, %s110
      %p117 = scmp.eq.s32.totalorder %s23, 1
      %p118 = por %p116, %p117
      %p119 = scmp.ne.s32.totalorder %s110, %s111
      %p120 = scmp.eq.s32.totalorder %s23, 0
      %p121 = por %p119, %p120
      %p122 = scmp.ne.s32.totalorder %s110, %s111
      %p123 = scmp.eq.s32.totalorder %s24, 1
      %p124 = por %p122, %p123
      %p126 = scmp.ne.s32.totalorder %s111, %s125
      %p127 = scmp.eq.s32.totalorder %s24, 0
      %p128 = por %p126, %p127
      %s130 = sadd.s32 %s129, 1
      %p133 = scmp.eq.s32.totalorder %s18, 1
      %p134 = scmp.ne.s32.totalorder %s129, %s131
      %p135 = scmp.eq.s32.totalorder %s18, 0
      %p136 = por %p134, %p135
      %p137 = scmp.ne.s32.totalorder %s129, %s131
      %p138 = scmp.eq.s32.totalorder %s23, 1
      %p139 = por %p137, %p138
      %p140 = scmp.ne.s32.totalorder %s131, %s132
      %p141 = scmp.eq.s32.totalorder %s23, 0
      %p142 = por %p140, %p141
      %p143 = scmp.ne.s32.totalorder %s131, %s132
      %p144 = scmp.eq.s32.totalorder %s24, 1
      %p145 = por %p143, %p144
      %p147 = scmp.ne.s32.totalorder %s132, %s146
      %p148 = scmp.eq.s32.totalorder %s24, 0
      %p149 = por %p147, %p148
      %s151 = sadd.s32 %s150, 1
      %p154 = scmp.eq.s32.totalorder %s18, 1
      %p155 = scmp.ne.s32.totalorder %s150, %s152
      %p156 = scmp.eq.s32.totalorder %s18, 0
      %p157 = por %p155, %p156
      %p158 = scmp.ne.s32.totalorder %s150, %s152
      %p159 = scmp.eq.s32.totalorder %s23, 1
      %p160 = por %p158, %p159
      %p161 = scmp.ne.s32.totalorder %s152, %s153
      %p162 = scmp.eq.s32.totalorder %s23, 0
      %p163 = por %p161, %p162
      %p164 = scmp.ne.s32.totalorder %s152, %s153
      %p165 = scmp.eq.s32.totalorder %s24, 1
      %p166 = por %p164, %p165
      %p168 = scmp.ne.s32.totalorder %s153, %s167
      %p169 = scmp.eq.s32.totalorder %s24, 0
      %p170 = por %p168, %p169
      %s172 = sadd.s32 %s171, 1
      %p175 = scmp.eq.s32.totalorder %s18, 1
      %p176 = scmp.ne.s32.totalorder %s171, %s173
      %p177 = scmp.eq.s32.totalorder %s18, 0
      %p178 = por %p176, %p177
      %p179 = scmp.ne.s32.totalorder %s171, %s173
      %p180 = scmp.eq.s32.totalorder %s23, 1
      %p181 = por %p179, %p180
      %p182 = scmp.ne.s32.totalorder %s173, %s174
      %p183 = scmp.eq.s32.totalorder %s23, 0
      %p184 = por %p182, %p183
      %p185 = scmp.ne.s32.totalorder %s173, %s174
      %p186 = scmp.eq.s32.totalorder %s24, 1
      %p187 = por %p185, %p186
      %p189 = scmp.ne.s32.totalorder %s174, %s188
      %p190 = scmp.eq.s32.totalorder %s24, 0
      %p191 = por %p189, %p190
      %s193 = sadd.s32 %s192, 1
      %p196 = scmp.eq.s32.totalorder %s18, 1
      %p197 = scmp.ne.s32.totalorder %s192, %s194
      %p198 = scmp.eq.s32.totalorder %s18, 0
      %p199 = por %p197, %p198
      %p200 = scmp.ne.s32.totalorder %s192, %s194
      %p201 = scmp.eq.s32.totalorder %s23, 1
      %p202 = por %p200, %p201
      %p203 = scmp.ne.s32.totalorder %s194, %s195
      %p204 = scmp.eq.s32.totalorder %s23, 0
      %p205 = por %p203, %p204
      %p206 = scmp.ne.s32.totalorder %s194, %s195
      %p207 = scmp.eq.s32.totalorder %s24, 1
      %p208 = por %p206, %p207
      %p210 = scmp.ne.s32.totalorder %s195, %s209
      %p211 = scmp.eq.s32.totalorder %s24, 0
      %p212 = por %p210, %p211
      %s214 = sadd.s32 %s213, 1
      %p217 = scmp.eq.s32.totalorder %s18, 1
      %p218 = scmp.ne.s32.totalorder %s213, %s215
      %p219 = scmp.eq.s32.totalorder %s18, 0
      %p220 = por %p218, %p219
      %p221 = scmp.ne.s32.totalorder %s213, %s215
      %p222 = scmp.eq.s32.totalorder %s23, 1
      %p223 = por %p221, %p222
      %p224 = scmp.ne.s32.totalorder %s215, %s216
      %p225 = scmp.eq.s32.totalorder %s23, 0
      %p226 = por %p224, %p225
      %p227 = scmp.ne.s32.totalorder %s215, %s216
      %p228 = scmp.eq.s32.totalorder %s24, 1
      %p229 = por %p227, %p228
      %p231 = scmp.ne.s32.totalorder %s216, %s230
      %p232 = scmp.eq.s32.totalorder %s24, 0
      %p233 = por %p231, %p232
      %s234 = ssub.s32 %s25, %s37
      %s235 = ssub.s32 %s26, %s33
      %s236 = sor.u32 %s234, %s235
      %p237 = scmp.eq.s32.totalorder %s236, 0
      %s239 = sadd.s32 %s238, 1
      %s240 = scalar_select %p237, %s238, %s239
      %p243 = pneg %p237
      %p244 = scmp.eq.s32.totalorder %s18, 1
      %p245 = por %p243, %p244
      %p246 = scmp.ne.s32.totalorder %s238, %s241
      %p247 = scmp.eq.s32.totalorder %s18, 0
      %p248 = por %p246, %p247
      %p249 = scmp.ne.s32.totalorder %s238, %s241
      %p250 = scmp.eq.s32.totalorder %s23, 1
      %p251 = por %p249, %p250
      %p252 = scmp.ne.s32.totalorder %s241, %s242
      %p253 = scmp.eq.s32.totalorder %s23, 0
      %p254 = por %p252, %p253
      %p255 = scmp.ne.s32.totalorder %s241, %s242
      %p256 = scmp.eq.s32.totalorder %s24, 1
      %p257 = por %p255, %p256
      %p259 = scmp.ne.s32.totalorder %s242, %s258
      %p260 = scmp.eq.s32.totalorder %s24, 0
      %p261 = por %p259, %p260
      %p262 = scmp.le.s32.totalorder 1, %s18
      %p263 = scmp.lt.s32.totalorder %s18, 3
      %p264 = pnand %p262, %p263
      %p265 = pneg %p264
      // Predicated region
      $region9: #{tpu_custom_call.1} parent=5 // pred_check
        _
      $region10: #{tpu_custom_call.1} parent=5 // pred_check_branch
        %267 = sbr.rel (%p264) target = $region12
      $region11: #{tpu_custom_call.1} parent=5 // pred_region
        %s268 = ssub.s32 %s18, 1
        // Predicated region
        $region13: #{tpu_custom_call.1} parent=11 // pred_check
          %p269 = pneg %p79
        $region14: #{tpu_custom_call.1} parent=11 // pred_check_branch
          %271 = sbr.rel (%p269) target = $region16
        $region15: #{tpu_custom_call.1} parent=11 // pred_region
          _
        $region16: #{tpu_custom_call.1} parent=11 // pred_fallthru
          _
        // Predicated region
        $region17: #{tpu_custom_call.1} parent=11 // pred_check
          %p272 = pneg %p100
        $region18: #{tpu_custom_call.1} parent=11 // pred_check_branch
          %274 = sbr.rel (%p272) target = $region20
        $region19: #{tpu_custom_call.1} parent=11 // pred_region
          _
        $region20: #{tpu_custom_call.1} parent=11 // pred_fallthru
          _
        // Predicated region
        $region21: #{tpu_custom_call.1} parent=11 // pred_check
          %p275 = pneg %p121
        $region22: #{tpu_custom_call.1} parent=11 // pred_check_branch
          %277 = sbr.rel (%p275) target = $region24
        $region23: #{tpu_custom_call.1} parent=11 // pred_region
          _
        $region24: #{tpu_custom_call.1} parent=11 // pred_fallthru
          _
        // Predicated region
        $region25: #{tpu_custom_call.1} parent=11 // pred_check
          %p278 = pneg %p142
        $region26: #{tpu_custom_call.1} parent=11 // pred_check_branch
          %280 = sbr.rel (%p278) target = $region28
        $region27: #{tpu_custom_call.1} parent=11 // pred_region
          _
        $region28: #{tpu_custom_call.1} parent=11 // pred_fallthru
          _
        // Predicated region
        $region29: #{tpu_custom_call.1} parent=11 // pred_check
          %p281 = pneg %p163
        $region30: #{tpu_custom_call.1} parent=11 // pred_check_branch
          %283 = sbr.rel (%p281) target = $region32
        $region31: #{tpu_custom_call.1} parent=11 // pred_region
          _
        $region32: #{tpu_custom_call.1} parent=11 // pred_fallthru
          _
        // Predicated region
        $region33: #{tpu_custom_call.1} parent=11 // pred_check
          %p284 = pneg %p184
        $region34: #{tpu_custom_call.1} parent=11 // pred_check_branch
          %286 = sbr.rel (%p284) target = $region36
        $region35: #{tpu_custom_call.1} parent=11 // pred_region
          _
        $region36: #{tpu_custom_call.1} parent=11 // pred_fallthru
          _
        // Predicated region
        $region37: #{tpu_custom_call.1} parent=11 // pred_check
          %p287 = pneg %p205
        $region38: #{tpu_custom_call.1} parent=11 // pred_check_branch
          %289 = sbr.rel (%p287) target = $region40
        $region39: #{tpu_custom_call.1} parent=11 // pred_region
          _
        $region40: #{tpu_custom_call.1} parent=11 // pred_fallthru
          _
        // Predicated region
        $region41: #{tpu_custom_call.1} parent=11 // pred_check
          %p290 = pneg %p226
        $region42: #{tpu_custom_call.1} parent=11 // pred_check_branch
          %292 = sbr.rel (%p290) target = $region44
        $region43: #{tpu_custom_call.1} parent=11 // pred_region
          _
        $region44: #{tpu_custom_call.1} parent=11 // pred_fallthru
          _
      $region12: #{tpu_custom_call.1} parent=5 // pred_fallthru
        _
      %p293 = scmp.lt.s32.totalorder %s18, 2
      // Predicated region
      $region45: #{tpu_custom_call.1} parent=5 // pred_check
        %p294 = pneg %p293
      $region46: #{tpu_custom_call.1} parent=5 // pred_check_branch
        %296 = sbr.rel (%p294) target = $region48
      $region47: #{tpu_custom_call.1} parent=5 // pred_region
        // Predicated region
        $region49: #{tpu_custom_call.1} parent=47 // pred_check
          %p297 = pneg %p52
        $region50: #{tpu_custom_call.1} parent=47 // pred_check_branch
          %299 = sbr.rel (%p297) target = $region52
        $region51: #{tpu_custom_call.1} parent=47 // pred_region
          %s300 = smul.u32 2, %s26
          %p301 = scmp.lt.s32.totalorder %s25, 1
          %s302 = scalar_select %p301, %s25, 1
          %p303 = scmp.lt.s32.totalorder %s300, 1
          %s304 = scalar_select %p303, %s300, 1
          %s305 = smul.addr %s302, 8
          %s306 = sadd.s32 %s304, %s305
          %s307 = smul.addr %s306, 8
          %s308 = scalar_lea.vmem %s0, %s307
          %s309 = smul.u32 2, %s26
        $region52: #{tpu_custom_call.1} parent=47 // pred_fallthru
          _
      $region48: #{tpu_custom_call.1} parent=5 // pred_fallthru
        _
      %p310 = scmp.le.s32.totalorder 1, %s18
      %p311 = scmp.lt.s32.totalorder %s18, 3
      %p312 = pnand %p310, %p311
      %p313 = pneg %p312
      // Predicated region
      $region53: #{tpu_custom_call.1} parent=5 // pred_check
        _
      $region54: #{tpu_custom_call.1} parent=5 // pred_check_branch
        %315 = sbr.rel (%p312) target = $region56
      $region55: #{tpu_custom_call.1} parent=5 // pred_region
        %s316 = ssub.s32 %s18, 1
        %s317 = smul.u32 2, %s28
        %p318 = scmp.lt.s32.totalorder %s27, 1
        %s319 = scalar_select %p318, %s27, 1
        %p320 = scmp.lt.s32.totalorder %s317, 1
        %s321 = scalar_select %p320, %s317, 1
        %s322 = smul.addr %s319, 8
        %s323 = sadd.s32 %s321, %s322
        %s324 = smul.addr %s323, 8
        %s325 = scalar_lea.vmem %s0, %s324
        %p326 = pneg %p58
        %p327 = pneg %p55
        %p328 = pneg %p79
        %p329 = pneg %p76
        %p330 = pneg %p100
        %p331 = pneg %p97
        %p332 = pneg %p121
        %p333 = pneg %p118
        %p334 = pneg %p142
        %p335 = pneg %p139
        %p336 = pneg %p163
        %p337 = pneg %p160
        %p338 = pneg %p184
        %p339 = pneg %p181
        %p340 = pneg %p205
        %p341 = pneg %p202
        %p342 = pneg %p226
        %p343 = pneg %p223
        %p344 = pneg %p254
        %p345 = pneg %p251
        %s346 = sand.u32 %s241, 1
        %s347 = scalar_lea.sflag [#allocation3], %s346
        %s348 = sand.u32 %s241, 1
        %s349 = smul.addr %s348, 64
        %s350 = scalar_lea.vmem [#allocation2], %s349
        %s351 = smul.u32 2, %s28
        %p352 = scmp.lt.s32.totalorder %s27, 1
        %s353 = scalar_select %p352, %s27, 1
        %p354 = scmp.lt.s32.totalorder %s351, 1
        %s355 = scalar_select %p354, %s351, 1
        %s356 = smul.addr %s353, 8
        %s357 = sadd.s32 %s355, %s356
        %s358 = smul.addr %s357, 8
        %s359 = scalar_lea.vmem %s0, %s358
        %s360 = smul.u32 2, %s28
        %s361 = smul.u32 2, %s28
        %v362 = vld [vmem:[%s359] sm:$0xff]
        %v363 = vld [vmem:[%s359 + $0x8] sm:$0xff]
        %v364 = vld [vmem:[%s359 + $0x10] sm:$0xff]
        %v365 = vld [vmem:[%s359 + $0x18] sm:$0xff]
        %v366 = vld [vmem:[%s359 + $0x20] sm:$0xff]
        %v367 = vld [vmem:[%s359 + $0x28] sm:$0xff]
        %v368 = vld [vmem:[%s359 + $0x30] sm:$0xff]
        %v369 = vld [vmem:[%s359 + $0x38] sm:$0xff]
        %v370 = vld [vmem:[%s1] sm:$0xff]
        %v371 = vld [vmem:[%s1 + $0x8] sm:$0xff]
        %v372 = vld [vmem:[%s1 + $0x10] sm:$0xff]
        %v373 = vld [vmem:[%s1 + $0x18] sm:$0xff]
        %v374 = vld [vmem:[%s1 + $0x20] sm:$0xff]
        %v375 = vld [vmem:[%s1 + $0x28] sm:$0xff]
        %vm376 = vcmask 261120
        %v378 = vsel %vm376, %v370, 0
        %v381 = vsel %vm376, %v371, 0
        %v384 = vsel %vm376, %v372, 0
        %v387 = vsel %vm376, %v373, 0
        %v390 = vsel %vm376, %v374, 0
        %v393 = vsel %vm376, %v375, 0
        %395 = vmatprep.subr.mxu0 %v363
        %396 = vmatpush1.msra.mxu0 %v362
        %397 = vmatprep.subr.mxu0 %v365
        %398 = vmatpush1.msra.mxu0 %v364
        %399 = vmatprep.subr.mxu0 %v367
        %400 = vmatpush1.msra.mxu0 %v366
        %401 = vmatprep.subr.mxu0 %v369
        %402 = vmatpush1.msra.mxu0 %v368
        %403 = vmatprep.subr.mxu0 0.0
        %404 = vmatpush1.msra.mxu0 0.0
        %405 = vmatprep.subr.mxu0 0.0
        %406 = vmatpush1.msra.mxu0 0.0
        %407 = vmatprep.subr.mxu0 0.0
        %408 = vmatpush1.msra.mxu0 0.0
        %409 = vmatprep.subr.mxu0 0.0
        %410 = vmatpush1.msra.mxu0 0.0
        %411 = vmatprep.subr.mxu0 0.0
        %412 = vmatpush1.msra.mxu0 0.0
        %413 = vmatprep.subr.mxu0 0.0
        %414 = vmatpush1.msra.mxu0 0.0
        %415 = vmatprep.subr.mxu0 0.0
        %416 = vmatpush1.msra.mxu0 0.0
        %417 = vmatprep.subr.mxu0 0.0
        %418 = vmatpush1.msra.mxu0 0.0
        %419 = vmatprep.subr.mxu0 0.0
        %420 = vmatpush1.msra.mxu0 0.0
        %421 = vmatprep.subr.mxu0 0.0
        %422 = vmatpush1.msra.mxu0 0.0
        %423 = vmatprep.subr.mxu0 0.0
        %424 = vmatpush1.msra.mxu0 0.0
        %425 = vmatprep.subr.mxu0 0.0
        %426 = vmatpush1.msra.mxu0 0.0
        %427 = vmatprep.subr.mxu0 0.0
        %428 = vmatpush1.msra.mxu0 0.0
        %429 = vmatprep.subr.mxu0 0.0
        %430 = vmatpush1.msra.mxu0 0.0
        %431 = vmatprep.subr.mxu0 0.0
        %432 = vmatpush1.msra.mxu0 0.0
        %433 = vmatprep.subr.mxu0 0.0
        %434 = vmatpush1.msra.mxu0 0.0
        %435 = vmatprep.subr.mxu0 0.0
        %436 = vmatpush1.msra.mxu0 0.0
        %437 = vmatprep.subr.mxu0 0.0
        %438 = vmatpush1.msra.mxu0 0.0
        %439 = vmatprep.subr.mxu0 0.0
        %440 = vmatpush1.msra.mxu0 0.0
        %441 = vmatprep.subr.mxu0 0.0
        %442 = vmatpush1.msra.mxu0 0.0
        %443 = vmatprep.subr.mxu0 0.0
        %444 = vmatpush1.msra.mxu0 0.0
        %445 = vmatprep.subr.mxu0 0.0
        %446 = vmatpush1.msra.mxu0 0.0
        %447 = vmatprep.subr.mxu0 0.0
        %448 = vmatpush1.msra.mxu0 0.0
        %449 = vmatprep.subr.mxu0 0.0
        %450 = vmatpush1.msra.mxu0 0.0
        %451 = vmatprep.subr.mxu0 0.0
        %452 = vmatpush1.msra.mxu0 0.0
        %453 = vmatprep.subr.mxu0 0.0
        %454 = vmatpush1.msra.mxu0 0.0
        %455 = vmatprep.subr.mxu0 0.0
        %456 = vmatpush1.msra.mxu0 0.0
        %457 = vmatprep.subr.mxu0 0.0
        %458 = vmatpush1.msra.mxu0 0.0
        %459 = vmatprep.mubr.f32.mxu0 0.0
        %460 = vmatmul.mubr.f32.gmra.mrb[0].mxu0 %v378
        %v461 = vpop.f32.mrb[0].mxu0
        %v462 = vadd.f32 0.0, %v461
        %v463 = vpop.f32.mrb[0].mxu0
        %v464 = vadd.f32 0.0, %v463
        %465 = vmatprep.mubr.f32.mxu0 0.0
        %466 = vmatmul.mubr.f32.gmra.mrb[0].mxu0 %v381
        %v467 = vpop.f32.mrb[0].mxu0
        %v468 = vadd.f32 0.0, %v467
        %v469 = vpop.f32.mrb[0].mxu0
        %v470 = vadd.f32 0.0, %v469
        %471 = vmatprep.mubr.f32.mxu0 0.0
        %472 = vmatmul.mubr.f32.gmra.mrb[0].mxu0 %v384
        %v473 = vpop.f32.mrb[0].mxu0
        %v474 = vadd.f32 0.0, %v473
        %v475 = vpop.f32.mrb[0].mxu0
        %v476 = vadd.f32 0.0, %v475
        %477 = vmatprep.mubr.f32.mxu0 0.0
        %478 = vmatmul.mubr.f32.gmra.mrb[0].mxu0 %v387
        %v479 = vpop.f32.mrb[0].mxu0
        %v480 = vadd.f32 0.0, %v479
        %v481 = vpop.f32.mrb[0].mxu0
        %v482 = vadd.f32 0.0, %v481
        %483 = vmatprep.mubr.f32.mxu0 0.0
        %484 = vmatmul.mubr.f32.gmra.mrb[0].mxu0 %v390
        %v485 = vpop.f32.mrb[0].mxu0
        %v486 = vadd.f32 0.0, %v485
        %v487 = vpop.f32.mrb[0].mxu0
        %v488 = vadd.f32 0.0, %v487
        %489 = vmatprep.mubr.f32.mxu0 0.0
        %490 = vmatmul.mubr.f32.gmra.mrb[0].mxu0 %v393
        %v491 = vpop.f32.mrb[0].mxu0
        %v492 = vadd.f32 0.0, %v491
        %v493 = vpop.f32.mrb[0].mxu0
        %v494 = vadd.f32 0.0, %v493
        %495 = vdwg.mxu0
        %v496 = vmax.f32 %v462, %v468
        %v497 = vrot.slane %v496, 4
        %v498 = vmax.f32 %v496, %v497
        %v499 = vrot.slane %v498, 2
        %v500 = vmax.f32 %v498, %v499
        %v501 = vrot.slane %v500, 1
        %v502 = vmax.f32 %v500, %v501
        %v503 = vmax.f32 %v464, %v470
        %v504 = vrot.slane %v503, 4
        %v505 = vmax.f32 %v503, %v504
        %v506 = vrot.slane %v505, 2
        %v507 = vmax.f32 %v505, %v506
        %v508 = vrot.slane %v507, 1
        %v509 = vmax.f32 %v507, %v508
        %v510 = vsub.f32 %v462, %v502
        %v511 = vsub.f32 %v464, %v509
        %v512 = vsub.f32 %v468, %v502
        %v513 = vsub.f32 %v470, %v509
        %v514 = vmul.f32 %v510, 1.442695
        %v515 = vpow.pop %v514
        %v516 = vmul.f32 %v511, 1.442695
        %v517 = vpow.pop %v516
        %v518 = vmul.f32 %v512, 1.442695
        %v519 = vpow.pop %v518
        %v520 = vmul.f32 %v513, 1.442695
        %v521 = vpow.pop %v520
        %v522 = vadd.f32 %v515, %v519
        %v523 = vrot.slane %v522, 4
        %v524 = vadd.f32 %v522, %v523
        %v525 = vrot.slane %v524, 2
        %v526 = vadd.f32 %v524, %v525
        %v527 = vrot.slane %v526, 1
        %v528 = vadd.f32 %v526, %v527
        %v529 = vadd.f32 %v517, %v521
        %v530 = vrot.slane %v529, 4
        %v531 = vadd.f32 %v529, %v530
        %v532 = vrot.slane %v531, 2
        %v533 = vadd.f32 %v531, %v532
        %v534 = vrot.slane %v533, 1
        %v535 = vadd.f32 %v533, %v534
        %v536 = vrcp.pop %v528
        %v537 = vrcp.pop %v535
        %v538 = vmul.f32 %v515, %v536
        %v539 = vmul.f32 %v517, %v537
        %v540 = vmul.f32 %v519, %v536
        %v541 = vmul.f32 %v521, %v537
        %v542 = vld [vmem:[%s5] sm:$0xff]
        %v543 = vld [vmem:[%s5 + $0x8] sm:$0xff]
        %v544 = vld [vmem:[%s5 + $0x10] sm:$0xff]
        %v545 = vld [vmem:[%s5 + $0x18] sm:$0xff]
        %vm546 = vcmask 130048
        %v548 = vsel %vm546, %v542, 0
        %v551 = vsel %vm546, %v543, 0
        %v554 = vsel %vm546, %v544, 0
        %v557 = vsel %vm546, %v545, 0
        %559 = vmatprep.subr.mxu0 %v539
        %560 = vmatpush1.msra.mxu0 %v538
        %561 = vmatprep.subr.mxu0 %v541
        %562 = vmatpush1.msra.mxu0 %v540
        %563 = vmatprep.subr.mxu0 0.0
        %564 = vmatpush1.msra.mxu0 0.0
        %565 = vmatprep.subr.mxu0 0.0
        %566 = vmatpush1.msra.mxu0 0.0
        %567 = vmatprep.subr.mxu0 0.0
        %568 = vmatpush1.msra.mxu0 0.0
        %569 = vmatprep.subr.mxu0 0.0
        %570 = vmatpush1.msra.mxu0 0.0
        %571 = vmatprep.subr.mxu0 0.0
        %572 = vmatpush1.msra.mxu0 0.0
        %573 = vmatprep.subr.mxu0 0.0
        %574 = vmatpush1.msra.mxu0 0.0
        %575 = vmatprep.subr.mxu0 0.0
        %576 = vmatpush1.msra.mxu0 0.0
        %577 = vmatprep.subr.mxu0 0.0
        %578 = vmatpush1.msra.mxu0 0.0
        %579 = vmatprep.subr.mxu0 0.0
        %580 = vmatpush1.msra.mxu0 0.0
        %581 = vmatprep.subr.mxu0 0.0
        %582 = vmatpush1.msra.mxu0 0.0
        %583 = vmatprep.subr.mxu0 0.0
        %584 = vmatpush1.msra.mxu0 0.0
        %585 = vmatprep.subr.mxu0 0.0
        %586 = vmatpush1.msra.mxu0 0.0
        %587 = vmatprep.subr.mxu0 0.0
        %588 = vmatpush1.msra.mxu0 0.0
        %589 = vmatprep.subr.mxu0 0.0
        %590 = vmatpush1.msra.mxu0 0.0
        %591 = vmatprep.subr.mxu0 0.0
        %592 = vmatpush1.msra.mxu0 0.0
        %593 = vmatprep.subr.mxu0 0.0
        %594 = vmatpush1.msra.mxu0 0.0
        %595 = vmatprep.subr.mxu0 0.0
        %596 = vmatpush1.msra.mxu0 0.0
        %597 = vmatprep.subr.mxu0 0.0
        %598 = vmatpush1.msra.mxu0 0.0
        %599 = vmatprep.subr.mxu0 0.0
        %600 = vmatpush1.msra.mxu0 0.0
        %601 = vmatprep.subr.mxu0 0.0
        %602 = vmatpush1.msra.mxu0 0.0
        %603 = vmatprep.subr.mxu0 0.0
        %604 = vmatpush1.msra.mxu0 0.0
        %605 = vmatprep.subr.mxu0 0.0
        %606 = vmatpush1.msra.mxu0 0.0
        %607 = vmatprep.subr.mxu0 0.0
        %608 = vmatpush1.msra.mxu0 0.0
        %609 = vmatprep.subr.mxu0 0.0
        %610 = vmatpush1.msra.mxu0 0.0
        %611 = vmatprep.subr.mxu0 0.0
        %612 = vmatpush1.msra.mxu0 0.0
        %613 = vmatprep.subr.mxu0 0.0
        %614 = vmatpush1.msra.mxu0 0.0
        %615 = vmatprep.subr.mxu0 0.0
        %616 = vmatpush1.msra.mxu0 0.0
        %617 = vmatprep.subr.mxu0 0.0
        %618 = vmatpush1.msra.mxu0 0.0
        %619 = vmatprep.subr.mxu0 0.0
        %620 = vmatpush1.msra.mxu0 0.0
        %621 = vmatprep.subr.mxu0 0.0
        %622 = vmatpush1.msra.mxu0 0.0
        %623 = vmatprep.mubr.f32.mxu0 0.0
        %624 = vmatmul.mubr.f32.gmra.mrb[0].mxu0 %v548
        %v625 = vpop.f32.mrb[0].mxu0
        %v626 = vadd.f32 0.0, %v625
        %v627 = vpop.f32.mrb[0].mxu0
        %v628 = vadd.f32 0.0, %v627
        %629 = vmatprep.mubr.f32.mxu0 0.0
        %630 = vmatmul.mubr.f32.gmra.mrb[0].mxu0 %v551
        %v631 = vpop.f32.mrb[0].mxu0
        %v632 = vadd.f32 0.0, %v631
        %v633 = vpop.f32.mrb[0].mxu0
        %v634 = vadd.f32 0.0, %v633
        %635 = vmatprep.mubr.f32.mxu0 0.0
        %636 = vmatmul.mubr.f32.gmra.mrb[0].mxu0 %v554
        %v637 = vpop.f32.mrb[0].mxu0
        %v638 = vadd.f32 0.0, %v637
        %v639 = vpop.f32.mrb[0].mxu0
        %v640 = vadd.f32 0.0, %v639
        %641 = vmatprep.mubr.f32.mxu0 0.0
        %642 = vmatmul.mubr.f32.gmra.mrb[0].mxu0 %v557
        %v643 = vpop.f32.mrb[0].mxu0
        %v644 = vadd.f32 0.0, %v643
        %v645 = vpop.f32.mrb[0].mxu0
        %v646 = vadd.f32 0.0, %v645
        %647 = vdwg.mxu0
        %v648 = vadd.f32 %v362, %v626
        %v649 = vadd.f32 %v363, %v628
        %v650 = vadd.f32 %v364, %v632
        %v651 = vadd.f32 %v365, %v634
        %v652 = vadd.f32 %v366, %v638
        %v653 = vadd.f32 %v367, %v640
        %v654 = vadd.f32 %v368, %v644
        %v655 = vadd.f32 %v369, %v646
        %656 = vst [vmem:[%s350] sm:$0xff] %v648
        %657 = vst [vmem:[%s350 + $0x8] sm:$0xff] %v649
        %658 = vst [vmem:[%s350 + $0x10] sm:$0xff] %v650
        %659 = vst [vmem:[%s350 + $0x18] sm:$0xff] %v651
        %660 = vst [vmem:[%s350 + $0x20] sm:$0xff] %v652
        %661 = vst [vmem:[%s350 + $0x28] sm:$0xff] %v653
        %662 = vst [vmem:[%s350 + $0x30] sm:$0xff] %v654
        %663 = vst [vmem:[%s350 + $0x38] sm:$0xff] %v655
        %v664 = vld [vmem:[%s2] sm:$0xff]
        %v665 = vld [vmem:[%s2 + $0x8] sm:$0xff]
        %v666 = vld [vmem:[%s2 + $0x10] sm:$0xff]
        %v667 = vld [vmem:[%s2 + $0x18] sm:$0xff]
        %669 = vset.pattern.permute.xlu0 0
        %670 = vperm.xlu0 %669, %v664
        %v671 = vpop.permute.xlu0 %670
        %674 = vset.pattern.permute.xlu0 0
        %675 = vperm.xlu0 %674, %v665
        %v676 = vpop.permute.xlu0 %675
        %679 = vset.pattern.permute.xlu0 0
        %680 = vperm.xlu0 %679, %v666
        %v681 = vpop.permute.xlu0 %680
        %684 = vset.pattern.permute.xlu0 0
        %685 = vperm.xlu0 %684, %v667
        %v686 = vpop.permute.xlu0 %685
        %v688 = vadd.f32 %v474, %v671
        %v689 = vadd.f32 %v476, %v671
        %v690 = vadd.f32 %v480, %v676
        %v691 = vadd.f32 %v482, %v676
        %v692 = vadd.f32 %v486, %v681
        %v693 = vadd.f32 %v488, %v681
        %v694 = vadd.f32 %v492, %v686
        %v695 = vadd.f32 %v494, %v686
        %v696 = vmax.f32 %v688, 0.0
        %v697 = vmax.f32 %v689, 0.0
        %v698 = vmax.f32 %v690, 0.0
        %v699 = vmax.f32 %v691, 0.0
        %v700 = vmax.f32 %v692, 0.0
        %v701 = vmax.f32 %v693, 0.0
        %v702 = vmax.f32 %v694, 0.0
        %v703 = vmax.f32 %v695, 0.0
        %v704 = vld [vmem:[%s3] sm:$0xff]
        %v705 = vld [vmem:[%s3 + $0x8] sm:$0xff]
        %v706 = vld [vmem:[%s3 + $0x10] sm:$0xff]
        %v707 = vld [vmem:[%s3 + $0x18] sm:$0xff]
        %v708 = vld [vmem:[%s3 + $0x20] sm:$0xff]
        %v709 = vld [vmem:[%s3 + $0x28] sm:$0xff]
        %v710 = vld [vmem:[%s3 + $0x30] sm:$0xff]
        %v712 = vsel %vm376, %v704, 0
        %v715 = vsel %vm376, %v705, 0
        %v718 = vsel %vm376, %v706, 0
        %v721 = vsel %vm376, %v707, 0
        %v724 = vsel %vm376, %v708, 0
        %v727 = vsel %vm376, %v709, 0
        %v730 = vsel %vm376, %v710, 0
        %732 = vmatprep.subr.mxu0 %v697
        %733 = vmatpush1.msra.mxu0 %v696
        %734 = vmatprep.subr.mxu0 %v699
        %735 = vmatpush1.msra.mxu0 %v698
        %736 = vmatprep.subr.mxu0 %v701
        %737 = vmatpush1.msra.mxu0 %v700
        %738 = vmatprep.subr.mxu0 %v703
        %739 = vmatpush1.msra.mxu0 %v702
        %740 = vmatprep.subr.mxu0 0.0
        %741 = vmatpush1.msra.mxu0 0.0
        %742 = vmatprep.subr.mxu0 0.0
        %743 = vmatpush1.msra.mxu0 0.0
        %744 = vmatprep.subr.mxu0 0.0
        %745 = vmatpush1.msra.mxu0 0.0
        %746 = vmatprep.subr.mxu0 0.0
        %747 = vmatpush1.msra.mxu0 0.0
        %748 = vmatprep.subr.mxu0 0.0
        %749 = vmatpush1.msra.mxu0 0.0
        %750 = vmatprep.subr.mxu0 0.0
        %751 = vmatpush1.msra.mxu0 0.0
        %752 = vmatprep.subr.mxu0 0.0
        %753 = vmatpush1.msra.mxu0 0.0
        %754 = vmatprep.subr.mxu0 0.0
        %755 = vmatpush1.msra.mxu0 0.0
        %756 = vmatprep.subr.mxu0 0.0
        %757 = vmatpush1.msra.mxu0 0.0
        %758 = vmatprep.subr.mxu0 0.0
        %759 = vmatpush1.msra.mxu0 0.0
        %760 = vmatprep.subr.mxu0 0.0
        %761 = vmatpush1.msra.mxu0 0.0
        %762 = vmatprep.subr.mxu0 0.0
        %763 = vmatpush1.msra.mxu0 0.0
        %764 = vmatprep.subr.mxu0 0.0
        %765 = vmatpush1.msra.mxu0 0.0
        %766 = vmatprep.subr.mxu0 0.0
        %767 = vmatpush1.msra.mxu0 0.0
        %768 = vmatprep.subr.mxu0 0.0
        %769 = vmatpush1.msra.mxu0 0.0
        %770 = vmatprep.subr.mxu0 0.0
        %771 = vmatpush1.msra.mxu0 0.0
        %772 = vmatprep.subr.mxu0 0.0
        %773 = vmatpush1.msra.mxu0 0.0
        %774 = vmatprep.subr.mxu0 0.0
        %775 = vmatpush1.msra.mxu0 0.0
        %776 = vmatprep.subr.mxu0 0.0
        %777 = vmatpush1.msra.mxu0 0.0
        %778 = vmatprep.subr.mxu0 0.0
        %779 = vmatpush1.msra.mxu0 0.0
        %780 = vmatprep.subr.mxu0 0.0
        %781 = vmatpush1.msra.mxu0 0.0
        %782 = vmatprep.subr.mxu0 0.0
        %783 = vmatpush1.msra.mxu0 0.0
        %784 = vmatprep.subr.mxu0 0.0
        %785 = vmatpush1.msra.mxu0 0.0
        %786 = vmatprep.subr.mxu0 0.0
        %787 = vmatpush1.msra.mxu0 0.0
        %788 = vmatprep.subr.mxu0 0.0
        %789 = vmatpush1.msra.mxu0 0.0
        %790 = vmatprep.subr.mxu0 0.0
        %791 = vmatpush1.msra.mxu0 0.0
        %792 = vmatprep.subr.mxu0 0.0
        %793 = vmatpush1.msra.mxu0 0.0
        %794 = vmatprep.subr.mxu0 0.0
        %795 = vmatpush1.msra.mxu0 0.0
        %796 = vmatprep.mubr.f32.mxu0 0.0
        %797 = vmatmul.mubr.f32.gmra.mrb[0].mxu0 %v712
        %v798 = vpop.f32.mrb[0].mxu0
        %v799 = vadd.f32 0.0, %v798
        %v800 = vpop.f32.mrb[0].mxu0
        %v801 = vadd.f32 0.0, %v800
        %802 = vmatprep.mubr.f32.mxu0 0.0
        %803 = vmatmul.mubr.f32.gmra.mrb[0].mxu0 %v715
        %v804 = vpop.f32.mrb[0].mxu0
        %v805 = vadd.f32 0.0, %v804
        %v806 = vpop.f32.mrb[0].mxu0
        %v807 = vadd.f32 0.0, %v806
        %808 = vmatprep.mubr.f32.mxu0 0.0
        %809 = vmatmul.mubr.f32.gmra.mrb[0].mxu0 %v718
        %v810 = vpop.f32.mrb[0].mxu0
        %v811 = vadd.f32 0.0, %v810
        %v812 = vpop.f32.mrb[0].mxu0
        %v813 = vadd.f32 0.0, %v812
        %814 = vmatprep.mubr.f32.mxu0 0.0
        %815 = vmatmul.mubr.f32.gmra.mrb[0].mxu0 %v721
        %v816 = vpop.f32.mrb[0].mxu0
        %v817 = vadd.f32 0.0, %v816
        %v818 = vpop.f32.mrb[0].mxu0
        %v819 = vadd.f32 0.0, %v818
        %820 = vmatprep.mubr.f32.mxu0 0.0
        %821 = vmatmul.mubr.f32.gmra.mrb[0].mxu0 %v724
        %v822 = vpop.f32.mrb[0].mxu0
        %v823 = vadd.f32 0.0, %v822
        %v824 = vpop.f32.mrb[0].mxu0
        %v825 = vadd.f32 0.0, %v824
        %826 = vmatprep.mubr.f32.mxu0 0.0
        %827 = vmatmul.mubr.f32.gmra.mrb[0].mxu0 %v727
        %v828 = vpop.f32.mrb[0].mxu0
        %v829 = vadd.f32 0.0, %v828
        %v830 = vpop.f32.mrb[0].mxu0
        %v831 = vadd.f32 0.0, %v830
        %832 = vmatprep.mubr.f32.mxu0 0.0
        %833 = vmatmul.mubr.f32.gmra.mrb[0].mxu0 %v730
        %v834 = vpop.f32.mrb[0].mxu0
        %v835 = vadd.f32 0.0, %v834
        %v836 = vpop.f32.mrb[0].mxu0
        %v837 = vadd.f32 0.0, %v836
        %838 = vdwg.mxu0
        %v839 = vld [vmem:[%s350] sm:$0xff]
        %v840 = vld [vmem:[%s350 + $0x8] sm:$0xff]
        %v841 = vld [vmem:[%s350 + $0x10] sm:$0xff]
        %v842 = vld [vmem:[%s350 + $0x18] sm:$0xff]
        %v843 = vld [vmem:[%s350 + $0x20] sm:$0xff]
        %v844 = vld [vmem:[%s350 + $0x28] sm:$0xff]
        %v845 = vld [vmem:[%s350 + $0x30] sm:$0xff]
        %v846 = vld [vmem:[%s350 + $0x38] sm:$0xff]
        %v847 = vmax.f32 %v799, %v811
        %v848 = vmax.f32 %v847, %v805
        %v849 = vrot.slane %v848, 4
        %v850 = vmax.f32 %v848, %v849
        %v851 = vrot.slane %v850, 2
        %v852 = vmax.f32 %v850, %v851
        %v853 = vrot.slane %v852, 1
        %v854 = vmax.f32 %v852, %v853
        %v855 = vmax.f32 %v801, %v813
        %v856 = vmax.f32 %v855, %v807
        %v857 = vrot.slane %v856, 4
        %v858 = vmax.f32 %v856, %v857
        %v859 = vrot.slane %v858, 2
        %v860 = vmax.f32 %v858, %v859
        %v861 = vrot.slane %v860, 1
        %v862 = vmax.f32 %v860, %v861
        %v863 = vsub.f32 %v799, %v854
        %v864 = vsub.f32 %v801, %v862
        %v865 = vsub.f32 %v805, %v854
        %v866 = vsub.f32 %v807, %v862
        %v867 = vsub.f32 %v811, %v854
        %v868 = vsub.f32 %v813, %v862
        %v869 = vmul.f32 %v863, 1.442695
        %v870 = vpow.pop %v869
        %v871 = vmul.f32 %v864, 1.442695
        %v872 = vpow.pop %v871
        %v873 = vmul.f32 %v865, 1.442695
        %v874 = vpow.pop %v873
        %v875 = vmul.f32 %v866, 1.442695
        %v876 = vpow.pop %v875
        %v877 = vmul.f32 %v867, 1.442695
        %v878 = vpow.pop %v877
        %v879 = vmul.f32 %v868, 1.442695
        %v880 = vpow.pop %v879
        %v881 = vadd.f32 %v870, %v874
        %v882 = vadd.f32 %v881, %v878
        %v883 = vrot.slane %v882, 4
        %v884 = vadd.f32 %v882, %v883
        %v885 = vrot.slane %v884, 2
        %v886 = vadd.f32 %v884, %v885
        %v887 = vrot.slane %v886, 1
        %v888 = vadd.f32 %v886, %v887
        %v889 = vadd.f32 %v872, %v876
        %v890 = vadd.f32 %v889, %v880
        %v891 = vrot.slane %v890, 4
        %v892 = vadd.f32 %v890, %v891
        %v893 = vrot.slane %v892, 2
        %v894 = vadd.f32 %v892, %v893
        %v895 = vrot.slane %v894, 1
        %v896 = vadd.f32 %v894, %v895
        %v897 = vrcp.pop %v888
        %v898 = vrcp.pop %v896
        %v899 = vmul.f32 %v870, %v897
        %v900 = vmul.f32 %v872, %v898
        %v901 = vmul.f32 %v874, %v897
        %v902 = vmul.f32 %v876, %v898
        %v903 = vmul.f32 %v878, %v897
        %v904 = vmul.f32 %v880, %v898
        %v905 = vld [vmem:[%s6] sm:$0xff]
        %v906 = vld [vmem:[%s6 + $0x8] sm:$0xff]
        %v907 = vld [vmem:[%s6 + $0x10] sm:$0xff]
        %v908 = vld [vmem:[%s6 + $0x18] sm:$0xff]
        %vm909 = vcmask 195584
        %v911 = vsel %vm909, %v905, 0
        %v914 = vsel %vm909, %v906, 0
        %v917 = vsel %vm909, %v907, 0
        %v920 = vsel %vm909, %v908, 0
        %922 = vmatprep.subr.mxu0 %v900
        %923 = vmatpush1.msra.mxu0 %v899
        %924 = vmatprep.subr.mxu0 %v902
        %925 = vmatpush1.msra.mxu0 %v901
        %926 = vmatprep.subr.mxu0 %v904
        %927 = vmatpush1.msra.mxu0 %v903
        %928 = vmatprep.subr.mxu0 0.0
        %929 = vmatpush1.msra.mxu0 0.0
        %930 = vmatprep.subr.mxu0 0.0
        %931 = vmatpush1.msra.mxu0 0.0
        %932 = vmatprep.subr.mxu0 0.0
        %933 = vmatpush1.msra.mxu0 0.0
        %934 = vmatprep.subr.mxu0 0.0
        %935 = vmatpush1.msra.mxu0 0.0
        %936 = vmatprep.subr.mxu0 0.0
        %937 = vmatpush1.msra.mxu0 0.0
        %938 = vmatprep.subr.mxu0 0.0
        %939 = vmatpush1.msra.mxu0 0.0
        %940 = vmatprep.subr.mxu0 0.0
        %941 = vmatpush1.msra.mxu0 0.0
        %942 = vmatprep.subr.mxu0 0.0
        %943 = vmatpush1.msra.mxu0 0.0
        %944 = vmatprep.subr.mxu0 0.0
        %945 = vmatpush1.msra.mxu0 0.0
        %946 = vmatprep.subr.mxu0 0.0
        %947 = vmatpush1.msra.mxu0 0.0
        %948 = vmatprep.subr.mxu0 0.0
        %949 = vmatpush1.msra.mxu0 0.0
        %950 = vmatprep.subr.mxu0 0.0
        %951 = vmatpush1.msra.mxu0 0.0
        %952 = vmatprep.subr.mxu0 0.0
        %953 = vmatpush1.msra.mxu0 0.0
        %954 = vmatprep.subr.mxu0 0.0
        %955 = vmatpush1.msra.mxu0 0.0
        %956 = vmatprep.subr.mxu0 0.0
        %957 = vmatpush1.msra.mxu0 0.0
        %958 = vmatprep.subr.mxu0 0.0
        %959 = vmatpush1.msra.mxu0 0.0
        %960 = vmatprep.subr.mxu0 0.0
        %961 = vmatpush1.msra.mxu0 0.0
        %962 = vmatprep.subr.mxu0 0.0
        %963 = vmatpush1.msra.mxu0 0.0
        %964 = vmatprep.subr.mxu0 0.0
        %965 = vmatpush1.msra.mxu0 0.0
        %966 = vmatprep.subr.mxu0 0.0
        %967 = vmatpush1.msra.mxu0 0.0
        %968 = vmatprep.subr.mxu0 0.0
        %969 = vmatpush1.msra.mxu0 0.0
        %970 = vmatprep.subr.mxu0 0.0
        %971 = vmatpush1.msra.mxu0 0.0
        %972 = vmatprep.subr.mxu0 0.0
        %973 = vmatpush1.msra.mxu0 0.0
        %974 = vmatprep.subr.mxu0 0.0
        %975 = vmatpush1.msra.mxu0 0.0
        %976 = vmatprep.subr.mxu0 0.0
        %977 = vmatpush1.msra.mxu0 0.0
        %978 = vmatprep.subr.mxu0 0.0
        %979 = vmatpush1.msra.mxu0 0.0
        %980 = vmatprep.subr.mxu0 0.0
        %981 = vmatpush1.msra.mxu0 0.0
        %982 = vmatprep.subr.mxu0 0.0
        %983 = vmatpush1.msra.mxu0 0.0
        %984 = vmatprep.subr.mxu0 0.0
        %985 = vmatpush1.msra.mxu0 0.0
        %986 = vmatprep.mubr.f32.mxu0 0.0
        %987 = vmatmul.mubr.f32.gmra.mrb[0].mxu0 %v911
        %v988 = vpop.f32.mrb[0].mxu0
        %v989 = vadd.f32 0.0, %v988
        %v990 = vpop.f32.mrb[0].mxu0
        %v991 = vadd.f32 0.0, %v990
        %992 = vmatprep.mubr.f32.mxu0 0.0
        %993 = vmatmul.mubr.f32.gmra.mrb[0].mxu0 %v914
        %v994 = vpop.f32.mrb[0].mxu0
        %v995 = vadd.f32 0.0, %v994
        %v996 = vpop.f32.mrb[0].mxu0
        %v997 = vadd.f32 0.0, %v996
        %998 = vmatprep.mubr.f32.mxu0 0.0
        %999 = vmatmul.mubr.f32.gmra.mrb[0].mxu0 %v917
        %v1000 = vpop.f32.mrb[0].mxu0
        %v1001 = vadd.f32 0.0, %v1000
        %v1002 = vpop.f32.mrb[0].mxu0
        %v1003 = vadd.f32 0.0, %v1002
        %1004 = vmatprep.mubr.f32.mxu0 0.0
        %1005 = vmatmul.mubr.f32.gmra.mrb[0].mxu0 %v920
        %v1006 = vpop.f32.mrb[0].mxu0
        %v1007 = vadd.f32 0.0, %v1006
        %v1008 = vpop.f32.mrb[0].mxu0
        %v1009 = vadd.f32 0.0, %v1008
        %1010 = vdwg.mxu0
        %v1011 = vadd.f32 %v839, %v989
        %v1012 = vadd.f32 %v840, %v991
        %v1013 = vadd.f32 %v841, %v995
        %v1014 = vadd.f32 %v842, %v997
        %v1015 = vadd.f32 %v843, %v1001
        %v1016 = vadd.f32 %v844, %v1003
        %v1017 = vadd.f32 %v845, %v1007
        %v1018 = vadd.f32 %v846, %v1009
        %1019 = vst [vmem:[%s350] sm:$0xff] %v1011
        %1020 = vst [vmem:[%s350 + $0x8] sm:$0xff] %v1012
        %1021 = vst [vmem:[%s350 + $0x10] sm:$0xff] %v1013
        %1022 = vst [vmem:[%s350 + $0x18] sm:$0xff] %v1014
        %1023 = vst [vmem:[%s350 + $0x20] sm:$0xff] %v1015
        %1024 = vst [vmem:[%s350 + $0x28] sm:$0xff] %v1016
        %1025 = vst [vmem:[%s350 + $0x30] sm:$0xff] %v1017
        %1026 = vst [vmem:[%s350 + $0x38] sm:$0xff] %v1018
        %v1027 = vld [vmem:[%s4] sm:$0xff]
        %v1028 = vld [vmem:[%s4 + $0x8] sm:$0xff]
        %v1029 = vld [vmem:[%s4 + $0x10] sm:$0xff]
        %v1030 = vld [vmem:[%s4 + $0x18] sm:$0xff]
        %1032 = vset.pattern.permute.xlu0 0
        %1033 = vperm.xlu0 %1032, %v1027
        %v1034 = vpop.permute.xlu0 %1033
        %1037 = vset.pattern.permute.xlu0 0
        %1038 = vperm.xlu0 %1037, %v1028
        %v1039 = vpop.permute.xlu0 %1038
        %1042 = vset.pattern.permute.xlu0 0
        %1043 = vperm.xlu0 %1042, %v1029
        %v1044 = vpop.permute.xlu0 %1043
        %1047 = vset.pattern.permute.xlu0 0
        %1048 = vperm.xlu0 %1047, %v1030
        %v1049 = vpop.permute.xlu0 %1048
        %v1051 = vadd.f32 %v817, %v1034
        %v1052 = vadd.f32 %v819, %v1034
        %v1053 = vadd.f32 %v823, %v1039
        %v1054 = vadd.f32 %v825, %v1039
        %v1055 = vadd.f32 %v829, %v1044
        %v1056 = vadd.f32 %v831, %v1044
        %v1057 = vadd.f32 %v835, %v1049
        %v1058 = vadd.f32 %v837, %v1049
        %v1059 = vmax.f32 %v1051, 0.0
        %v1060 = vmax.f32 %v1052, 0.0
        %v1061 = vmax.f32 %v1053, 0.0
        %v1062 = vmax.f32 %v1054, 0.0
        %v1063 = vmax.f32 %v1055, 0.0
        %v1064 = vmax.f32 %v1056, 0.0
        %v1065 = vmax.f32 %v1057, 0.0
        %v1066 = vmax.f32 %v1058, 0.0
        %v1067 = vld [vmem:[%s7] sm:$0xff]
        %v1068 = vld [vmem:[%s7 + $0x8] sm:$0xff]
        %v1069 = vld [vmem:[%s7 + $0x10] sm:$0xff]
        %v1070 = vld [vmem:[%s7 + $0x18] sm:$0xff]
        %v1072 = vsel %vm376, %v1067, 0
        %v1075 = vsel %vm376, %v1068, 0
        %v1078 = vsel %vm376, %v1069, 0
        %v1081 = vsel %vm376, %v1070, 0
        %1083 = vmatprep.subr.mxu0 %v1060
        %1084 = vmatpush1.msra.mxu0 %v1059
        %1085 = vmatprep.subr.mxu0 %v1062
        %1086 = vmatpush1.msra.mxu0 %v1061
        %1087 = vmatprep.subr.mxu0 %v1064
        %1088 = vmatpush1.msra.mxu0 %v1063
        %1089 = vmatprep.subr.mxu0 %v1066
        %1090 = vmatpush1.msra.mxu0 %v1065
        %1091 = vmatprep.subr.mxu0 0.0
        %1092 = vmatpush1.msra.mxu0 0.0
        %1093 = vmatprep.subr.mxu0 0.0
        %1094 = vmatpush1.msra.mxu0 0.0
        %1095 = vmatprep.subr.mxu0 0.0
        %1096 = vmatpush1.msra.mxu0 0.0
        %1097 = vmatprep.subr.mxu0 0.0
        %1098 = vmatpush1.msra.mxu0 0.0
        %1099 = vmatprep.subr.mxu0 0.0
        %1100 = vmatpush1.msra.mxu0 0.0
        %1101 = vmatprep.subr.mxu0 0.0
        %1102 = vmatpush1.msra.mxu0 0.0
        %1103 = vmatprep.subr.mxu0 0.0
        %1104 = vmatpush1.msra.mxu0 0.0
        %1105 = vmatprep.subr.mxu0 0.0
        %1106 = vmatpush1.msra.mxu0 0.0
        %1107 = vmatprep.subr.mxu0 0.0
        %1108 = vmatpush1.msra.mxu0 0.0
        %1109 = vmatprep.subr.mxu0 0.0
        %1110 = vmatpush1.msra.mxu0 0.0
        %1111 = vmatprep.subr.mxu0 0.0
        %1112 = vmatpush1.msra.mxu0 0.0
        %1113 = vmatprep.subr.mxu0 0.0
        %1114 = vmatpush1.msra.mxu0 0.0
        %1115 = vmatprep.subr.mxu0 0.0
        %1116 = vmatpush1.msra.mxu0 0.0
        %1117 = vmatprep.subr.mxu0 0.0
        %1118 = vmatpush1.msra.mxu0 0.0
        %1119 = vmatprep.subr.mxu0 0.0
        %1120 = vmatpush1.msra.mxu0 0.0
        %1121 = vmatprep.subr.mxu0 0.0
        %1122 = vmatpush1.msra.mxu0 0.0
        %1123 = vmatprep.subr.mxu0 0.0
        %1124 = vmatpush1.msra.mxu0 0.0
        %1125 = vmatprep.subr.mxu0 0.0
        %1126 = vmatpush1.msra.mxu0 0.0
        %1127 = vmatprep.subr.mxu0 0.0
        %1128 = vmatpush1.msra.mxu0 0.0
        %1129 = vmatprep.subr.mxu0 0.0
        %1130 = vmatpush1.msra.mxu0 0.0
        %1131 = vmatprep.subr.mxu0 0.0
        %1132 = vmatpush1.msra.mxu0 0.0
        %1133 = vmatprep.subr.mxu0 0.0
        %1134 = vmatpush1.msra.mxu0 0.0
        %1135 = vmatprep.subr.mxu0 0.0
        %1136 = vmatpush1.msra.mxu0 0.0
        %1137 = vmatprep.subr.mxu0 0.0
        %1138 = vmatpush1.msra.mxu0 0.0
        %1139 = vmatprep.subr.mxu0 0.0
        %1140 = vmatpush1.msra.mxu0 0.0
        %1141 = vmatprep.subr.mxu0 0.0
        %1142 = vmatpush1.msra.mxu0 0.0
        %1143 = vmatprep.subr.mxu0 0.0
        %1144 = vmatpush1.msra.mxu0 0.0
        %1145 = vmatprep.subr.mxu0 0.0
        %1146 = vmatpush1.msra.mxu0 0.0
        %1147 = vmatprep.mubr.f32.mxu0 0.0
        %1148 = vmatmul.mubr.f32.gmra.mrb[0].mxu0 %v1072
        %v1149 = vpop.f32.mrb[0].mxu0
        %v1150 = vadd.f32 0.0, %v1149
        %v1151 = vpop.f32.mrb[0].mxu0
        %v1152 = vadd.f32 0.0, %v1151
        %1153 = vmatprep.mubr.f32.mxu0 0.0
        %1154 = vmatmul.mubr.f32.gmra.mrb[0].mxu0 %v1075
        %v1155 = vpop.f32.mrb[0].mxu0
        %v1156 = vadd.f32 0.0, %v1155
        %v1157 = vpop.f32.mrb[0].mxu0
        %v1158 = vadd.f32 0.0, %v1157
        %1159 = vmatprep.mubr.f32.mxu0 0.0
        %1160 = vmatmul.mubr.f32.gmra.mrb[0].mxu0 %v1078
        %v1161 = vpop.f32.mrb[0].mxu0
        %v1162 = vadd.f32 0.0, %v1161
        %v1163 = vpop.f32.mrb[0].mxu0
        %v1164 = vadd.f32 0.0, %v1163
        %1165 = vmatprep.mubr.f32.mxu0 0.0
        %1166 = vmatmul.mubr.f32.gmra.mrb[0].mxu0 %v1081
        %v1167 = vpop.f32.mrb[0].mxu0
        %v1168 = vadd.f32 0.0, %v1167
        %v1169 = vpop.f32.mrb[0].mxu0
        %v1170 = vadd.f32 0.0, %v1169
        %1171 = vdwg.mxu0
        %v1172 = vld [vmem:[%s350] sm:$0xff]
        %v1173 = vld [vmem:[%s350 + $0x8] sm:$0xff]
        %v1174 = vld [vmem:[%s350 + $0x10] sm:$0xff]
        %v1175 = vld [vmem:[%s350 + $0x18] sm:$0xff]
        %v1176 = vld [vmem:[%s350 + $0x20] sm:$0xff]
        %v1177 = vld [vmem:[%s350 + $0x28] sm:$0xff]
        %v1178 = vld [vmem:[%s350 + $0x30] sm:$0xff]
        %v1179 = vld [vmem:[%s350 + $0x38] sm:$0xff]
        %v1180 = vmax.f32 %v1150, %v1162
        %v1181 = vmax.f32 %v1156, %v1168
        %v1182 = vmax.f32 %v1180, %v1181
        %v1183 = vrot.slane %v1182, 4
        %v1184 = vmax.f32 %v1182, %v1183
        %v1185 = vrot.slane %v1184, 2
        %v1186 = vmax.f32 %v1184, %v1185
        %v1187 = vrot.slane %v1186, 1
        %v1188 = vmax.f32 %v1186, %v1187
        %v1189 = vmax.f32 %v1152, %v1164
        %v1190 = vmax.f32 %v1158, %v1170
        %v1191 = vmax.f32 %v1189, %v1190
        %v1192 = vrot.slane %v1191, 4
        %v1193 = vmax.f32 %v1191, %v1192
        %v1194 = vrot.slane %v1193, 2
        %v1195 = vmax.f32 %v1193, %v1194
        %v1196 = vrot.slane %v1195, 1
        %v1197 = vmax.f32 %v1195, %v1196
        %v1198 = vsub.f32 %v1150, %v1188
        %v1199 = vsub.f32 %v1152, %v1197
        %v1200 = vsub.f32 %v1156, %v1188
        %v1201 = vsub.f32 %v1158, %v1197
        %v1202 = vsub.f32 %v1162, %v1188
        %v1203 = vsub.f32 %v1164, %v1197
        %v1204 = vsub.f32 %v1168, %v1188
        %v1205 = vsub.f32 %v1170, %v1197
        %v1206 = vmul.f32 %v1198, 1.442695
        %v1207 = vpow.pop %v1206
        %v1208 = vmul.f32 %v1199, 1.442695
        %v1209 = vpow.pop %v1208
        %v1210 = vmul.f32 %v1200, 1.442695
        %v1211 = vpow.pop %v1210
        %v1212 = vmul.f32 %v1201, 1.442695
        %v1213 = vpow.pop %v1212
        %v1214 = vmul.f32 %v1202, 1.442695
        %v1215 = vpow.pop %v1214
        %v1216 = vmul.f32 %v1203, 1.442695
        %v1217 = vpow.pop %v1216
        %v1218 = vmul.f32 %v1204, 1.442695
        %v1219 = vpow.pop %v1218
        %v1220 = vmul.f32 %v1205, 1.442695
        %v1221 = vpow.pop %v1220
        %v1222 = vadd.f32 %v1207, %v1211
        %v1223 = vadd.f32 %v1222, %v1215
        %v1224 = vadd.f32 %v1223, %v1219
        %v1225 = vrot.slane %v1224, 4
        %v1226 = vadd.f32 %v1224, %v1225
        %v1227 = vrot.slane %v1226, 2
        %v1228 = vadd.f32 %v1226, %v1227
        %v1229 = vrot.slane %v1228, 1
        %v1230 = vadd.f32 %v1228, %v1229
        %v1231 = vadd.f32 %v1209, %v1213
        %v1232 = vadd.f32 %v1231, %v1217
        %v1233 = vadd.f32 %v1232, %v1221
        %v1234 = vrot.slane %v1233, 4
        %v1235 = vadd.f32 %v1233, %v1234
        %v1236 = vrot.slane %v1235, 2
        %v1237 = vadd.f32 %v1235, %v1236
        %v1238 = vrot.slane %v1237, 1
        %v1239 = vadd.f32 %v1237, %v1238
        %v1240 = vrcp.pop %v1230
        %v1241 = vrcp.pop %v1239
        %v1242 = vmul.f32 %v1207, %v1240
        %v1243 = vmul.f32 %v1209, %v1241
        %v1244 = vmul.f32 %v1211, %v1240
        %v1245 = vmul.f32 %v1213, %v1241
        %v1246 = vmul.f32 %v1215, %v1240
        %v1247 = vmul.f32 %v1217, %v1241
        %v1248 = vmul.f32 %v1219, %v1240
        %v1249 = vmul.f32 %v1221, %v1241
        %v1250 = vld [vmem:[%s8] sm:$0xff]
        %v1251 = vld [vmem:[%s8 + $0x8] sm:$0xff]
        %v1252 = vld [vmem:[%s8 + $0x10] sm:$0xff]
        %v1253 = vld [vmem:[%s8 + $0x18] sm:$0xff]
        %v1255 = vsel %vm376, %v1250, 0
        %v1258 = vsel %vm376, %v1251, 0
        %v1261 = vsel %vm376, %v1252, 0
        %v1264 = vsel %vm376, %v1253, 0
        %1266 = vmatprep.subr.mxu0 %v1243
        %1267 = vmatpush1.msra.mxu0 %v1242
        %1268 = vmatprep.subr.mxu0 %v1245
        %1269 = vmatpush1.msra.mxu0 %v1244
        %1270 = vmatprep.subr.mxu0 %v1247
        %1271 = vmatpush1.msra.mxu0 %v1246
        %1272 = vmatprep.subr.mxu0 %v1249
        %1273 = vmatpush1.msra.mxu0 %v1248
        %1274 = vmatprep.subr.mxu0 0.0
        %1275 = vmatpush1.msra.mxu0 0.0
        %1276 = vmatprep.subr.mxu0 0.0
        %1277 = vmatpush1.msra.mxu0 0.0
        %1278 = vmatprep.subr.mxu0 0.0
        %1279 = vmatpush1.msra.mxu0 0.0
        %1280 = vmatprep.subr.mxu0 0.0
        %1281 = vmatpush1.msra.mxu0 0.0
        %1282 = vmatprep.subr.mxu0 0.0
        %1283 = vmatpush1.msra.mxu0 0.0
        %1284 = vmatprep.subr.mxu0 0.0
        %1285 = vmatpush1.msra.mxu0 0.0
        %1286 = vmatprep.subr.mxu0 0.0
        %1287 = vmatpush1.msra.mxu0 0.0
        %1288 = vmatprep.subr.mxu0 0.0
        %1289 = vmatpush1.msra.mxu0 0.0
        %1290 = vmatprep.subr.mxu0 0.0
        %1291 = vmatpush1.msra.mxu0 0.0
        %1292 = vmatprep.subr.mxu0 0.0
        %1293 = vmatpush1.msra.mxu0 0.0
        %1294 = vmatprep.subr.mxu0 0.0
        %1295 = vmatpush1.msra.mxu0 0.0
        %1296 = vmatprep.subr.mxu0 0.0
        %1297 = vmatpush1.msra.mxu0 0.0
        %1298 = vmatprep.subr.mxu0 0.0
        %1299 = vmatpush1.msra.mxu0 0.0
        %1300 = vmatprep.subr.mxu0 0.0
        %1301 = vmatpush1.msra.mxu0 0.0
        %1302 = vmatprep.subr.mxu0 0.0
        %1303 = vmatpush1.msra.mxu0 0.0
        %1304 = vmatprep.subr.mxu0 0.0
        %1305 = vmatpush1.msra.mxu0 0.0
        %1306 = vmatprep.subr.mxu0 0.0
        %1307 = vmatpush1.msra.mxu0 0.0
        %1308 = vmatprep.subr.mxu0 0.0
        %1309 = vmatpush1.msra.mxu0 0.0
        %1310 = vmatprep.subr.mxu0 0.0
        %1311 = vmatpush1.msra.mxu0 0.0
        %1312 = vmatprep.subr.mxu0 0.0
        %1313 = vmatpush1.msra.mxu0 0.0
        %1314 = vmatprep.subr.mxu0 0.0
        %1315 = vmatpush1.msra.mxu0 0.0
        %1316 = vmatprep.subr.mxu0 0.0
        %1317 = vmatpush1.msra.mxu0 0.0
        %1318 = vmatprep.subr.mxu0 0.0
        %1319 = vmatpush1.msra.mxu0 0.0
        %1320 = vmatprep.subr.mxu0 0.0
        %1321 = vmatpush1.msra.mxu0 0.0
        %1322 = vmatprep.subr.mxu0 0.0
        %1323 = vmatpush1.msra.mxu0 0.0
        %1324 = vmatprep.subr.mxu0 0.0
        %1325 = vmatpush1.msra.mxu0 0.0
        %1326 = vmatprep.subr.mxu0 0.0
        %1327 = vmatpush1.msra.mxu0 0.0
        %1328 = vmatprep.subr.mxu0 0.0
        %1329 = vmatpush1.msra.mxu0 0.0
        %1330 = vmatprep.mubr.f32.mxu0 0.0
        %1331 = vmatmul.mubr.f32.gmra.mrb[0].mxu0 %v1255
        %v1332 = vpop.f32.mrb[0].mxu0
        %v1333 = vadd.f32 0.0, %v1332
        %v1334 = vpop.f32.mrb[0].mxu0
        %v1335 = vadd.f32 0.0, %v1334
        %1336 = vmatprep.mubr.f32.mxu0 0.0
        %1337 = vmatmul.mubr.f32.gmra.mrb[0].mxu0 %v1258
        %v1338 = vpop.f32.mrb[0].mxu0
        %v1339 = vadd.f32 0.0, %v1338
        %v1340 = vpop.f32.mrb[0].mxu0
        %v1341 = vadd.f32 0.0, %v1340
        %1342 = vmatprep.mubr.f32.mxu0 0.0
        %1343 = vmatmul.mubr.f32.gmra.mrb[0].mxu0 %v1261
        %v1344 = vpop.f32.mrb[0].mxu0
        %v1345 = vadd.f32 0.0, %v1344
        %v1346 = vpop.f32.mrb[0].mxu0
        %v1347 = vadd.f32 0.0, %v1346
        %1348 = vmatprep.mubr.f32.mxu0 0.0
        %1349 = vmatmul.mubr.f32.gmra.mrb[0].mxu0 %v1264
        %v1350 = vpop.f32.mrb[0].mxu0
        %v1351 = vadd.f32 0.0, %v1350
        %v1352 = vpop.f32.mrb[0].mxu0
        %v1353 = vadd.f32 0.0, %v1352
        %1354 = vdwg.mxu0
        %v1355 = vadd.f32 %v1172, %v1333
        %v1356 = vadd.f32 %v1173, %v1335
        %v1357 = vadd.f32 %v1174, %v1339
        %v1358 = vadd.f32 %v1175, %v1341
        %v1359 = vadd.f32 %v1176, %v1345
        %v1360 = vadd.f32 %v1177, %v1347
        %v1361 = vadd.f32 %v1178, %v1351
        %v1362 = vadd.f32 %v1179, %v1353
        %1363 = vst [vmem:[%s350] sm:$0xff] %v1355
        %1364 = vst [vmem:[%s350 + $0x8] sm:$0xff] %v1356
        %1365 = vst [vmem:[%s350 + $0x10] sm:$0xff] %v1357
        %1366 = vst [vmem:[%s350 + $0x18] sm:$0xff] %v1358
        %1367 = vst [vmem:[%s350 + $0x20] sm:$0xff] %v1359
        %1368 = vst [vmem:[%s350 + $0x28] sm:$0xff] %v1360
        %1369 = vst [vmem:[%s350 + $0x30] sm:$0xff] %v1361
        %1370 = vst [vmem:[%s350 + $0x38] sm:$0xff] %v1362
        %s1371 = sand.u32 %s241, 1
        %s1372 = scalar_lea.sflag [#allocation3], %s1371
        %s1373 = sand.u32 %s241, 1
        %s1374 = smul.addr %s1373, 64
        %s1375 = scalar_lea.vmem [#allocation2], %s1374
        // Predicated region
        $region57: #{tpu_custom_call.1} parent=55 // pred_check
          %p1376 = pneg %p251
        $region58: #{tpu_custom_call.1} parent=55 // pred_check_branch
          %1378 = sbr.rel (%p1376) target = $region60
        $region59: #{tpu_custom_call.1} parent=55 // pred_region
          %s1379 = smul.u32 2, %s28
          %s1381 = ssub.s32 1024, 1024
          %1382 = vsyncadd %s1372, %s1381
          %s1383 = smul.addr %s27, 8
          %s1384 = sadd.s32 %s1379, %s1383
          %s1385 = smul.addr %s1384, 128
          %s1386 = scalar_lea.hbm %s9, %s1385
          %s1387 = sshll.u32 %s1375, 4
          %s1388 = int_to_ptr.vmem [resolvable:$true] %s1387
          %1393 = dma.vmem_to_hbm [thread:$0]  %s1388, 1024, %s1386, %s1372, 256, 256, 16
        $region60: #{tpu_custom_call.1} parent=55 // pred_fallthru
          _
      $region56: #{tpu_custom_call.1} parent=5 // pred_fallthru
        _
      %p1394 = scmp.le.s32.totalorder 2, %s18
      // Predicated region
      $region61: #{tpu_custom_call.1} parent=5 // pred_check
        %p1395 = pneg %p1394
      $region62: #{tpu_custom_call.1} parent=5 // pred_check_branch
        %1397 = sbr.rel (%p1395) target = $region64
      $region63: #{tpu_custom_call.1} parent=5 // pred_region
        %s1398 = ssub.s32 %s18, 2
        // Predicated region
        $region65: #{tpu_custom_call.1} parent=63 // pred_check
          %p1399 = pneg %p257
        $region66: #{tpu_custom_call.1} parent=63 // pred_check_branch
          %1401 = sbr.rel (%p1399) target = $region68
        $region67: #{tpu_custom_call.1} parent=63 // pred_region
          %s1402 = sand.u32 %s242, 1
          %s1403 = scalar_lea.sflag [#allocation3], %s1402
          %s1404 = sand.u32 %s242, 1
          %s1405 = smul.addr %s1404, 64
          %s1406 = scalar_lea.vmem [#allocation2], %s1405
          %1407 = dma.done %s1403, 1024
        $region68: #{tpu_custom_call.1} parent=63 // pred_fallthru
          _
      $region64: #{tpu_custom_call.1} parent=5 // pred_fallthru
        _
    $region6: #{tpu_custom_call.1} parent=1 // loop_footer
      %s22 = sadd.s32 1, %s18
    $region7: #{tpu_custom_call.1} parent=1 // loop_footer_branch
      %17 = sbr.rel target = $region3
    $region8: #{tpu_custom_call.1} parent=1 // loop_exit
      _
    %1408 = vsyncpa [#allocation3], 1
    %s1409 = scalar_lea.sflag [#allocation3], 1
    %1410 = vsyncpa %s1409, 1

</llo_original>
